<compile_context>
chip_gen: v7x
topology: tpu7x:2x2x1
jax: 0.10.0
libtpu: 0.0.40
codegen_flags: <defaults>
</compile_context>

<pallas_src>
import functools

import jax
import jax.numpy as jnp
from jax.experimental import pallas as pl
from jax.experimental.pallas import tpu as pltpu


def _round_up(x, m):
    return (x + m - 1) // m * m


@functools.lru_cache(maxsize=None)
def _vmem_limit_bytes():
    """Generation-aware scoped-VMEM limit (v5e/v6e: 128 MiB, v7x: 64 MiB)."""
    try:
        cap = int(pltpu.get_tpu_info().vmem_capacity_bytes)
    except Exception:
        cap = 64 * 1024 * 1024  # conservative, v7x-safe fallback
    # Leave 25% of physical VMEM headroom; never request more than 96 MiB.
    return int(min(cap * 3 // 4, 96 * 1024 * 1024))


def _choose_pixel_tile(p, n, c_in, c_out, itemsize, vmem_limit):
    """Pick a lane-dense pixel tile sized against the VMEM budget.

    Live VMEM per pixel column = double-buffered input + stack outputs
    (padded to the dtype's sublane packing) + one f32 (C_out, TILE)
    intermediate.  The tile is the largest 128-multiple that fits ~75% of
    the scoped VMEM limit (soft-capped at 512k pixels).
    """
    sub = 8 * (4 // itemsize)                 # sublane packing: f32->8, bf16->16
    c_in_pad = _round_up(c_in, sub)
    c_out_pad = _round_up(c_out, sub)
    per_pixel = (2 * n * (c_in_pad + c_out_pad) * itemsize   # dbl-buffered I/O
                 + _round_up(c_out, 8) * 4)                   # f32 intermediate
    budget = int(vmem_limit * 0.75)
    tile = (budget // per_pixel) // 128 * 128
    tile = max(128, min(tile, 512 * 1024))

    if p <= 256:
        # Tiny level: full pixel extent, single step (full-dim block is
        # exempt from the 128-lane divisibility rule).
        return int(p)
    if p <= tile:
        # Whole level fits one step: split into >=2 "parallel" steps so both
        # v7x TensorCores get work (and the pipeline has something to overlap).
        return int(max(128, _round_up((p + 1) // 2, 128)))
    return int(tile)


def _sep_conv_kernel(x_ref, w_ref, *out_refs, in_channels, stack_size, batch):
    """Fused shared 1x1 conv + stack split for one batch-folded pixel tile.

    x_ref:    (N, C_in, TILE_PIX)   pixel-lane-dense input tile (VMEM)
    w_ref:    (C_out, C_in)         full shared weight, resident in VMEM
    out_refs: stack_size refs, each (N, C_in, TILE_PIX)
    """
    w = w_ref[...]
    for b in range(batch):                       # small static batch loop
        x_b = x_ref[b]                           # (C_in, TILE_PIX)
        # One full-weight matmul per tile (not stack_size tiny ones).
        y = jnp.dot(w, x_b,
                    preferred_element_type=jnp.float32,
                    precision=jax.lax.Precision.HIGHEST)   # (C_out, TILE_PIX)
        for z in range(stack_size):
            lo = z * in_channels
            out_refs[z][b] = y[lo:lo + in_channels, :].astype(out_refs[z].dtype)


@functools.partial(jax.jit, static_argnames=("in_channels", "stack_size"))
def _shared_sep_conv_pallas(x_nchw, w_mat, *, in_channels, stack_size):
    """Shared 1x1 conv + channel split for one feature level (Pallas path).

    x_nchw: (N, C, H, W);  w_mat: (C*stack, C).
    Returns a tuple of `stack_size` arrays, each (N, C, H, W).
    """
    n, c, h, w = x_nchw.shape
    assert c == in_channels
    c_out = in_channels * stack_size
    p = h * w
    itemsize = jnp.dtype(x_nchw.dtype).itemsize

    # Free reshape: NCHW is already channel-major / pixel-minor.
    x3 = x_nchw.reshape(n, c, p)

    vmem_limit = _vmem_limit_bytes()
    tile = _choose_pixel_tile(p, n, c, c_out, itemsize, vmem_limit)
    grid = (pl.cdiv(p, tile),)

    cost = pl.CostEstimate(
        flops=2 * n * p * c * c_out,
        transcendentals=0,
        bytes_accessed=(n * c * p * itemsize                  # input
                        + c_out * c * 4                       # weight
                        + stack_size * n * c * p * itemsize),  # outputs
    )

    outs = pl.pallas_call(
        functools.partial(_sep_conv_kernel, in_channels=in_channels,
                          stack_size=stack_size, batch=n),
        out_shape=tuple(jax.ShapeDtypeStruct((n, c, p), x_nchw.dtype)
                        for _ in range(stack_size)),
        grid_spec=pltpu.PrefetchScalarGridSpec(
            num_scalar_prefetch=0,
            grid=grid,
            in_specs=[
                # Batch-folded, pixel-lane-dense input tile.
                pl.BlockSpec((n, c, tile), lambda j: (0, 0, j)),
                # Small shared weight, resident across all grid steps.
                pl.BlockSpec((c_out, c), lambda j: (0, 0)),
            ],
            out_specs=tuple(
                pl.BlockSpec((n, c, tile), lambda j: (0, 0, j))
                for _ in range(stack_size)
            ),
        ),
        compiler_params=pltpu.CompilerParams(
            dimension_semantics=("parallel",),
            vmem_limit_bytes=vmem_limit,
        ),
        cost_estimate=cost,
    )(x3, w_mat)

    # Free reshapes back to NCHW chunks: no transposes, pads, or slice copies.
    return tuple(o.reshape(n, c, h, w) for o in outs)


@functools.partial(jax.jit, static_argnames=("in_channels", "stack_size"))
def _shared_sep_conv_xla(x_nchw, w_mat, *, in_channels, stack_size):
    """Plain-XLA path for micro levels where pallas_call dispatch dominates."""
    y = jnp.einsum("dc,nchw->ndhw", w_mat, x_nchw,
                   precision=jax.lax.Precision.HIGHEST)
    return tuple(y[:, z * in_channels:(z + 1) * in_channels]
                 for z in range(stack_size))


class SharedConvSeparatorPallas:
    """JAX/Pallas re-implementation of SharedConvSeparator.forward."""

    def __init__(self, in_features, in_channels, stack_size, key,
                 xla_small_level_bytes=512 * 1024):
        self.in_features = list(in_features)
        self._out_features = self.in_features
        self.in_channels = in_channels
        self._stack_size = stack_size
        self._xla_small_level_bytes = xla_small_level_bytes
        # nn.Conv2d(C, C*S, 1, bias=False) weight layout: (C*S, C, 1, 1).
        bound = 1.0 / float(in_channels) ** 0.5
        w = jax.random.uniform(
            key,
            (in_channels * stack_size, in_channels, 1, 1),
            dtype=jnp.float32,
            minval=-bound,
            maxval=bound,
        )
        self.weight = w                    # PyTorch conv layout
        self._w_mat = w[:, :, 0, 0]        # (C_out, C_in) matmul layout

    def forward(self, features):
        z_features = []
        for f in self.in_features:
            x = features[f]
            traffic = int(x.size) * x.dtype.itemsize * (1 + self._stack_size)
            if traffic < self._xla_small_level_bytes:
                chunks = _shared_sep_conv_xla(
                    x, self._w_mat,
                    in_channels=self.in_channels, stack_size=self._stack_size)
            else:
                chunks = _shared_sep_conv_pallas(
                    x, self._w_mat,
                    in_channels=self.in_channels, stack_size=self._stack_size)
            z_features.append(chunks)
        z_results = [
            [z_features[i][z] for i in range(len(self.in_features))]
            for z in range(self._stack_size)
        ]
        for z in range(self._stack_size):
            assert len(self._out_features) == len(z_results[z])
        return [
            dict(zip(self._out_features, z_results[z]))
            for z in range(self._stack_size)
        ]


if __name__ == "__main__":
    key = jax.random.PRNGKey(0)
    k_w, k_p2, k_p3, k_p4 = jax.random.split(key, 4)

    # Small FPN-like feature pyramid: three levels, batch=2, channels=4.
    # p2 exercises the multi-step grid + ragged-tail path (24*24=576 pixels),
    # p3/p4 the full-extent single-step path.
    in_features = ["p2", "p3", "p4"]
    in_channels = 4
    stack_size = 2

    features = {
        "p2": jax.random.normal(k_p2, (2, in_channels, 24, 24), jnp.float32),
        "p3": jax.random.normal(k_p3, (2, in_channels, 16, 16), jnp.float32),
        "p4": jax.random.normal(k_p4, (2, in_channels, 8, 8), jnp.float32),
    }

    # xla_small_level_bytes=0 forces every level through the Pallas kernel so
    # the correctness check below actually exercises it.
    sep = SharedConvSeparatorPallas(in_features, in_channels, stack_size, k_w,
                                    xla_small_level_bytes=0)
    out = sep.forward(features)

    # Block on all results.
    for d in out:
        for name, arr in d.items():
            jax.block_until_ready(arr)

    # Correctness check against a pure-elementwise (non-MXU) 1x1 conv reference.
    w_mat = sep._w_mat  # (C_out, C_in)
    for name, x in features.items():
        # ref_full[n, d, h, w] = sum_c w_mat[d, c] * x[n, c, h, w]
        ref_full = jnp.sum(
            x[:, None, :, :, :] * w_mat[None, :, :, None, None], axis=2
        )
        for z in range(stack_size):
            ref = ref_full[:, z * in_channels:(z + 1) * in_channels]
            got = out[z][name]
            assert got.shape == ref.shape, (got.shape, ref.shape)
            assert jnp.allclose(got, ref, atol=1e-5, rtol=1e-5), name

    print("KERNEL_OK")
</pallas_src>

<mosaic_0001>
module attributes {stable_mosaic.version = 11 : i64} {
  func.func @_sep_conv_kernel(%arg0: i32, %arg1: memref<2x4x384xf32, #tpu.memory_space<vmem>>, %arg2: memref<8x4xf32, #tpu.memory_space<vmem>>, %arg3: memref<2x4x384xf32, #tpu.memory_space<vmem>>, %arg4: memref<2x4x384xf32, #tpu.memory_space<vmem>>) attributes {dimension_semantics = [#tpu.dimension_semantics<parallel>], iteration_bounds = array<i64: 2>, scalar_prefetch = 0 : i64, scratch_operands = 0 : i64, tpu.core_type = #tpu.core_type<tc>, window_params = [{transform_indices = @transform_0, window_bounds = array<i64: 2, 4, 384>}, {pipeline_mode = #tpu.pipeline_mode<synchronous>, transform_indices = @transform_1, window_bounds = array<i64: 8, 4>}, {transform_indices = @transform_2, window_bounds = array<i64: 2, 4, 384>}, {transform_indices = @transform_3, window_bounds = array<i64: 2, 4, 384>}]} {
    %c0 = arith.constant 0 : index
    %c0_0 = arith.constant 0 : index
    %0 = vector.load %arg2[%c0, %c0_0] : memref<8x4xf32, #tpu.memory_space<vmem>>, vector<8x4xf32>
    %c0_1 = arith.constant 0 : index
    %c0_2 = arith.constant 0 : index
    %c0_3 = arith.constant 0 : index
    %1 = vector.load %arg1[%c0_1, %c0_2, %c0_3] : memref<2x4x384xf32, #tpu.memory_space<vmem>>, vector<1x4x384xf32>
    %2 = vector.shape_cast %1 : vector<1x4x384xf32> to vector<4x384xf32>
    %cst = arith.constant dense<0.000000e+00> : vector<8x384xf32>
    %3 = tpu.matmul %0, %2, %cst {dimension_numbers = #tpu.dot_dimension_numbers<[1], [0], [0], [1], [0, 0, 1, 1], [], []>, precision = #tpu.contract_precision<fp32>} : vector<8x4xf32>, vector<4x384xf32>, vector<8x384xf32> -> vector<8x384xf32>
    %4 = vector.extract_strided_slice %3 {offsets = [0, 0], sizes = [4, 384], strides = [1, 1]} : vector<8x384xf32> to vector<4x384xf32>
    %c0_4 = arith.constant 0 : index
    %c0_5 = arith.constant 0 : index
    %c0_6 = arith.constant 0 : index
    %5 = vector.load %arg3[%c0_4, %c0_5, %c0_6] : memref<2x4x384xf32, #tpu.memory_space<vmem>>, vector<1x4x384xf32>
    %6 = vector.shape_cast %5 : vector<1x4x384xf32> to vector<4x384xf32>
    %7 = vector.shape_cast %4 : vector<4x384xf32> to vector<1x4x384xf32>
    tpu.vector_store %arg3[%c0_4, %c0_5, %c0_6], %7 {strides = array<i32>} : memref<2x4x384xf32, #tpu.memory_space<vmem>>, vector<1x4x384xf32>,
    %8 = vector.extract_strided_slice %3 {offsets = [4, 0], sizes = [4, 384], strides = [1, 1]} : vector<8x384xf32> to vector<4x384xf32>
    %c0_7 = arith.constant 0 : index
    %c0_8 = arith.constant 0 : index
    %c0_9 = arith.constant 0 : index
    %9 = vector.load %arg4[%c0_7, %c0_8, %c0_9] : memref<2x4x384xf32, #tpu.memory_space<vmem>>, vector<1x4x384xf32>
    %10 = vector.shape_cast %9 : vector<1x4x384xf32> to vector<4x384xf32>
    %11 = vector.shape_cast %8 : vector<4x384xf32> to vector<1x4x384xf32>
    tpu.vector_store %arg4[%c0_7, %c0_8, %c0_9], %11 {strides = array<i32>} : memref<2x4x384xf32, #tpu.memory_space<vmem>>, vector<1x4x384xf32>,
    %c1 = arith.constant 1 : index
    %c0_10 = arith.constant 0 : index
    %c0_11 = arith.constant 0 : index
    %12 = vector.load %arg1[%c1, %c0_10, %c0_11] : memref<2x4x384xf32, #tpu.memory_space<vmem>>, vector<1x4x384xf32>
    %13 = vector.shape_cast %12 : vector<1x4x384xf32> to vector<4x384xf32>
    %cst_12 = arith.constant dense<0.000000e+00> : vector<8x384xf32>
    %14 = tpu.matmul %0, %13, %cst_12 {dimension_numbers = #tpu.dot_dimension_numbers<[1], [0], [0], [1], [0, 0, 1, 1], [], []>, precision = #tpu.contract_precision<fp32>} : vector<8x4xf32>, vector<4x384xf32>, vector<8x384xf32> -> vector<8x384xf32>
    %15 = vector.extract_strided_slice %14 {offsets = [0, 0], sizes = [4, 384], strides = [1, 1]} : vector<8x384xf32> to vector<4x384xf32>
    %c1_13 = arith.constant 1 : index
    %c0_14 = arith.constant 0 : index
    %c0_15 = arith.constant 0 : index
    %16 = vector.load %arg3[%c1_13, %c0_14, %c0_15] : memref<2x4x384xf32, #tpu.memory_space<vmem>>, vector<1x4x384xf32>
    %17 = vector.shape_cast %16 : vector<1x4x384xf32> to vector<4x384xf32>
    %18 = vector.shape_cast %15 : vector<4x384xf32> to vector<1x4x384xf32>
    tpu.vector_store %arg3[%c1_13, %c0_14, %c0_15], %18 {strides = array<i32>} : memref<2x4x384xf32, #tpu.memory_space<vmem>>, vector<1x4x384xf32>,
    %19 = vector.extract_strided_slice %14 {offsets = [4, 0], sizes = [4, 384], strides = [1, 1]} : vector<8x384xf32> to vector<4x384xf32>
    %c1_16 = arith.constant 1 : index
    %c0_17 = arith.constant 0 : index
    %c0_18 = arith.constant 0 : index
    %20 = vector.load %arg4[%c1_16, %c0_17, %c0_18] : memref<2x4x384xf32, #tpu.memory_space<vmem>>, vector<1x4x384xf32>
    %21 = vector.shape_cast %20 : vector<1x4x384xf32> to vector<4x384xf32>
    %22 = vector.shape_cast %19 : vector<4x384xf32> to vector<1x4x384xf32>
    tpu.vector_store %arg4[%c1_16, %c0_17, %c0_18], %22 {strides = array<i32>} : memref<2x4x384xf32, #tpu.memory_space<vmem>>, vector<1x4x384xf32>,
    return
  }
  func.func @transform_0(%arg0: i32) -> (i32, i32, i32) {
    %c0_i32 = arith.constant 0 : i32
    %c0_i32_0 = arith.constant 0 : i32
    %c0_i32_1 = arith.constant 0 : i32
    return %c0_i32, %c0_i32_0, %arg0 : i32, i32, i32
  }
  func.func @transform_1(%arg0: i32) -> (i32, i32) {
    %c0_i32 = arith.constant 0 : i32
    %c0_i32_0 = arith.constant 0 : i32
    %c0_i32_1 = arith.constant 0 : i32
    return %c0_i32, %c0_i32_0 : i32, i32
  }
  func.func @transform_2(%arg0: i32) -> (i32, i32, i32) {
    %c0_i32 = arith.constant 0 : i32
    %c0_i32_0 = arith.constant 0 : i32
    %c0_i32_1 = arith.constant 0 : i32
    return %c0_i32, %c0_i32_0, %arg0 : i32, i32, i32
  }
  func.func @transform_3(%arg0: i32) -> (i32, i32, i32) {
    %c0_i32 = arith.constant 0 : i32
    %c0_i32_0 = arith.constant 0 : i32
    %c0_i32_1 = arith.constant 0 : i32
    return %c0_i32, %c0_i32_0, %arg0 : i32, i32, i32
  }
}

</mosaic_0001>

<llo_original>
// kernel: _shared_sep_conv_pallas.1
$region0: #{_shared_sep_conv_pallas.1}
  #allocation0 [shape = 'u32[]', space=smem, size = 0x4, offset = 0x4, fixed_abs, tag = 'smem constant byte address 0x4 - core index']
  #allocation1 [shape = 'u32[144,128]{1,0:T(1,128)}', space=vmem, size = 0x12000, scoped, tag = 'internal scratch']
  %s0 = inlined_call_operand.vmem [shape: f32[2,4,576], index: 0, kind: input, shape index: {}]
  %s1 = inlined_call_operand.vmem [shape: f32[8,4], index: 1, kind: input, shape index: {}]
  %s2 = inlined_call_operand.vmem [shape: f32[2,4,576], index: 2, kind: output, shape index: {0}]
  %s3 = inlined_call_operand.vmem [shape: f32[2,4,576], index: 3, kind: output, shape index: {1}]
  %4 = xla_tuple %s2, %s3
  %s5 = sld [smem:[#allocation0]]
  $region239: #{_shared_sep_conv_pallas.1} parent=0
    _
  %s7 = ssub.s32 1, %s5
  %s8 = scalar_select 0, %s7, %s5
  $region1: #{_shared_sep_conv_pallas.1} parent=0
    #allocation2 [shape = 'u8[24576]{0}', space=vmem, size = 0x6000, scoped, tag = 'input window, operand 0']
    #allocation3 [shape = 'u8[24576]{0}', space=vmem, size = 0x6000, scoped, tag = 'output window, operand 0']
    #allocation4 [shape = 'u8[24576]{0}', space=vmem, size = 0x6000, scoped, tag = 'output window, operand 1']
    loop: start=0, step=1, limit=4
    $region2: #{_shared_sep_conv_pallas.1} parent=1 // loop_pre_header
      _
    $region3: #{_shared_sep_conv_pallas.1} parent=1 // loop_header
      %s10 = sphi 0, %s14
      %p11 = scmp.ge.s32.totalorder %s10, 4
      %s20 = sphi 0, %s22
      %s23 = sphi 0, %s20
      %s24 = sphi 0, %s23
      %s40 = sphi 0, %s24
      %s44 = sphi 0, %s44
      %s46 = sphi 0, %s44
      %s47 = sphi 0, %s46
      %s61 = sphi 0, %s47
      %s67 = sphi 0, %s69
      %s70 = sphi 0, %s67
      %s71 = sphi 0, %s70
      %s87 = sphi 0, %s71
      %s93 = sphi 0, %s95
      %s96 = sphi 0, %s93
      %s97 = sphi 0, %s96
      %s113 = sphi 0, %s97
    $region4: #{_shared_sep_conv_pallas.1} parent=1 // loop_header_branch
      %13 = sbr.rel (%p11) target = $region8
    $region5: #{_shared_sep_conv_pallas.1} parent=1 // loop_body
      %s15 = ssub.s32 %s10, 1
      %s16 = ssub.s32 %s10, 2
      %s17 = sadd.s32 %s10, 1
      %s18 = ssub.s32 %s10, %s17
      %p19 = scmp.eq.s32.totalorder %s18, 0
      %s21 = sadd.s32 %s20, 1
      %s22 = scalar_select %p19, %s20, %s21
      %p25 = pneg %p19
      %p26 = scmp.eq.s32.totalorder %s10, 1
      %p27 = por %p25, %p26
      %p28 = scmp.ne.s32.totalorder %s20, %s23
      %p29 = scmp.eq.s32.totalorder %s10, 0
      %p30 = por %p28, %p29
      %p31 = scmp.ne.s32.totalorder %s20, %s23
      %p32 = scmp.eq.s32.totalorder %s15, 1
      %p33 = por %p31, %p32
      %p34 = scmp.ne.s32.totalorder %s23, %s24
      %p35 = scmp.eq.s32.totalorder %s15, 0
      %p36 = por %p34, %p35
      %p37 = scmp.ne.s32.totalorder %s23, %s24
      %p38 = scmp.eq.s32.totalorder %s16, 1
      %p39 = por %p37, %p38
      %p41 = scmp.ne.s32.totalorder %s24, %s40
      %p42 = scmp.eq.s32.totalorder %s16, 0
      %p43 = por %p41, %p42
      %s45 = sadd.s32 %s44, 1
      %p48 = scmp.eq.s32.totalorder %s10, 1
      %p49 = scmp.ne.s32.totalorder %s44, %s46
      %p50 = scmp.eq.s32.totalorder %s10, 0
      %p51 = por %p49, %p50
      %p52 = scmp.ne.s32.totalorder %s44, %s46
      %p53 = scmp.eq.s32.totalorder %s15, 1
      %p54 = por %p52, %p53
      %p55 = scmp.ne.s32.totalorder %s46, %s47
      %p56 = scmp.eq.s32.totalorder %s15, 0
      %p57 = por %p55, %p56
      %p58 = scmp.ne.s32.totalorder %s46, %s47
      %p59 = scmp.eq.s32.totalorder %s16, 1
      %p60 = por %p58, %p59
      %p62 = scmp.ne.s32.totalorder %s47, %s61
      %p63 = scmp.eq.s32.totalorder %s16, 0
      %p64 = por %p62, %p63
      %s65 = ssub.s32 %s10, %s17
      %p66 = scmp.eq.s32.totalorder %s65, 0
      %s68 = sadd.s32 %s67, 1
      %s69 = scalar_select %p66, %s67, %s68
      %p72 = pneg %p66
      %p73 = scmp.eq.s32.totalorder %s10, 1
      %p74 = por %p72, %p73
      %p75 = scmp.ne.s32.totalorder %s67, %s70
      %p76 = scmp.eq.s32.totalorder %s10, 0
      %p77 = por %p75, %p76
      %p78 = scmp.ne.s32.totalorder %s67, %s70
      %p79 = scmp.eq.s32.totalorder %s15, 1
      %p80 = por %p78, %p79
      %p81 = scmp.ne.s32.totalorder %s70, %s71
      %p82 = scmp.eq.s32.totalorder %s15, 0
      %p83 = por %p81, %p82
      %p84 = scmp.ne.s32.totalorder %s70, %s71
      %p85 = scmp.eq.s32.totalorder %s16, 1
      %p86 = por %p84, %p85
      %p88 = scmp.ne.s32.totalorder %s71, %s87
      %p89 = scmp.eq.s32.totalorder %s16, 0
      %p90 = por %p88, %p89
      %s91 = ssub.s32 %s10, %s17
      %p92 = scmp.eq.s32.totalorder %s91, 0
      %s94 = sadd.s32 %s93, 1
      %s95 = scalar_select %p92, %s93, %s94
      %p98 = pneg %p92
      %p99 = scmp.eq.s32.totalorder %s10, 1
      %p100 = por %p98, %p99
      %p101 = scmp.ne.s32.totalorder %s93, %s96
      %p102 = scmp.eq.s32.totalorder %s10, 0
      %p103 = por %p101, %p102
      %p104 = scmp.ne.s32.totalorder %s93, %s96
      %p105 = scmp.eq.s32.totalorder %s15, 1
      %p106 = por %p104, %p105
      %p107 = scmp.ne.s32.totalorder %s96, %s97
      %p108 = scmp.eq.s32.totalorder %s15, 0
      %p109 = por %p107, %p108
      %p110 = scmp.ne.s32.totalorder %s96, %s97
      %p111 = scmp.eq.s32.totalorder %s16, 1
      %p112 = por %p110, %p111
      %p114 = scmp.ne.s32.totalorder %s97, %s113
      %p115 = scmp.eq.s32.totalorder %s16, 0
      %p116 = por %p114, %p115
      %p117 = scmp.le.s32.totalorder 1, %s10
      %p118 = scmp.lt.s32.totalorder %s10, 3
      %p119 = pnand %p117, %p118
      %p120 = pneg %p119
      // Predicated region
      $region9: #{_shared_sep_conv_pallas.1} parent=5 // pred_check
        _
      $region10: #{_shared_sep_conv_pallas.1} parent=5 // pred_check_branch
        %122 = sbr.rel (%p119) target = $region12
      $region11: #{_shared_sep_conv_pallas.1} parent=5 // pred_region
        %s123 = ssub.s32 %s10, 1
        // Predicated region
        $region13: #{_shared_sep_conv_pallas.1} parent=11 // pred_check
          %p124 = pneg %p57
        $region14: #{_shared_sep_conv_pallas.1} parent=11 // pred_check_branch
          %126 = sbr.rel (%p124) target = $region16
        $region15: #{_shared_sep_conv_pallas.1} parent=11 // pred_region
          _
        $region16: #{_shared_sep_conv_pallas.1} parent=11 // pred_fallthru
          _
      $region12: #{_shared_sep_conv_pallas.1} parent=5 // pred_fallthru
        _
      %p127 = scmp.lt.s32.totalorder %s10, 2
      // Predicated region
      $region17: #{_shared_sep_conv_pallas.1} parent=5 // pred_check
        %p128 = pneg %p127
      $region18: #{_shared_sep_conv_pallas.1} parent=5 // pred_check_branch
        %130 = sbr.rel (%p128) target = $region20
      $region19: #{_shared_sep_conv_pallas.1} parent=5 // pred_region
        // Predicated region
        $region21: #{_shared_sep_conv_pallas.1} parent=19 // pred_check
          %p131 = pneg %p30
        $region22: #{_shared_sep_conv_pallas.1} parent=19 // pred_check_branch
          %133 = sbr.rel (%p131) target = $region24
        $region23: #{_shared_sep_conv_pallas.1} parent=19 // pred_region
          %s134 = sand.u32 %s20, 1
          %s135 = sand.u32 %s20, 1
          %s136 = smul.addr %s135, 24
          %s137 = scalar_lea.vmem [#allocation2], %s136
          %s138 = smul.u32 3, %s10
          %s139 = ssub.s32 5, %s138
          %p140 = scmp.lt.s32.totalorder %s139, 3
          %s141 = scalar_select %p140, %s139, 3
          %s142 = smul.u32 128, %s141
          %p143 = scmp.ne.s32.totalorder 0, %s142
          %s144 = smul.addr %s138, 4
          %s145 = scalar_lea.vmem %s0, %s144
          %s146 = smul.u32 %s141, 4
          // Predicated region
          $region25: #{_shared_sep_conv_pallas.1} parent=23 // pred_check
            %p147 = pneg %p143
          $region26: #{_shared_sep_conv_pallas.1} parent=23 // pred_check_branch
            %149 = sbr.rel (%p147) target = $region28
          $region27: #{_shared_sep_conv_pallas.1} parent=23 // pred_region
            %p150 = scmp.lt.u32.totalorder %s146, 8
            %p151 = pneg %p150
            // Predicated region
            $region29: #{_shared_sep_conv_pallas.1} parent=27 // pred_check
              _
            $region30: #{_shared_sep_conv_pallas.1} parent=27 // pred_check_branch
              %153 = sbr.rel (%p150) target = $region32
            $region31: #{_shared_sep_conv_pallas.1} parent=27 // pred_region
              %s170 = sand.u32 %s146, 7
              %p171 = scmp.eq.s32.totalorder %s170, 0
              // Predicated region
              $region44: #{_shared_sep_conv_pallas.1} parent=31 // pred_check
                %p172 = pneg %p171
              $region45: #{_shared_sep_conv_pallas.1} parent=31 // pred_check_branch
                %174 = sbr.rel (%p172) target = $region47
              $region46: #{_shared_sep_conv_pallas.1} parent=31 // pred_region
                %s175 = sshrl.u32 %s146, 3
                %s176 = sshrl.u32 %s175, 5
                // While loop
                $region48: #{_shared_sep_conv_pallas.1} parent=46 // loop_pre_header
                  _
                $region49: #{_shared_sep_conv_pallas.1} parent=46 // loop_header
                  %s180 = sphi 0, %s182
                  %p181 = scmp.ge.s32.totalorder %s180, %s176
                  %s185 = sphi 0, %s318
                  %s186 = sphi %s145, %s321
                  %s187 = sphi %s137, %s322
                $region50: #{_shared_sep_conv_pallas.1} parent=46 // loop_header_branch
                  %184 = sbr.rel (%p181) target = $region54
                $region51: #{_shared_sep_conv_pallas.1} parent=46 // loop_body
                  %v188 = vld [vmem:[%s186] sm:$0xff]
                  %189 = vst [vmem:[%s187] sm:$0xff] %v188
                  %v190 = vld [vmem:[%s186 + $0x8] sm:$0xff]
                  %191 = vst [vmem:[%s187 + $0x8] sm:$0xff] %v190
                  %v192 = vld [vmem:[%s186 + $0x10] sm:$0xff]
                  %193 = vst [vmem:[%s187 + $0x10] sm:$0xff] %v192
                  %v194 = vld [vmem:[%s186 + $0x18] sm:$0xff]
                  %195 = vst [vmem:[%s187 + $0x18] sm:$0xff] %v194
                  %v196 = vld [vmem:[%s186 + $0x20] sm:$0xff]
                  %197 = vst [vmem:[%s187 + $0x20] sm:$0xff] %v196
                  %v198 = vld [vmem:[%s186 + $0x28] sm:$0xff]
                  %199 = vst [vmem:[%s187 + $0x28] sm:$0xff] %v198
                  %v200 = vld [vmem:[%s186 + $0x30] sm:$0xff]
                  %201 = vst [vmem:[%s187 + $0x30] sm:$0xff] %v200
                  %v202 = vld [vmem:[%s186 + $0x38] sm:$0xff]
                  %203 = vst [vmem:[%s187 + $0x38] sm:$0xff] %v202
                  %v204 = vld [vmem:[%s186 + $0x40] sm:$0xff]
                  %205 = vst [vmem:[%s187 + $0x40] sm:$0xff] %v204
                  %v206 = vld [vmem:[%s186 + $0x48] sm:$0xff]
                  %207 = vst [vmem:[%s187 + $0x48] sm:$0xff] %v206
                  %v208 = vld [vmem:[%s186 + $0x50] sm:$0xff]
                  %209 = vst [vmem:[%s187 + $0x50] sm:$0xff] %v208
                  %v210 = vld [vmem:[%s186 + $0x58] sm:$0xff]
                  %211 = vst [vmem:[%s187 + $0x58] sm:$0xff] %v210
                  %v212 = vld [vmem:[%s186 + $0x60] sm:$0xff]
                  %213 = vst [vmem:[%s187 + $0x60] sm:$0xff] %v212
                  %v214 = vld [vmem:[%s186 + $0x68] sm:$0xff]
                  %215 = vst [vmem:[%s187 + $0x68] sm:$0xff] %v214
                  %v216 = vld [vmem:[%s186 + $0x70] sm:$0xff]
                  %217 = vst [vmem:[%s187 + $0x70] sm:$0xff] %v216
                  %v218 = vld [vmem:[%s186 + $0x78] sm:$0xff]
                  %219 = vst [vmem:[%s187 + $0x78] sm:$0xff] %v218
                  %v220 = vld [vmem:[%s186 + $0x80] sm:$0xff]
                  %221 = vst [vmem:[%s187 + $0x80] sm:$0xff] %v220
                  %v222 = vld [vmem:[%s186 + $0x88] sm:$0xff]
                  %223 = vst [vmem:[%s187 + $0x88] sm:$0xff] %v222
                  %v224 = vld [vmem:[%s186 + $0x90] sm:$0xff]
                  %225 = vst [vmem:[%s187 + $0x90] sm:$0xff] %v224
                  %v226 = vld [vmem:[%s186 + $0x98] sm:$0xff]
                  %227 = vst [vmem:[%s187 + $0x98] sm:$0xff] %v226
                  %v228 = vld [vmem:[%s186 + $0xa0] sm:$0xff]
                  %229 = vst [vmem:[%s187 + $0xa0] sm:$0xff] %v228
                  %v230 = vld [vmem:[%s186 + $0xa8] sm:$0xff]
                  %231 = vst [vmem:[%s187 + $0xa8] sm:$0xff] %v230
                  %v232 = vld [vmem:[%s186 + $0xb0] sm:$0xff]
                  %233 = vst [vmem:[%s187 + $0xb0] sm:$0xff] %v232
                  %v234 = vld [vmem:[%s186 + $0xb8] sm:$0xff]
                  %235 = vst [vmem:[%s187 + $0xb8] sm:$0xff] %v234
                  %v236 = vld [vmem:[%s186 + $0xc0] sm:$0xff]
                  %237 = vst [vmem:[%s187 + $0xc0] sm:$0xff] %v236
                  %v238 = vld [vmem:[%s186 + $0xc8] sm:$0xff]
                  %239 = vst [vmem:[%s187 + $0xc8] sm:$0xff] %v238
                  %v240 = vld [vmem:[%s186 + $0xd0] sm:$0xff]
                  %241 = vst [vmem:[%s187 + $0xd0] sm:$0xff] %v240
                  %v242 = vld [vmem:[%s186 + $0xd8] sm:$0xff]
                  %243 = vst [vmem:[%s187 + $0xd8] sm:$0xff] %v242
                  %v244 = vld [vmem:[%s186 + $0xe0] sm:$0xff]
                  %245 = vst [vmem:[%s187 + $0xe0] sm:$0xff] %v244
                  %v246 = vld [vmem:[%s186 + $0xe8] sm:$0xff]
                  %247 = vst [vmem:[%s187 + $0xe8] sm:$0xff] %v246
                  %v248 = vld [vmem:[%s186 + $0xf0] sm:$0xff]
                  %249 = vst [vmem:[%s187 + $0xf0] sm:$0xff] %v248
                  %v250 = vld [vmem:[%s186 + $0xf8] sm:$0xff]
                  %251 = vst [vmem:[%s187 + $0xf8] sm:$0xff] %v250
                  %v252 = vld [vmem:[%s186 + $0x14] sm:$0xff]
                  %253 = vst [vmem:[%s187 + $0xc] sm:$0xff] %v252
                  %v254 = vld [vmem:[%s186 + $0x1c] sm:$0xff]
                  %255 = vst [vmem:[%s187 + $0x14] sm:$0xff] %v254
                  %v256 = vld [vmem:[%s186 + $0x24] sm:$0xff]
                  %257 = vst [vmem:[%s187 + $0x1c] sm:$0xff] %v256
                  %v258 = vld [vmem:[%s186 + $0x2c] sm:$0xff]
                  %259 = vst [vmem:[%s187 + $0x24] sm:$0xff] %v258
                  %v260 = vld [vmem:[%s186 + $0x34] sm:$0xff]
                  %261 = vst [vmem:[%s187 + $0x2c] sm:$0xff] %v260
                  %v262 = vld [vmem:[%s186 + $0x3c] sm:$0xff]
                  %263 = vst [vmem:[%s187 + $0x34] sm:$0xff] %v262
                  %v264 = vld [vmem:[%s186 + $0x44] sm:$0xff]
                  %265 = vst [vmem:[%s187 + $0x3c] sm:$0xff] %v264
                  %v266 = vld [vmem:[%s186 + $0x4c] sm:$0xff]
                  %267 = vst [vmem:[%s187 + $0x44] sm:$0xff] %v266
                  %v268 = vld [vmem:[%s186 + $0x54] sm:$0xff]
                  %269 = vst [vmem:[%s187 + $0x4c] sm:$0xff] %v268
                  %v270 = vld [vmem:[%s186 + $0x5c] sm:$0xff]
                  %271 = vst [vmem:[%s187 + $0x54] sm:$0xff] %v270
                  %v272 = vld [vmem:[%s186 + $0x64] sm:$0xff]
                  %273 = vst [vmem:[%s187 + $0x5c] sm:$0xff] %v272
                  %v274 = vld [vmem:[%s186 + $0x6c] sm:$0xff]
                  %275 = vst [vmem:[%s187 + $0x64] sm:$0xff] %v274
                  %v276 = vld [vmem:[%s186 + $0x74] sm:$0xff]
                  %277 = vst [vmem:[%s187 + $0x6c] sm:$0xff] %v276
                  %v278 = vld [vmem:[%s186 + $0x7c] sm:$0xff]
                  %279 = vst [vmem:[%s187 + $0x74] sm:$0xff] %v278
                  %v280 = vld [vmem:[%s186 + $0x84] sm:$0xff]
                  %281 = vst [vmem:[%s187 + $0x7c] sm:$0xff] %v280
                  %v282 = vld [vmem:[%s186 + $0x8c] sm:$0xff]
                  %283 = vst [vmem:[%s187 + $0x84] sm:$0xff] %v282
                  %v284 = vld [vmem:[%s186 + $0x94] sm:$0xff]
                  %285 = vst [vmem:[%s187 + $0x8c] sm:$0xff] %v284
                  %v286 = vld [vmem:[%s186 + $0x9c] sm:$0xff]
                  %287 = vst [vmem:[%s187 + $0x94] sm:$0xff] %v286
                  %v288 = vld [vmem:[%s186 + $0xa4] sm:$0xff]
                  %289 = vst [vmem:[%s187 + $0x9c] sm:$0xff] %v288
                  %v290 = vld [vmem:[%s186 + $0xac] sm:$0xff]
                  %291 = vst [vmem:[%s187 + $0xa4] sm:$0xff] %v290
                  %v292 = vld [vmem:[%s186 + $0xb4] sm:$0xff]
                  %293 = vst [vmem:[%s187 + $0xac] sm:$0xff] %v292
                  %v294 = vld [vmem:[%s186 + $0xbc] sm:$0xff]
                  %295 = vst [vmem:[%s187 + $0xb4] sm:$0xff] %v294
                  %v296 = vld [vmem:[%s186 + $0xc4] sm:$0xff]
                  %297 = vst [vmem:[%s187 + $0xbc] sm:$0xff] %v296
                  %v298 = vld [vmem:[%s186 + $0xcc] sm:$0xff]
                  %299 = vst [vmem:[%s187 + $0xc4] sm:$0xff] %v298
                  %v300 = vld [vmem:[%s186 + $0xd4] sm:$0xff]
                  %301 = vst [vmem:[%s187 + $0xcc] sm:$0xff] %v300
                  %v302 = vld [vmem:[%s186 + $0xdc] sm:$0xff]
                  %303 = vst [vmem:[%s187 + $0xd4] sm:$0xff] %v302
                  %v304 = vld [vmem:[%s186 + $0xe4] sm:$0xff]
                  %305 = vst [vmem:[%s187 + $0xdc] sm:$0xff] %v304
                  %v306 = vld [vmem:[%s186 + $0xec] sm:$0xff]
                  %307 = vst [vmem:[%s187 + $0xe4] sm:$0xff] %v306
                  %v308 = vld [vmem:[%s186 + $0xf4] sm:$0xff]
                  %309 = vst [vmem:[%s187 + $0xec] sm:$0xff] %v308
                  %v310 = vld [vmem:[%s186 + $0xfc] sm:$0xff]
                  %311 = vst [vmem:[%s187 + $0xf4] sm:$0xff] %v310
                  %v312 = vld [vmem:[%s186 + $0x104] sm:$0xff]
                  %313 = vst [vmem:[%s187 + $0xfc] sm:$0xff] %v312
                  %v314 = vld [vmem:[%s186 + $0x10c] sm:$0xff]
                  %315 = vst [vmem:[%s187 + $0x104] sm:$0xff] %v314
                  %s316 = sadd.s32 1, %s185
                  %p317 = scmp.ge.s32.totalorder %s316, %s176
                  %s318 = scalar_select %p317, 0, %s316
                  %s319 = smul.u32 %s318, 256
                  %s320 = smul.u32 %s318, 256
                  %s321 = scalar_lea.vmem %s145, %s319
                  %s322 = scalar_lea.vmem %s137, %s320 [#allocation2]
                $region52: #{_shared_sep_conv_pallas.1} parent=46 // loop_footer
                  %s182 = sadd.s32 %s180, 1
                $region53: #{_shared_sep_conv_pallas.1} parent=46 // loop_footer_branch
                  %179 = sbr.rel target = $region49
                $region54: #{_shared_sep_conv_pallas.1} parent=46 // loop_exit
                  _
                %s323 = sshrl.u32 %s175, 5
                %s324 = sand.u32 %s175, 31
                %s325 = smul.u32 %s323, 32
                %s326 = smul.u32 128, %s325
                %s327 = sshra.s32 %s326, 4
                %s328 = scalar_lea.vmem %s145, %s327
                %s329 = smul.u32 128, %s325
                %s330 = sshra.s32 %s329, 4
                %s331 = scalar_lea.vmem %s137, %s330 [#allocation2]
                // While loop
                $region55: #{_shared_sep_conv_pallas.1} parent=46 // loop_pre_header
                  _
                $region56: #{_shared_sep_conv_pallas.1} parent=46 // loop_header
                  %s335 = sphi 0, %s337
                  %p336 = scmp.ge.s32.totalorder %s335, %s324
                  %s340 = sphi 0, %s349
                  %s341 = sphi %s328, %s352
                  %s342 = sphi %s331, %s353
                $region57: #{_shared_sep_conv_pallas.1} parent=46 // loop_header_branch
                  %339 = sbr.rel (%p336) target = $region61
                $region58: #{_shared_sep_conv_pallas.1} parent=46 // loop_body
                  %v343 = vld [vmem:[%s341] sm:$0xff]
                  %344 = vst [vmem:[%s342] sm:$0xff] %v343
                  %v345 = vld [vmem:[%s341 + $0x14] sm:$0xff]
                  %346 = vst [vmem:[%s342 + $0xc] sm:$0xff] %v345
                  %s347 = sadd.s32 1, %s340
                  %p348 = scmp.ge.s32.totalorder %s347, %s324
                  %s349 = scalar_select %p348, 0, %s347
                  %s350 = smul.u32 %s349, 8
                  %s351 = smul.u32 %s349, 8
                  %s352 = scalar_lea.vmem %s328, %s350
                  %s353 = scalar_lea.vmem %s331, %s351 [#allocation2]
                $region59: #{_shared_sep_conv_pallas.1} parent=46 // loop_footer
                  %s337 = sadd.s32 %s335, 1
                $region60: #{_shared_sep_conv_pallas.1} parent=46 // loop_footer_branch
                  %334 = sbr.rel target = $region56
                $region61: #{_shared_sep_conv_pallas.1} parent=46 // loop_exit
                  _
              $region47: #{_shared_sep_conv_pallas.1} parent=31 // pred_fallthru
                _
              %p354 = pneg %p171
              // Predicated region
              $region62: #{_shared_sep_conv_pallas.1} parent=31 // pred_check
                _
              $region63: #{_shared_sep_conv_pallas.1} parent=31 // pred_check_branch
                %356 = sbr.rel (%p171) target = $region65
              $region64: #{_shared_sep_conv_pallas.1} parent=31 // pred_region
                %s357 = sand.u32 %s146, 7
                %s358 = ssub.s32 %s146, %s357
                %s359 = scalar_lea.vmem %s145, %s358
                %s360 = ssub.s32 %s146, %s357
                %s361 = scalar_lea.vmem %s137, %s360 [#allocation2]
                %s362 = sshrl.u32 %s146, 3
                %s363 = sshrl.u32 %s362, 5
                // While loop
                $region66: #{_shared_sep_conv_pallas.1} parent=64 // loop_pre_header
                  _
                $region67: #{_shared_sep_conv_pallas.1} parent=64 // loop_header
                  %s367 = sphi 0, %s369
                  %p368 = scmp.ge.s32.totalorder %s367, %s363
                  %s372 = sphi 0, %s505
                  %s373 = sphi %s145, %s508
                  %s374 = sphi %s137, %s509
                $region68: #{_shared_sep_conv_pallas.1} parent=64 // loop_header_branch
                  %371 = sbr.rel (%p368) target = $region72
                $region69: #{_shared_sep_conv_pallas.1} parent=64 // loop_body
                  %v375 = vld [vmem:[%s373] sm:$0xff]
                  %376 = vst [vmem:[%s374] sm:$0xff] %v375
                  %v377 = vld [vmem:[%s373 + $0x8] sm:$0xff]
                  %378 = vst [vmem:[%s374 + $0x8] sm:$0xff] %v377
                  %v379 = vld [vmem:[%s373 + $0x10] sm:$0xff]
                  %380 = vst [vmem:[%s374 + $0x10] sm:$0xff] %v379
                  %v381 = vld [vmem:[%s373 + $0x18] sm:$0xff]
                  %382 = vst [vmem:[%s374 + $0x18] sm:$0xff] %v381
                  %v383 = vld [vmem:[%s373 + $0x20] sm:$0xff]
                  %384 = vst [vmem:[%s374 + $0x20] sm:$0xff] %v383
                  %v385 = vld [vmem:[%s373 + $0x28] sm:$0xff]
                  %386 = vst [vmem:[%s374 + $0x28] sm:$0xff] %v385
                  %v387 = vld [vmem:[%s373 + $0x30] sm:$0xff]
                  %388 = vst [vmem:[%s374 + $0x30] sm:$0xff] %v387
                  %v389 = vld [vmem:[%s373 + $0x38] sm:$0xff]
                  %390 = vst [vmem:[%s374 + $0x38] sm:$0xff] %v389
                  %v391 = vld [vmem:[%s373 + $0x40] sm:$0xff]
                  %392 = vst [vmem:[%s374 + $0x40] sm:$0xff] %v391
                  %v393 = vld [vmem:[%s373 + $0x48] sm:$0xff]
                  %394 = vst [vmem:[%s374 + $0x48] sm:$0xff] %v393
                  %v395 = vld [vmem:[%s373 + $0x50] sm:$0xff]
                  %396 = vst [vmem:[%s374 + $0x50] sm:$0xff] %v395
                  %v397 = vld [vmem:[%s373 + $0x58] sm:$0xff]
                  %398 = vst [vmem:[%s374 + $0x58] sm:$0xff] %v397
                  %v399 = vld [vmem:[%s373 + $0x60] sm:$0xff]
                  %400 = vst [vmem:[%s374 + $0x60] sm:$0xff] %v399
                  %v401 = vld [vmem:[%s373 + $0x68] sm:$0xff]
                  %402 = vst [vmem:[%s374 + $0x68] sm:$0xff] %v401
                  %v403 = vld [vmem:[%s373 + $0x70] sm:$0xff]
                  %404 = vst [vmem:[%s374 + $0x70] sm:$0xff] %v403
                  %v405 = vld [vmem:[%s373 + $0x78] sm:$0xff]
                  %406 = vst [vmem:[%s374 + $0x78] sm:$0xff] %v405
                  %v407 = vld [vmem:[%s373 + $0x80] sm:$0xff]
                  %408 = vst [vmem:[%s374 + $0x80] sm:$0xff] %v407
                  %v409 = vld [vmem:[%s373 + $0x88] sm:$0xff]
                  %410 = vst [vmem:[%s374 + $0x88] sm:$0xff] %v409
                  %v411 = vld [vmem:[%s373 + $0x90] sm:$0xff]
                  %412 = vst [vmem:[%s374 + $0x90] sm:$0xff] %v411
                  %v413 = vld [vmem:[%s373 + $0x98] sm:$0xff]
                  %414 = vst [vmem:[%s374 + $0x98] sm:$0xff] %v413
                  %v415 = vld [vmem:[%s373 + $0xa0] sm:$0xff]
                  %416 = vst [vmem:[%s374 + $0xa0] sm:$0xff] %v415
                  %v417 = vld [vmem:[%s373 + $0xa8] sm:$0xff]
                  %418 = vst [vmem:[%s374 + $0xa8] sm:$0xff] %v417
                  %v419 = vld [vmem:[%s373 + $0xb0] sm:$0xff]
                  %420 = vst [vmem:[%s374 + $0xb0] sm:$0xff] %v419
                  %v421 = vld [vmem:[%s373 + $0xb8] sm:$0xff]
                  %422 = vst [vmem:[%s374 + $0xb8] sm:$0xff] %v421
                  %v423 = vld [vmem:[%s373 + $0xc0] sm:$0xff]
                  %424 = vst [vmem:[%s374 + $0xc0] sm:$0xff] %v423
                  %v425 = vld [vmem:[%s373 + $0xc8] sm:$0xff]
                  %426 = vst [vmem:[%s374 + $0xc8] sm:$0xff] %v425
                  %v427 = vld [vmem:[%s373 + $0xd0] sm:$0xff]
                  %428 = vst [vmem:[%s374 + $0xd0] sm:$0xff] %v427
                  %v429 = vld [vmem:[%s373 + $0xd8] sm:$0xff]
                  %430 = vst [vmem:[%s374 + $0xd8] sm:$0xff] %v429
                  %v431 = vld [vmem:[%s373 + $0xe0] sm:$0xff]
                  %432 = vst [vmem:[%s374 + $0xe0] sm:$0xff] %v431
                  %v433 = vld [vmem:[%s373 + $0xe8] sm:$0xff]
                  %434 = vst [vmem:[%s374 + $0xe8] sm:$0xff] %v433
                  %v435 = vld [vmem:[%s373 + $0xf0] sm:$0xff]
                  %436 = vst [vmem:[%s374 + $0xf0] sm:$0xff] %v435
                  %v437 = vld [vmem:[%s373 + $0xf8] sm:$0xff]
                  %438 = vst [vmem:[%s374 + $0xf8] sm:$0xff] %v437
                  %v439 = vld [vmem:[%s373 + $0x14] sm:$0xff]
                  %440 = vst [vmem:[%s374 + $0xc] sm:$0xff] %v439
                  %v441 = vld [vmem:[%s373 + $0x1c] sm:$0xff]
                  %442 = vst [vmem:[%s374 + $0x14] sm:$0xff] %v441
                  %v443 = vld [vmem:[%s373 + $0x24] sm:$0xff]
                  %444 = vst [vmem:[%s374 + $0x1c] sm:$0xff] %v443
                  %v445 = vld [vmem:[%s373 + $0x2c] sm:$0xff]
                  %446 = vst [vmem:[%s374 + $0x24] sm:$0xff] %v445
                  %v447 = vld [vmem:[%s373 + $0x34] sm:$0xff]
                  %448 = vst [vmem:[%s374 + $0x2c] sm:$0xff] %v447
                  %v449 = vld [vmem:[%s373 + $0x3c] sm:$0xff]
                  %450 = vst [vmem:[%s374 + $0x34] sm:$0xff] %v449
                  %v451 = vld [vmem:[%s373 + $0x44] sm:$0xff]
                  %452 = vst [vmem:[%s374 + $0x3c] sm:$0xff] %v451
                  %v453 = vld [vmem:[%s373 + $0x4c] sm:$0xff]
                  %454 = vst [vmem:[%s374 + $0x44] sm:$0xff] %v453
                  %v455 = vld [vmem:[%s373 + $0x54] sm:$0xff]
                  %456 = vst [vmem:[%s374 + $0x4c] sm:$0xff] %v455
                  %v457 = vld [vmem:[%s373 + $0x5c] sm:$0xff]
                  %458 = vst [vmem:[%s374 + $0x54] sm:$0xff] %v457
                  %v459 = vld [vmem:[%s373 + $0x64] sm:$0xff]
                  %460 = vst [vmem:[%s374 + $0x5c] sm:$0xff] %v459
                  %v461 = vld [vmem:[%s373 + $0x6c] sm:$0xff]
                  %462 = vst [vmem:[%s374 + $0x64] sm:$0xff] %v461
                  %v463 = vld [vmem:[%s373 + $0x74] sm:$0xff]
                  %464 = vst [vmem:[%s374 + $0x6c] sm:$0xff] %v463
                  %v465 = vld [vmem:[%s373 + $0x7c] sm:$0xff]
                  %466 = vst [vmem:[%s374 + $0x74] sm:$0xff] %v465
                  %v467 = vld [vmem:[%s373 + $0x84] sm:$0xff]
                  %468 = vst [vmem:[%s374 + $0x7c] sm:$0xff] %v467
                  %v469 = vld [vmem:[%s373 + $0x8c] sm:$0xff]
                  %470 = vst [vmem:[%s374 + $0x84] sm:$0xff] %v469
                  %v471 = vld [vmem:[%s373 + $0x94] sm:$0xff]
                  %472 = vst [vmem:[%s374 + $0x8c] sm:$0xff] %v471
                  %v473 = vld [vmem:[%s373 + $0x9c] sm:$0xff]
                  %474 = vst [vmem:[%s374 + $0x94] sm:$0xff] %v473
                  %v475 = vld [vmem:[%s373 + $0xa4] sm:$0xff]
                  %476 = vst [vmem:[%s374 + $0x9c] sm:$0xff] %v475
                  %v477 = vld [vmem:[%s373 + $0xac] sm:$0xff]
                  %478 = vst [vmem:[%s374 + $0xa4] sm:$0xff] %v477
                  %v479 = vld [vmem:[%s373 + $0xb4] sm:$0xff]
                  %480 = vst [vmem:[%s374 + $0xac] sm:$0xff] %v479
                  %v481 = vld [vmem:[%s373 + $0xbc] sm:$0xff]
                  %482 = vst [vmem:[%s374 + $0xb4] sm:$0xff] %v481
                  %v483 = vld [vmem:[%s373 + $0xc4] sm:$0xff]
                  %484 = vst [vmem:[%s374 + $0xbc] sm:$0xff] %v483
                  %v485 = vld [vmem:[%s373 + $0xcc] sm:$0xff]
                  %486 = vst [vmem:[%s374 + $0xc4] sm:$0xff] %v485
                  %v487 = vld [vmem:[%s373 + $0xd4] sm:$0xff]
                  %488 = vst [vmem:[%s374 + $0xcc] sm:$0xff] %v487
                  %v489 = vld [vmem:[%s373 + $0xdc] sm:$0xff]
                  %490 = vst [vmem:[%s374 + $0xd4] sm:$0xff] %v489
                  %v491 = vld [vmem:[%s373 + $0xe4] sm:$0xff]
                  %492 = vst [vmem:[%s374 + $0xdc] sm:$0xff] %v491
                  %v493 = vld [vmem:[%s373 + $0xec] sm:$0xff]
                  %494 = vst [vmem:[%s374 + $0xe4] sm:$0xff] %v493
                  %v495 = vld [vmem:[%s373 + $0xf4] sm:$0xff]
                  %496 = vst [vmem:[%s374 + $0xec] sm:$0xff] %v495
                  %v497 = vld [vmem:[%s373 + $0xfc] sm:$0xff]
                  %498 = vst [vmem:[%s374 + $0xf4] sm:$0xff] %v497
                  %v499 = vld [vmem:[%s373 + $0x104] sm:$0xff]
                  %500 = vst [vmem:[%s374 + $0xfc] sm:$0xff] %v499
                  %v501 = vld [vmem:[%s373 + $0x10c] sm:$0xff]
                  %502 = vst [vmem:[%s374 + $0x104] sm:$0xff] %v501
                  %s503 = sadd.s32 1, %s372
                  %p504 = scmp.ge.s32.totalorder %s503, %s363
                  %s505 = scalar_select %p504, 0, %s503
                  %s506 = smul.u32 %s505, 256
                  %s507 = smul.u32 %s505, 256
                  %s508 = scalar_lea.vmem %s145, %s506
                  %s509 = scalar_lea.vmem %s137, %s507 [#allocation2]
                $region70: #{_shared_sep_conv_pallas.1} parent=64 // loop_footer
                  %s369 = sadd.s32 %s367, 1
                $region71: #{_shared_sep_conv_pallas.1} parent=64 // loop_footer_branch
                  %366 = sbr.rel target = $region67
                $region72: #{_shared_sep_conv_pallas.1} parent=64 // loop_exit
                  _
                %s510 = sshrl.u32 %s362, 5
                %s511 = sand.u32 %s362, 31
                %s512 = smul.u32 %s510, 32
                %s513 = smul.u32 128, %s512
                %s514 = sshra.s32 %s513, 4
                %s515 = scalar_lea.vmem %s145, %s514
                %s516 = smul.u32 128, %s512
                %s517 = sshra.s32 %s516, 4
                %s518 = scalar_lea.vmem %s137, %s517 [#allocation2]
                // While loop
                $region73: #{_shared_sep_conv_pallas.1} parent=64 // loop_pre_header
                  _
                $region74: #{_shared_sep_conv_pallas.1} parent=64 // loop_header
                  %s522 = sphi 0, %s524
                  %p523 = scmp.ge.s32.totalorder %s522, %s511
                  %s527 = sphi 0, %s536
                  %s528 = sphi %s515, %s539
                  %s529 = sphi %s518, %s540
                $region75: #{_shared_sep_conv_pallas.1} parent=64 // loop_header_branch
                  %526 = sbr.rel (%p523) target = $region79
                $region76: #{_shared_sep_conv_pallas.1} parent=64 // loop_body
                  %v530 = vld [vmem:[%s528] sm:$0xff]
                  %531 = vst [vmem:[%s529] sm:$0xff] %v530
                  %v532 = vld [vmem:[%s528 + $0x14] sm:$0xff]
                  %533 = vst [vmem:[%s529 + $0xc] sm:$0xff] %v532
                  %s534 = sadd.s32 1, %s527
                  %p535 = scmp.ge.s32.totalorder %s534, %s511
                  %s536 = scalar_select %p535, 0, %s534
                  %s537 = smul.u32 %s536, 8
                  %s538 = smul.u32 %s536, 8
                  %s539 = scalar_lea.vmem %s515, %s537
                  %s540 = scalar_lea.vmem %s518, %s538 [#allocation2]
                $region77: #{_shared_sep_conv_pallas.1} parent=64 // loop_footer
                  %s524 = sadd.s32 %s522, 1
                $region78: #{_shared_sep_conv_pallas.1} parent=64 // loop_footer_branch
                  %521 = sbr.rel target = $region74
                $region79: #{_shared_sep_conv_pallas.1} parent=64 // loop_exit
                  _
                %s541 = sshllo.u32 0, %s357
                loop: start=0, step=1, limit=1
                $region80: #{_shared_sep_conv_pallas.1} parent=64 // loop_pre_header
                  _
                $region81: #{_shared_sep_conv_pallas.1} parent=64 // loop_header
                  %s543 = sphi 0, %s547
                  %p544 = scmp.ge.s32.totalorder %s543, 1
                  %s548 = sphi %s359, %s359
                  %s549 = sphi %s361, %s361
                $region82: #{_shared_sep_conv_pallas.1} parent=64 // loop_header_branch
                  %546 = sbr.rel (%p544) target = $region86
                $region83: #{_shared_sep_conv_pallas.1} parent=64 // loop_body
                  %v550 = vld [vmem:[%s548] sm:%s541]
                  %551 = vst [vmem:[%s549] sm:%s541] %v550
                  %v552 = vld [vmem:[%s548 + $0x14] sm:%s541]
                  %553 = vst [vmem:[%s549 + $0xc] sm:%s541] %v552
                $region84: #{_shared_sep_conv_pallas.1} parent=64 // loop_footer
                  %s547 = sadd.s32 1, %s543
                $region85: #{_shared_sep_conv_pallas.1} parent=64 // loop_footer_branch
                  %542 = sbr.rel target = $region81
                $region86: #{_shared_sep_conv_pallas.1} parent=64 // loop_exit
                  _
              $region65: #{_shared_sep_conv_pallas.1} parent=31 // pred_fallthru
                _
            $region32: #{_shared_sep_conv_pallas.1} parent=27 // pred_fallthru
              _
            // Predicated region
            $region33: #{_shared_sep_conv_pallas.1} parent=27 // pred_check
              %p154 = pneg %p150
            $region34: #{_shared_sep_conv_pallas.1} parent=27 // pred_check_branch
              %156 = sbr.rel (%p154) target = $region36
            $region35: #{_shared_sep_conv_pallas.1} parent=27 // pred_region
              %s157 = sshllo.u32 0, %s146
              loop: start=0, step=1, limit=1
              $region37: #{_shared_sep_conv_pallas.1} parent=35 // loop_pre_header
                _
              $region38: #{_shared_sep_conv_pallas.1} parent=35 // loop_header
                %s159 = sphi 0, %s163
                %p160 = scmp.ge.s32.totalorder %s159, 1
                %s164 = sphi %s145, %s145
                %s165 = sphi %s137, %s137
              $region39: #{_shared_sep_conv_pallas.1} parent=35 // loop_header_branch
                %162 = sbr.rel (%p160) target = $region43
              $region40: #{_shared_sep_conv_pallas.1} parent=35 // loop_body
                %v166 = vld [vmem:[%s164] sm:%s157]
                %167 = vst [vmem:[%s165] sm:%s157] %v166
                %v168 = vld [vmem:[%s164 + $0x14] sm:%s157]
                %169 = vst [vmem:[%s165 + $0xc] sm:%s157] %v168
              $region41: #{_shared_sep_conv_pallas.1} parent=35 // loop_footer
                %s163 = sadd.s32 1, %s159
              $region42: #{_shared_sep_conv_pallas.1} parent=35 // loop_footer_branch
                %158 = sbr.rel target = $region38
              $region43: #{_shared_sep_conv_pallas.1} parent=35 // loop_exit
                _
            $region36: #{_shared_sep_conv_pallas.1} parent=27 // pred_fallthru
              _
          $region28: #{_shared_sep_conv_pallas.1} parent=23 // pred_fallthru
            _
          %554 = vnop
        $region24: #{_shared_sep_conv_pallas.1} parent=19 // pred_fallthru
          _
      $region20: #{_shared_sep_conv_pallas.1} parent=5 // pred_fallthru
        _
      %p555 = scmp.le.s32.totalorder 1, %s10
      %p556 = scmp.lt.s32.totalorder %s10, 3
      %p557 = pnand %p555, %p556
      %p558 = pneg %p557
      // Predicated region
      $region87: #{_shared_sep_conv_pallas.1} parent=5 // pred_check
        _
      $region88: #{_shared_sep_conv_pallas.1} parent=5 // pred_check_branch
        %560 = sbr.rel (%p557) target = $region90
      $region89: #{_shared_sep_conv_pallas.1} parent=5 // pred_region
        %s561 = ssub.s32 %s10, 1
        %s562 = sand.u32 %s23, 1
        %s563 = sand.u32 %s23, 1
        %s564 = smul.addr %s563, 24
        %s565 = scalar_lea.vmem [#allocation2], %s564
        // Predicated region
        $region91: #{_shared_sep_conv_pallas.1} parent=89 // pred_check
          %p566 = pneg %p36
        $region92: #{_shared_sep_conv_pallas.1} parent=89 // pred_check_branch
          %568 = sbr.rel (%p566) target = $region94
        $region93: #{_shared_sep_conv_pallas.1} parent=89 // pred_region
          _
        $region94: #{_shared_sep_conv_pallas.1} parent=89 // pred_fallthru
          _
        %s569 = sand.u32 %s23, 1
        %s570 = sand.u32 %s23, 1
        %s571 = smul.addr %s570, 24
        %s572 = scalar_lea.vmem [#allocation2], %s571
        %p573 = pneg %p36
        %p574 = pneg %p33
        %p575 = pneg %p57
        %p576 = pneg %p54
        %p577 = pneg %p83
        %p578 = pneg %p80
        %s579 = sand.u32 %s70, 1
        %s580 = sand.u32 %s70, 1
        %s581 = smul.addr %s580, 24
        %s582 = scalar_lea.vmem [#allocation3], %s581
        %p583 = pneg %p109
        %p584 = pneg %p106
        %s585 = sand.u32 %s96, 1
        %s586 = sand.u32 %s96, 1
        %s587 = smul.addr %s586, 24
        %s588 = scalar_lea.vmem [#allocation4], %s587
        %s589 = smul.u32 3, %s15
        %s590 = ssub.s32 5, %s589
        %p591 = scmp.lt.s32.totalorder %s590, 3
        %s592 = scalar_select %p591, %s590, 3
        %s593 = smul.u32 128, %s592
        %s594 = smul.u32 3, %s15
        %s595 = ssub.s32 5, %s594
        %p596 = scmp.lt.s32.totalorder %s595, 3
        %s597 = scalar_select %p596, %s595, 3
        %s598 = smul.u32 128, %s597
        %s599 = smul.u32 3, %s15
        %s600 = ssub.s32 5, %s599
        %p601 = scmp.lt.s32.totalorder %s600, 3
        %s602 = scalar_select %p601, %s600, 3
        %s603 = smul.u32 128, %s602
        %v604 = vld [vmem:[%s1] sm:$0xff]
        %v605 = vld [vmem:[%s565] sm:$0xff]
        %v606 = vld [vmem:[%s565 + $0x8] sm:$0xf]
        %v609 = vcombine.high %v605, %v605
        %vm610 = vcmask 31744
        %v612 = vsel %vm610, %v604, 0
        %vm614 = vcmask 1043456
        %v615 = vsel %vm614, %v605, 0
        %v617 = vsel %vm614, %v609, 0
        %v619 = vsel %vm614, %v606, 0
        %v621 = vand.u32 %v617, 4294901760
        %622 = vmatprep.subr.mxu0 %v621
        %v623 = vand.u32 %v615, 4294901760
        %624 = vmatpush1.msra.mxu0 %v623
        %625 = vmatprep.subr.mxu0 0.0
        %626 = vmatpush1.msra.mxu0 0.0
        %627 = vmatprep.subr.mxu0 0.0
        %628 = vmatpush1.msra.mxu0 0.0
        %629 = vmatprep.subr.mxu0 0.0
        %630 = vmatpush1.msra.mxu0 0.0
        %631 = vmatprep.subr.mxu0 0.0
        %632 = vmatpush1.msra.mxu0 0.0
        %633 = vmatprep.subr.mxu0 0.0
        %634 = vmatpush1.msra.mxu0 0.0
        %635 = vmatprep.subr.mxu0 0.0
        %636 = vmatpush1.msra.mxu0 0.0
        %637 = vmatprep.subr.mxu0 0.0
        %638 = vmatpush1.msra.mxu0 0.0
        %639 = vmatprep.subr.mxu0 0.0
        %640 = vmatpush1.msra.mxu0 0.0
        %641 = vmatprep.subr.mxu0 0.0
        %642 = vmatpush1.msra.mxu0 0.0
        %643 = vmatprep.subr.mxu0 0.0
        %644 = vmatpush1.msra.mxu0 0.0
        %645 = vmatprep.subr.mxu0 0.0
        %646 = vmatpush1.msra.mxu0 0.0
        %647 = vmatprep.subr.mxu0 0.0
        %648 = vmatpush1.msra.mxu0 0.0
        %649 = vmatprep.subr.mxu0 0.0
        %650 = vmatpush1.msra.mxu0 0.0
        %651 = vmatprep.subr.mxu0 0.0
        %652 = vmatpush1.msra.mxu0 0.0
        %653 = vmatprep.subr.mxu0 0.0
        %654 = vmatpush1.msra.mxu0 0.0
        %655 = vmatprep.subr.mxu0 0.0
        %656 = vmatpush1.msra.mxu0 0.0
        %657 = vmatprep.subr.mxu0 0.0
        %658 = vmatpush1.msra.mxu0 0.0
        %659 = vmatprep.subr.mxu0 0.0
        %660 = vmatpush1.msra.mxu0 0.0
        %661 = vmatprep.subr.mxu0 0.0
        %662 = vmatpush1.msra.mxu0 0.0
        %663 = vmatprep.subr.mxu0 0.0
        %664 = vmatpush1.msra.mxu0 0.0
        %665 = vmatprep.subr.mxu0 0.0
        %666 = vmatpush1.msra.mxu0 0.0
        %667 = vmatprep.subr.mxu0 0.0
        %668 = vmatpush1.msra.mxu0 0.0
        %669 = vmatprep.subr.mxu0 0.0
        %670 = vmatpush1.msra.mxu0 0.0
        %671 = vmatprep.subr.mxu0 0.0
        %672 = vmatpush1.msra.mxu0 0.0
        %673 = vmatprep.subr.mxu0 0.0
        %674 = vmatpush1.msra.mxu0 0.0
        %675 = vmatprep.subr.mxu0 0.0
        %676 = vmatpush1.msra.mxu0 0.0
        %677 = vmatprep.subr.mxu0 0.0
        %678 = vmatpush1.msra.mxu0 0.0
        %679 = vmatprep.subr.mxu0 0.0
        %680 = vmatpush1.msra.mxu0 0.0
        %681 = vmatprep.subr.mxu0 0.0
        %682 = vmatpush1.msra.mxu0 0.0
        %683 = vmatprep.subr.mxu0 0.0
        %684 = vmatpush1.msra.mxu0 0.0
        %685 = vmatprep.subr.mxu0 0.0
        %686 = vmatpush1.msra.mxu0 0.0
        %687 = vmatprep.mubr.f32.mxu0 0.0
        %v688 = vand.u32 %v612, 4294901760
        %v689 = vsub.f32 %v612, %v688
        %v690 = vand.u32 %v689, 4294901760
        %v691 = vsub.f32 %v689, %v690
        %v692 = vand.u32 %v691, 4294901760
        %693 = vmatmul.mubr.f32.gmra.mrb[0].mxu0 %v692
        %v694 = vpop.f32.mrb[0].mxu0
        %v695 = vadd.f32 0.0, %v694
        %v696 = vpop.f32.mrb[0].mxu0
        %v697 = vadd.f32 0.0, %v696
        %698 = vdwg.mxu0
        %v699 = vand.u32 %v617, 4294901760
        %v700 = vsub.f32 %v617, %v699
        %v701 = vand.u32 %v700, 4294901760
        %v702 = vsub.f32 %v700, %v701
        %v703 = vand.u32 %v702, 4294901760
        %704 = vmatprep.subr.mxu0 %v703
        %v705 = vand.u32 %v615, 4294901760
        %v706 = vsub.f32 %v615, %v705
        %v707 = vand.u32 %v706, 4294901760
        %v708 = vsub.f32 %v706, %v707
        %v709 = vand.u32 %v708, 4294901760
        %710 = vmatpush1.msra.mxu0 %v709
        %711 = vmatprep.subr.mxu0 0.0
        %712 = vmatpush1.msra.mxu0 0.0
        %713 = vmatprep.subr.mxu0 0.0
        %714 = vmatpush1.msra.mxu0 0.0
        %715 = vmatprep.subr.mxu0 0.0
        %716 = vmatpush1.msra.mxu0 0.0
        %717 = vmatprep.subr.mxu0 0.0
        %718 = vmatpush1.msra.mxu0 0.0
        %719 = vmatprep.subr.mxu0 0.0
        %720 = vmatpush1.msra.mxu0 0.0
        %721 = vmatprep.subr.mxu0 0.0
        %722 = vmatpush1.msra.mxu0 0.0
        %723 = vmatprep.subr.mxu0 0.0
        %724 = vmatpush1.msra.mxu0 0.0
        %725 = vmatprep.subr.mxu0 0.0
        %726 = vmatpush1.msra.mxu0 0.0
        %727 = vmatprep.subr.mxu0 0.0
        %728 = vmatpush1.msra.mxu0 0.0
        %729 = vmatprep.subr.mxu0 0.0
        %730 = vmatpush1.msra.mxu0 0.0
        %731 = vmatprep.subr.mxu0 0.0
        %732 = vmatpush1.msra.mxu0 0.0
        %733 = vmatprep.subr.mxu0 0.0
        %734 = vmatpush1.msra.mxu0 0.0
        %735 = vmatprep.subr.mxu0 0.0
        %736 = vmatpush1.msra.mxu0 0.0
        %737 = vmatprep.subr.mxu0 0.0
        %738 = vmatpush1.msra.mxu0 0.0
        %739 = vmatprep.subr.mxu0 0.0
        %740 = vmatpush1.msra.mxu0 0.0
        %741 = vmatprep.subr.mxu0 0.0
        %742 = vmatpush1.msra.mxu0 0.0
        %743 = vmatprep.subr.mxu0 0.0
        %744 = vmatpush1.msra.mxu0 0.0
        %745 = vmatprep.subr.mxu0 0.0
        %746 = vmatpush1.msra.mxu0 0.0
        %747 = vmatprep.subr.mxu0 0.0
        %748 = vmatpush1.msra.mxu0 0.0
        %749 = vmatprep.subr.mxu0 0.0
        %750 = vmatpush1.msra.mxu0 0.0
        %751 = vmatprep.subr.mxu0 0.0
        %752 = vmatpush1.msra.mxu0 0.0
        %753 = vmatprep.subr.mxu0 0.0
        %754 = vmatpush1.msra.mxu0 0.0
        %755 = vmatprep.subr.mxu0 0.0
        %756 = vmatpush1.msra.mxu0 0.0
        %757 = vmatprep.subr.mxu0 0.0
        %758 = vmatpush1.msra.mxu0 0.0
        %759 = vmatprep.subr.mxu0 0.0
        %760 = vmatpush1.msra.mxu0 0.0
        %761 = vmatprep.subr.mxu0 0.0
        %762 = vmatpush1.msra.mxu0 0.0
        %763 = vmatprep.subr.mxu0 0.0
        %764 = vmatpush1.msra.mxu0 0.0
        %765 = vmatprep.subr.mxu0 0.0
        %766 = vmatpush1.msra.mxu0 0.0
        %767 = vmatprep.subr.mxu0 0.0
        %768 = vmatpush1.msra.mxu0 0.0
        %769 = vmatprep.subr.mxu0 0.0
        %770 = vmatpush1.msra.mxu0 0.0
        %771 = vmatprep.subr.mxu0 0.0
        %772 = vmatpush1.msra.mxu0 0.0
        %773 = vmatprep.mubr.f32.mxu0 0.0
        %v774 = vand.u32 %v612, 4294901760
        %775 = vmatmul.mubr.f32.gmra.mrb[0].mxu0 %v774
        %v776 = vpop.f32.mrb[0].mxu0
        %v777 = vadd.f32 %v695, %v776
        %v778 = vpop.f32.mrb[0].mxu0
        %v779 = vadd.f32 %v697, %v778
        %780 = vdwg.mxu0
        %v781 = vand.u32 %v617, 4294901760
        %v782 = vsub.f32 %v617, %v781
        %783 = vmatprep.subr.mxu0 %v782
        %v784 = vand.u32 %v615, 4294901760
        %v785 = vsub.f32 %v615, %v784
        %786 = vmatpush1.msra.mxu0 %v785
        %787 = vmatprep.subr.mxu0 0.0
        %788 = vmatpush1.msra.mxu0 0.0
        %789 = vmatprep.subr.mxu0 0.0
        %790 = vmatpush1.msra.mxu0 0.0
        %791 = vmatprep.subr.mxu0 0.0
        %792 = vmatpush1.msra.mxu0 0.0
        %793 = vmatprep.subr.mxu0 0.0
        %794 = vmatpush1.msra.mxu0 0.0
        %795 = vmatprep.subr.mxu0 0.0
        %796 = vmatpush1.msra.mxu0 0.0
        %797 = vmatprep.subr.mxu0 0.0
        %798 = vmatpush1.msra.mxu0 0.0
        %799 = vmatprep.subr.mxu0 0.0
        %800 = vmatpush1.msra.mxu0 0.0
        %801 = vmatprep.subr.mxu0 0.0
        %802 = vmatpush1.msra.mxu0 0.0
        %803 = vmatprep.subr.mxu0 0.0
        %804 = vmatpush1.msra.mxu0 0.0
        %805 = vmatprep.subr.mxu0 0.0
        %806 = vmatpush1.msra.mxu0 0.0
        %807 = vmatprep.subr.mxu0 0.0
        %808 = vmatpush1.msra.mxu0 0.0
        %809 = vmatprep.subr.mxu0 0.0
        %810 = vmatpush1.msra.mxu0 0.0
        %811 = vmatprep.subr.mxu0 0.0
        %812 = vmatpush1.msra.mxu0 0.0
        %813 = vmatprep.subr.mxu0 0.0
        %814 = vmatpush1.msra.mxu0 0.0
        %815 = vmatprep.subr.mxu0 0.0
        %816 = vmatpush1.msra.mxu0 0.0
        %817 = vmatprep.subr.mxu0 0.0
        %818 = vmatpush1.msra.mxu0 0.0
        %819 = vmatprep.subr.mxu0 0.0
        %820 = vmatpush1.msra.mxu0 0.0
        %821 = vmatprep.subr.mxu0 0.0
        %822 = vmatpush1.msra.mxu0 0.0
        %823 = vmatprep.subr.mxu0 0.0
        %824 = vmatpush1.msra.mxu0 0.0
        %825 = vmatprep.subr.mxu0 0.0
        %826 = vmatpush1.msra.mxu0 0.0
        %827 = vmatprep.subr.mxu0 0.0
        %828 = vmatpush1.msra.mxu0 0.0
        %829 = vmatprep.subr.mxu0 0.0
        %830 = vmatpush1.msra.mxu0 0.0
        %831 = vmatprep.subr.mxu0 0.0
        %832 = vmatpush1.msra.mxu0 0.0
        %833 = vmatprep.subr.mxu0 0.0
        %834 = vmatpush1.msra.mxu0 0.0
        %835 = vmatprep.subr.mxu0 0.0
        %836 = vmatpush1.msra.mxu0 0.0
        %837 = vmatprep.subr.mxu0 0.0
        %838 = vmatpush1.msra.mxu0 0.0
        %839 = vmatprep.subr.mxu0 0.0
        %840 = vmatpush1.msra.mxu0 0.0
        %841 = vmatprep.subr.mxu0 0.0
        %842 = vmatpush1.msra.mxu0 0.0
        %843 = vmatprep.subr.mxu0 0.0
        %844 = vmatpush1.msra.mxu0 0.0
        %845 = vmatprep.subr.mxu0 0.0
        %846 = vmatpush1.msra.mxu0 0.0
        %847 = vmatprep.subr.mxu0 0.0
        %848 = vmatpush1.msra.mxu0 0.0
        %849 = vmatprep.mubr.f32.mxu0 0.0
        %v850 = vand.u32 %v612, 4294901760
        %v851 = vsub.f32 %v612, %v850
        %852 = vmatmul.mubr.f32.gmra.mrb[0].mxu0 %v851
        %v853 = vpop.f32.mrb[0].mxu0
        %v854 = vadd.f32 %v777, %v853
        %v855 = vpop.f32.mrb[0].mxu0
        %v856 = vadd.f32 %v779, %v855
        %857 = vdwg.mxu0
        %v858 = vand.u32 %v617, 4294901760
        %859 = vmatprep.subr.mxu0 %v858
        %v860 = vand.u32 %v615, 4294901760
        %861 = vmatpush1.msra.mxu0 %v860
        %862 = vmatprep.subr.mxu0 0.0
        %863 = vmatpush1.msra.mxu0 0.0
        %864 = vmatprep.subr.mxu0 0.0
        %865 = vmatpush1.msra.mxu0 0.0
        %866 = vmatprep.subr.mxu0 0.0
        %867 = vmatpush1.msra.mxu0 0.0
        %868 = vmatprep.subr.mxu0 0.0
        %869 = vmatpush1.msra.mxu0 0.0
        %870 = vmatprep.subr.mxu0 0.0
        %871 = vmatpush1.msra.mxu0 0.0
        %872 = vmatprep.subr.mxu0 0.0
        %873 = vmatpush1.msra.mxu0 0.0
        %874 = vmatprep.subr.mxu0 0.0
        %875 = vmatpush1.msra.mxu0 0.0
        %876 = vmatprep.subr.mxu0 0.0
        %877 = vmatpush1.msra.mxu0 0.0
        %878 = vmatprep.subr.mxu0 0.0
        %879 = vmatpush1.msra.mxu0 0.0
        %880 = vmatprep.subr.mxu0 0.0
        %881 = vmatpush1.msra.mxu0 0.0
        %882 = vmatprep.subr.mxu0 0.0
        %883 = vmatpush1.msra.mxu0 0.0
        %884 = vmatprep.subr.mxu0 0.0
        %885 = vmatpush1.msra.mxu0 0.0
        %886 = vmatprep.subr.mxu0 0.0
        %887 = vmatpush1.msra.mxu0 0.0
        %888 = vmatprep.subr.mxu0 0.0
        %889 = vmatpush1.msra.mxu0 0.0
        %890 = vmatprep.subr.mxu0 0.0
        %891 = vmatpush1.msra.mxu0 0.0
        %892 = vmatprep.subr.mxu0 0.0
        %893 = vmatpush1.msra.mxu0 0.0
        %894 = vmatprep.subr.mxu0 0.0
        %895 = vmatpush1.msra.mxu0 0.0
        %896 = vmatprep.subr.mxu0 0.0
        %897 = vmatpush1.msra.mxu0 0.0
        %898 = vmatprep.subr.mxu0 0.0
        %899 = vmatpush1.msra.mxu0 0.0
        %900 = vmatprep.subr.mxu0 0.0
        %901 = vmatpush1.msra.mxu0 0.0
        %902 = vmatprep.subr.mxu0 0.0
        %903 = vmatpush1.msra.mxu0 0.0
        %904 = vmatprep.subr.mxu0 0.0
        %905 = vmatpush1.msra.mxu0 0.0
        %906 = vmatprep.subr.mxu0 0.0
        %907 = vmatpush1.msra.mxu0 0.0
        %908 = vmatprep.subr.mxu0 0.0
        %909 = vmatpush1.msra.mxu0 0.0
        %910 = vmatprep.subr.mxu0 0.0
        %911 = vmatpush1.msra.mxu0 0.0
        %912 = vmatprep.subr.mxu0 0.0
        %913 = vmatpush1.msra.mxu0 0.0
        %914 = vmatprep.subr.mxu0 0.0
        %915 = vmatpush1.msra.mxu0 0.0
        %916 = vmatprep.subr.mxu0 0.0
        %917 = vmatpush1.msra.mxu0 0.0
        %918 = vmatprep.subr.mxu0 0.0
        %919 = vmatpush1.msra.mxu0 0.0
        %920 = vmatprep.subr.mxu0 0.0
        %921 = vmatpush1.msra.mxu0 0.0
        %922 = vmatprep.subr.mxu0 0.0
        %923 = vmatpush1.msra.mxu0 0.0
        %924 = vmatprep.mubr.f32.mxu0 0.0
        %v925 = vand.u32 %v612, 4294901760
        %v926 = vsub.f32 %v612, %v925
        %v927 = vand.u32 %v926, 4294901760
        %928 = vmatmul.mubr.f32.gmra.mrb[0].mxu0 %v927
        %v929 = vpop.f32.mrb[0].mxu0
        %v930 = vadd.f32 %v854, %v929
        %v931 = vpop.f32.mrb[0].mxu0
        %v932 = vadd.f32 %v856, %v931
        %933 = vdwg.mxu0
        %v934 = vand.u32 %v617, 4294901760
        %v935 = vsub.f32 %v617, %v934
        %v936 = vand.u32 %v935, 4294901760
        %937 = vmatprep.subr.mxu0 %v936
        %v938 = vand.u32 %v615, 4294901760
        %v939 = vsub.f32 %v615, %v938
        %v940 = vand.u32 %v939, 4294901760
        %941 = vmatpush1.msra.mxu0 %v940
        %942 = vmatprep.subr.mxu0 0.0
        %943 = vmatpush1.msra.mxu0 0.0
        %944 = vmatprep.subr.mxu0 0.0
        %945 = vmatpush1.msra.mxu0 0.0
        %946 = vmatprep.subr.mxu0 0.0
        %947 = vmatpush1.msra.mxu0 0.0
        %948 = vmatprep.subr.mxu0 0.0
        %949 = vmatpush1.msra.mxu0 0.0
        %950 = vmatprep.subr.mxu0 0.0
        %951 = vmatpush1.msra.mxu0 0.0
        %952 = vmatprep.subr.mxu0 0.0
        %953 = vmatpush1.msra.mxu0 0.0
        %954 = vmatprep.subr.mxu0 0.0
        %955 = vmatpush1.msra.mxu0 0.0
        %956 = vmatprep.subr.mxu0 0.0
        %957 = vmatpush1.msra.mxu0 0.0
        %958 = vmatprep.subr.mxu0 0.0
        %959 = vmatpush1.msra.mxu0 0.0
        %960 = vmatprep.subr.mxu0 0.0
        %961 = vmatpush1.msra.mxu0 0.0
        %962 = vmatprep.subr.mxu0 0.0
        %963 = vmatpush1.msra.mxu0 0.0
        %964 = vmatprep.subr.mxu0 0.0
        %965 = vmatpush1.msra.mxu0 0.0
        %966 = vmatprep.subr.mxu0 0.0
        %967 = vmatpush1.msra.mxu0 0.0
        %968 = vmatprep.subr.mxu0 0.0
        %969 = vmatpush1.msra.mxu0 0.0
        %970 = vmatprep.subr.mxu0 0.0
        %971 = vmatpush1.msra.mxu0 0.0
        %972 = vmatprep.subr.mxu0 0.0
        %973 = vmatpush1.msra.mxu0 0.0
        %974 = vmatprep.subr.mxu0 0.0
        %975 = vmatpush1.msra.mxu0 0.0
        %976 = vmatprep.subr.mxu0 0.0
        %977 = vmatpush1.msra.mxu0 0.0
        %978 = vmatprep.subr.mxu0 0.0
        %979 = vmatpush1.msra.mxu0 0.0
        %980 = vmatprep.subr.mxu0 0.0
        %981 = vmatpush1.msra.mxu0 0.0
        %982 = vmatprep.subr.mxu0 0.0
        %983 = vmatpush1.msra.mxu0 0.0
        %984 = vmatprep.subr.mxu0 0.0
        %985 = vmatpush1.msra.mxu0 0.0
        %986 = vmatprep.subr.mxu0 0.0
        %987 = vmatpush1.msra.mxu0 0.0
        %988 = vmatprep.subr.mxu0 0.0
        %989 = vmatpush1.msra.mxu0 0.0
        %990 = vmatprep.subr.mxu0 0.0
        %991 = vmatpush1.msra.mxu0 0.0
        %992 = vmatprep.subr.mxu0 0.0
        %993 = vmatpush1.msra.mxu0 0.0
        %994 = vmatprep.subr.mxu0 0.0
        %995 = vmatpush1.msra.mxu0 0.0
        %996 = vmatprep.subr.mxu0 0.0
        %997 = vmatpush1.msra.mxu0 0.0
        %998 = vmatprep.subr.mxu0 0.0
        %999 = vmatpush1.msra.mxu0 0.0
        %1000 = vmatprep.subr.mxu0 0.0
        %1001 = vmatpush1.msra.mxu0 0.0
        %1002 = vmatprep.subr.mxu0 0.0
        %1003 = vmatpush1.msra.mxu0 0.0
        %1004 = vmatprep.mubr.f32.mxu0 0.0
        %v1005 = vand.u32 %v612, 4294901760
        %1006 = vmatmul.mubr.f32.gmra.mrb[0].mxu0 %v1005
        %v1007 = vpop.f32.mrb[0].mxu0
        %v1008 = vadd.f32 %v930, %v1007
        %v1009 = vpop.f32.mrb[0].mxu0
        %v1010 = vadd.f32 %v932, %v1009
        %1011 = vdwg.mxu0
        %v1012 = vand.u32 %v617, 4294901760
        %1013 = vmatprep.subr.mxu0 %v1012
        %v1014 = vand.u32 %v615, 4294901760
        %1015 = vmatpush1.msra.mxu0 %v1014
        %1016 = vmatprep.subr.mxu0 0.0
        %1017 = vmatpush1.msra.mxu0 0.0
        %1018 = vmatprep.subr.mxu0 0.0
        %1019 = vmatpush1.msra.mxu0 0.0
        %1020 = vmatprep.subr.mxu0 0.0
        %1021 = vmatpush1.msra.mxu0 0.0
        %1022 = vmatprep.subr.mxu0 0.0
        %1023 = vmatpush1.msra.mxu0 0.0
        %1024 = vmatprep.subr.mxu0 0.0
        %1025 = vmatpush1.msra.mxu0 0.0
        %1026 = vmatprep.subr.mxu0 0.0
        %1027 = vmatpush1.msra.mxu0 0.0
        %1028 = vmatprep.subr.mxu0 0.0
        %1029 = vmatpush1.msra.mxu0 0.0
        %1030 = vmatprep.subr.mxu0 0.0
        %1031 = vmatpush1.msra.mxu0 0.0
        %1032 = vmatprep.subr.mxu0 0.0
        %1033 = vmatpush1.msra.mxu0 0.0
        %1034 = vmatprep.subr.mxu0 0.0
        %1035 = vmatpush1.msra.mxu0 0.0
        %1036 = vmatprep.subr.mxu0 0.0
        %1037 = vmatpush1.msra.mxu0 0.0
        %1038 = vmatprep.subr.mxu0 0.0
        %1039 = vmatpush1.msra.mxu0 0.0
        %1040 = vmatprep.subr.mxu0 0.0
        %1041 = vmatpush1.msra.mxu0 0.0
        %1042 = vmatprep.subr.mxu0 0.0
        %1043 = vmatpush1.msra.mxu0 0.0
        %1044 = vmatprep.subr.mxu0 0.0
        %1045 = vmatpush1.msra.mxu0 0.0
        %1046 = vmatprep.subr.mxu0 0.0
        %1047 = vmatpush1.msra.mxu0 0.0
        %1048 = vmatprep.subr.mxu0 0.0
        %1049 = vmatpush1.msra.mxu0 0.0
        %1050 = vmatprep.subr.mxu0 0.0
        %1051 = vmatpush1.msra.mxu0 0.0
        %1052 = vmatprep.subr.mxu0 0.0
        %1053 = vmatpush1.msra.mxu0 0.0
        %1054 = vmatprep.subr.mxu0 0.0
        %1055 = vmatpush1.msra.mxu0 0.0
        %1056 = vmatprep.subr.mxu0 0.0
        %1057 = vmatpush1.msra.mxu0 0.0
        %1058 = vmatprep.subr.mxu0 0.0
        %1059 = vmatpush1.msra.mxu0 0.0
        %1060 = vmatprep.subr.mxu0 0.0
        %1061 = vmatpush1.msra.mxu0 0.0
        %1062 = vmatprep.subr.mxu0 0.0
        %1063 = vmatpush1.msra.mxu0 0.0
        %1064 = vmatprep.subr.mxu0 0.0
        %1065 = vmatpush1.msra.mxu0 0.0
        %1066 = vmatprep.subr.mxu0 0.0
        %1067 = vmatpush1.msra.mxu0 0.0
        %1068 = vmatprep.subr.mxu0 0.0
        %1069 = vmatpush1.msra.mxu0 0.0
        %1070 = vmatprep.subr.mxu0 0.0
        %1071 = vmatpush1.msra.mxu0 0.0
        %1072 = vmatprep.subr.mxu0 0.0
        %1073 = vmatpush1.msra.mxu0 0.0
        %1074 = vmatprep.subr.mxu0 0.0
        %1075 = vmatpush1.msra.mxu0 0.0
        %1076 = vmatprep.subr.mxu0 0.0
        %1077 = vmatpush1.msra.mxu0 0.0
        %1078 = vmatprep.mubr.f32.mxu0 0.0
        %v1079 = vand.u32 %v612, 4294901760
        %1080 = vmatmul.mubr.f32.gmra.mrb[0].mxu0 %v1079
        %v1081 = vpop.f32.mrb[0].mxu0
        %v1082 = vadd.f32 %v1008, %v1081
        %v1083 = vpop.f32.mrb[0].mxu0
        %v1084 = vadd.f32 %v1010, %v1083
        %1085 = vdwg.mxu0
        %1086 = vmatprep.subr.mxu0 0.0
        %v1087 = vand.u32 %v619, 4294901760
        %1088 = vmatpush1.msra.mxu0 %v1087
        %1089 = vmatprep.subr.mxu0 0.0
        %1090 = vmatpush1.msra.mxu0 0.0
        %1091 = vmatprep.subr.mxu0 0.0
        %1092 = vmatpush1.msra.mxu0 0.0
        %1093 = vmatprep.subr.mxu0 0.0
        %1094 = vmatpush1.msra.mxu0 0.0
        %1095 = vmatprep.subr.mxu0 0.0
        %1096 = vmatpush1.msra.mxu0 0.0
        %1097 = vmatprep.subr.mxu0 0.0
        %1098 = vmatpush1.msra.mxu0 0.0
        %1099 = vmatprep.subr.mxu0 0.0
        %1100 = vmatpush1.msra.mxu0 0.0
        %1101 = vmatprep.subr.mxu0 0.0
        %1102 = vmatpush1.msra.mxu0 0.0
        %1103 = vmatprep.subr.mxu0 0.0
        %1104 = vmatpush1.msra.mxu0 0.0
        %1105 = vmatprep.subr.mxu0 0.0
        %1106 = vmatpush1.msra.mxu0 0.0
        %1107 = vmatprep.subr.mxu0 0.0
        %1108 = vmatpush1.msra.mxu0 0.0
        %1109 = vmatprep.subr.mxu0 0.0
        %1110 = vmatpush1.msra.mxu0 0.0
        %1111 = vmatprep.subr.mxu0 0.0
        %1112 = vmatpush1.msra.mxu0 0.0
        %1113 = vmatprep.subr.mxu0 0.0
        %1114 = vmatpush1.msra.mxu0 0.0
        %1115 = vmatprep.subr.mxu0 0.0
        %1116 = vmatpush1.msra.mxu0 0.0
        %1117 = vmatprep.subr.mxu0 0.0
        %1118 = vmatpush1.msra.mxu0 0.0
        %1119 = vmatprep.subr.mxu0 0.0
        %1120 = vmatpush1.msra.mxu0 0.0
        %1121 = vmatprep.subr.mxu0 0.0
        %1122 = vmatpush1.msra.mxu0 0.0
        %1123 = vmatprep.subr.mxu0 0.0
        %1124 = vmatpush1.msra.mxu0 0.0
        %1125 = vmatprep.subr.mxu0 0.0
        %1126 = vmatpush1.msra.mxu0 0.0
        %1127 = vmatprep.subr.mxu0 0.0
        %1128 = vmatpush1.msra.mxu0 0.0
        %1129 = vmatprep.subr.mxu0 0.0
        %1130 = vmatpush1.msra.mxu0 0.0
        %1131 = vmatprep.subr.mxu0 0.0
        %1132 = vmatpush1.msra.mxu0 0.0
        %1133 = vmatprep.subr.mxu0 0.0
        %1134 = vmatpush1.msra.mxu0 0.0
        %1135 = vmatprep.subr.mxu0 0.0
        %1136 = vmatpush1.msra.mxu0 0.0
        %1137 = vmatprep.subr.mxu0 0.0
        %1138 = vmatpush1.msra.mxu0 0.0
        %1139 = vmatprep.subr.mxu0 0.0
        %1140 = vmatpush1.msra.mxu0 0.0
        %1141 = vmatprep.subr.mxu0 0.0
        %1142 = vmatpush1.msra.mxu0 0.0
        %1143 = vmatprep.subr.mxu0 0.0
        %1144 = vmatpush1.msra.mxu0 0.0
        %1145 = vmatprep.subr.mxu0 0.0
        %1146 = vmatpush1.msra.mxu0 0.0
        %1147 = vmatprep.subr.mxu0 0.0
        %1148 = vmatpush1.msra.mxu0 0.0
        %1149 = vmatprep.subr.mxu0 0.0
        %1150 = vmatpush1.msra.mxu0 0.0
        %1151 = vmatprep.mubr.f32.mxu0 0.0
        %v1152 = vand.u32 %v612, 4294901760
        %v1153 = vsub.f32 %v612, %v1152
        %v1154 = vand.u32 %v1153, 4294901760
        %v1155 = vsub.f32 %v1153, %v1154
        %v1156 = vand.u32 %v1155, 4294901760
        %1157 = vmatmul.mubr.f32.gmra.mrb[0].mxu0 %v1156
        %v1158 = vpop.f32.mrb[0].mxu0
        %v1159 = vadd.f32 0.0, %v1158
        %v1160 = vpop.f32.mrb[0].mxu0
        %1161 = vdwg.mxu0
        %1162 = vmatprep.subr.mxu0 0.0
        %v1163 = vand.u32 %v619, 4294901760
        %v1164 = vsub.f32 %v619, %v1163
        %v1165 = vand.u32 %v1164, 4294901760
        %v1166 = vsub.f32 %v1164, %v1165
        %v1167 = vand.u32 %v1166, 4294901760
        %1168 = vmatpush1.msra.mxu0 %v1167
        %1169 = vmatprep.subr.mxu0 0.0
        %1170 = vmatpush1.msra.mxu0 0.0
        %1171 = vmatprep.subr.mxu0 0.0
        %1172 = vmatpush1.msra.mxu0 0.0
        %1173 = vmatprep.subr.mxu0 0.0
        %1174 = vmatpush1.msra.mxu0 0.0
        %1175 = vmatprep.subr.mxu0 0.0
        %1176 = vmatpush1.msra.mxu0 0.0
        %1177 = vmatprep.subr.mxu0 0.0
        %1178 = vmatpush1.msra.mxu0 0.0
        %1179 = vmatprep.subr.mxu0 0.0
        %1180 = vmatpush1.msra.mxu0 0.0
        %1181 = vmatprep.subr.mxu0 0.0
        %1182 = vmatpush1.msra.mxu0 0.0
        %1183 = vmatprep.subr.mxu0 0.0
        %1184 = vmatpush1.msra.mxu0 0.0
        %1185 = vmatprep.subr.mxu0 0.0
        %1186 = vmatpush1.msra.mxu0 0.0
        %1187 = vmatprep.subr.mxu0 0.0
        %1188 = vmatpush1.msra.mxu0 0.0
        %1189 = vmatprep.subr.mxu0 0.0
        %1190 = vmatpush1.msra.mxu0 0.0
        %1191 = vmatprep.subr.mxu0 0.0
        %1192 = vmatpush1.msra.mxu0 0.0
        %1193 = vmatprep.subr.mxu0 0.0
        %1194 = vmatpush1.msra.mxu0 0.0
        %1195 = vmatprep.subr.mxu0 0.0
        %1196 = vmatpush1.msra.mxu0 0.0
        %1197 = vmatprep.subr.mxu0 0.0
        %1198 = vmatpush1.msra.mxu0 0.0
        %1199 = vmatprep.subr.mxu0 0.0
        %1200 = vmatpush1.msra.mxu0 0.0
        %1201 = vmatprep.subr.mxu0 0.0
        %1202 = vmatpush1.msra.mxu0 0.0
        %1203 = vmatprep.subr.mxu0 0.0
        %1204 = vmatpush1.msra.mxu0 0.0
        %1205 = vmatprep.subr.mxu0 0.0
        %1206 = vmatpush1.msra.mxu0 0.0
        %1207 = vmatprep.subr.mxu0 0.0
        %1208 = vmatpush1.msra.mxu0 0.0
        %1209 = vmatprep.subr.mxu0 0.0
        %1210 = vmatpush1.msra.mxu0 0.0
        %1211 = vmatprep.subr.mxu0 0.0
        %1212 = vmatpush1.msra.mxu0 0.0
        %1213 = vmatprep.subr.mxu0 0.0
        %1214 = vmatpush1.msra.mxu0 0.0
        %1215 = vmatprep.subr.mxu0 0.0
        %1216 = vmatpush1.msra.mxu0 0.0
        %1217 = vmatprep.subr.mxu0 0.0
        %1218 = vmatpush1.msra.mxu0 0.0
        %1219 = vmatprep.subr.mxu0 0.0
        %1220 = vmatpush1.msra.mxu0 0.0
        %1221 = vmatprep.subr.mxu0 0.0
        %1222 = vmatpush1.msra.mxu0 0.0
        %1223 = vmatprep.subr.mxu0 0.0
        %1224 = vmatpush1.msra.mxu0 0.0
        %1225 = vmatprep.subr.mxu0 0.0
        %1226 = vmatpush1.msra.mxu0 0.0
        %1227 = vmatprep.subr.mxu0 0.0
        %1228 = vmatpush1.msra.mxu0 0.0
        %1229 = vmatprep.subr.mxu0 0.0
        %1230 = vmatpush1.msra.mxu0 0.0
        %1231 = vmatprep.mubr.f32.mxu0 0.0
        %v1232 = vand.u32 %v612, 4294901760
        %1233 = vmatmul.mubr.f32.gmra.mrb[0].mxu0 %v1232
        %v1234 = vpop.f32.mrb[0].mxu0
        %v1235 = vadd.f32 %v1159, %v1234
        %v1236 = vpop.f32.mrb[0].mxu0
        %1237 = vdwg.mxu0
        %1238 = vmatprep.subr.mxu0 0.0
        %v1239 = vand.u32 %v619, 4294901760
        %v1240 = vsub.f32 %v619, %v1239
        %1241 = vmatpush1.msra.mxu0 %v1240
        %1242 = vmatprep.subr.mxu0 0.0
        %1243 = vmatpush1.msra.mxu0 0.0
        %1244 = vmatprep.subr.mxu0 0.0
        %1245 = vmatpush1.msra.mxu0 0.0
        %1246 = vmatprep.subr.mxu0 0.0
        %1247 = vmatpush1.msra.mxu0 0.0
        %1248 = vmatprep.subr.mxu0 0.0
        %1249 = vmatpush1.msra.mxu0 0.0
        %1250 = vmatprep.subr.mxu0 0.0
        %1251 = vmatpush1.msra.mxu0 0.0
        %1252 = vmatprep.subr.mxu0 0.0
        %1253 = vmatpush1.msra.mxu0 0.0
        %1254 = vmatprep.subr.mxu0 0.0
        %1255 = vmatpush1.msra.mxu0 0.0
        %1256 = vmatprep.subr.mxu0 0.0
        %1257 = vmatpush1.msra.mxu0 0.0
        %1258 = vmatprep.subr.mxu0 0.0
        %1259 = vmatpush1.msra.mxu0 0.0
        %1260 = vmatprep.subr.mxu0 0.0
        %1261 = vmatpush1.msra.mxu0 0.0
        %1262 = vmatprep.subr.mxu0 0.0
        %1263 = vmatpush1.msra.mxu0 0.0
        %1264 = vmatprep.subr.mxu0 0.0
        %1265 = vmatpush1.msra.mxu0 0.0
        %1266 = vmatprep.subr.mxu0 0.0
        %1267 = vmatpush1.msra.mxu0 0.0
        %1268 = vmatprep.subr.mxu0 0.0
        %1269 = vmatpush1.msra.mxu0 0.0
        %1270 = vmatprep.subr.mxu0 0.0
        %1271 = vmatpush1.msra.mxu0 0.0
        %1272 = vmatprep.subr.mxu0 0.0
        %1273 = vmatpush1.msra.mxu0 0.0
        %1274 = vmatprep.subr.mxu0 0.0
        %1275 = vmatpush1.msra.mxu0 0.0
        %1276 = vmatprep.subr.mxu0 0.0
        %1277 = vmatpush1.msra.mxu0 0.0
        %1278 = vmatprep.subr.mxu0 0.0
        %1279 = vmatpush1.msra.mxu0 0.0
        %1280 = vmatprep.subr.mxu0 0.0
        %1281 = vmatpush1.msra.mxu0 0.0
        %1282 = vmatprep.subr.mxu0 0.0
        %1283 = vmatpush1.msra.mxu0 0.0
        %1284 = vmatprep.subr.mxu0 0.0
        %1285 = vmatpush1.msra.mxu0 0.0
        %1286 = vmatprep.subr.mxu0 0.0
        %1287 = vmatpush1.msra.mxu0 0.0
        %1288 = vmatprep.subr.mxu0 0.0
        %1289 = vmatpush1.msra.mxu0 0.0
        %1290 = vmatprep.subr.mxu0 0.0
        %1291 = vmatpush1.msra.mxu0 0.0
        %1292 = vmatprep.subr.mxu0 0.0
        %1293 = vmatpush1.msra.mxu0 0.0
        %1294 = vmatprep.subr.mxu0 0.0
        %1295 = vmatpush1.msra.mxu0 0.0
        %1296 = vmatprep.subr.mxu0 0.0
        %1297 = vmatpush1.msra.mxu0 0.0
        %1298 = vmatprep.subr.mxu0 0.0
        %1299 = vmatpush1.msra.mxu0 0.0
        %1300 = vmatprep.subr.mxu0 0.0
        %1301 = vmatpush1.msra.mxu0 0.0
        %1302 = vmatprep.subr.mxu0 0.0
        %1303 = vmatpush1.msra.mxu0 0.0
        %1304 = vmatprep.mubr.f32.mxu0 0.0
        %v1305 = vand.u32 %v612, 4294901760
        %v1306 = vsub.f32 %v612, %v1305
        %1307 = vmatmul.mubr.f32.gmra.mrb[0].mxu0 %v1306
        %v1308 = vpop.f32.mrb[0].mxu0
        %v1309 = vadd.f32 %v1235, %v1308
        %v1310 = vpop.f32.mrb[0].mxu0
        %1311 = vdwg.mxu0
        %1312 = vmatprep.subr.mxu0 0.0
        %v1313 = vand.u32 %v619, 4294901760
        %1314 = vmatpush1.msra.mxu0 %v1313
        %1315 = vmatprep.subr.mxu0 0.0
        %1316 = vmatpush1.msra.mxu0 0.0
        %1317 = vmatprep.subr.mxu0 0.0
        %1318 = vmatpush1.msra.mxu0 0.0
        %1319 = vmatprep.subr.mxu0 0.0
        %1320 = vmatpush1.msra.mxu0 0.0
        %1321 = vmatprep.subr.mxu0 0.0
        %1322 = vmatpush1.msra.mxu0 0.0
        %1323 = vmatprep.subr.mxu0 0.0
        %1324 = vmatpush1.msra.mxu0 0.0
        %1325 = vmatprep.subr.mxu0 0.0
        %1326 = vmatpush1.msra.mxu0 0.0
        %1327 = vmatprep.subr.mxu0 0.0
        %1328 = vmatpush1.msra.mxu0 0.0
        %1329 = vmatprep.subr.mxu0 0.0
        %1330 = vmatpush1.msra.mxu0 0.0
        %1331 = vmatprep.subr.mxu0 0.0
        %1332 = vmatpush1.msra.mxu0 0.0
        %1333 = vmatprep.subr.mxu0 0.0
        %1334 = vmatpush1.msra.mxu0 0.0
        %1335 = vmatprep.subr.mxu0 0.0
        %1336 = vmatpush1.msra.mxu0 0.0
        %1337 = vmatprep.subr.mxu0 0.0
        %1338 = vmatpush1.msra.mxu0 0.0
        %1339 = vmatprep.subr.mxu0 0.0
        %1340 = vmatpush1.msra.mxu0 0.0
        %1341 = vmatprep.subr.mxu0 0.0
        %1342 = vmatpush1.msra.mxu0 0.0
        %1343 = vmatprep.subr.mxu0 0.0
        %1344 = vmatpush1.msra.mxu0 0.0
        %1345 = vmatprep.subr.mxu0 0.0
        %1346 = vmatpush1.msra.mxu0 0.0
        %1347 = vmatprep.subr.mxu0 0.0
        %1348 = vmatpush1.msra.mxu0 0.0
        %1349 = vmatprep.subr.mxu0 0.0
        %1350 = vmatpush1.msra.mxu0 0.0
        %1351 = vmatprep.subr.mxu0 0.0
        %1352 = vmatpush1.msra.mxu0 0.0
        %1353 = vmatprep.subr.mxu0 0.0
        %1354 = vmatpush1.msra.mxu0 0.0
        %1355 = vmatprep.subr.mxu0 0.0
        %1356 = vmatpush1.msra.mxu0 0.0
        %1357 = vmatprep.subr.mxu0 0.0
        %1358 = vmatpush1.msra.mxu0 0.0
        %1359 = vmatprep.subr.mxu0 0.0
        %1360 = vmatpush1.msra.mxu0 0.0
        %1361 = vmatprep.subr.mxu0 0.0
        %1362 = vmatpush1.msra.mxu0 0.0
        %1363 = vmatprep.subr.mxu0 0.0
        %1364 = vmatpush1.msra.mxu0 0.0
        %1365 = vmatprep.subr.mxu0 0.0
        %1366 = vmatpush1.msra.mxu0 0.0
        %1367 = vmatprep.subr.mxu0 0.0
        %1368 = vmatpush1.msra.mxu0 0.0
        %1369 = vmatprep.subr.mxu0 0.0
        %1370 = vmatpush1.msra.mxu0 0.0
        %1371 = vmatprep.subr.mxu0 0.0
        %1372 = vmatpush1.msra.mxu0 0.0
        %1373 = vmatprep.subr.mxu0 0.0
        %1374 = vmatpush1.msra.mxu0 0.0
        %1375 = vmatprep.subr.mxu0 0.0
        %1376 = vmatpush1.msra.mxu0 0.0
        %1377 = vmatprep.mubr.f32.mxu0 0.0
        %v1378 = vand.u32 %v612, 4294901760
        %v1379 = vsub.f32 %v612, %v1378
        %v1380 = vand.u32 %v1379, 4294901760
        %1381 = vmatmul.mubr.f32.gmra.mrb[0].mxu0 %v1380
        %v1382 = vpop.f32.mrb[0].mxu0
        %v1383 = vadd.f32 %v1309, %v1382
        %v1384 = vpop.f32.mrb[0].mxu0
        %1385 = vdwg.mxu0
        %1386 = vmatprep.subr.mxu0 0.0
        %v1387 = vand.u32 %v619, 4294901760
        %v1388 = vsub.f32 %v619, %v1387
        %v1389 = vand.u32 %v1388, 4294901760
        %1390 = vmatpush1.msra.mxu0 %v1389
        %1391 = vmatprep.subr.mxu0 0.0
        %1392 = vmatpush1.msra.mxu0 0.0
        %1393 = vmatprep.subr.mxu0 0.0
        %1394 = vmatpush1.msra.mxu0 0.0
        %1395 = vmatprep.subr.mxu0 0.0
        %1396 = vmatpush1.msra.mxu0 0.0
        %1397 = vmatprep.subr.mxu0 0.0
        %1398 = vmatpush1.msra.mxu0 0.0
        %1399 = vmatprep.subr.mxu0 0.0
        %1400 = vmatpush1.msra.mxu0 0.0
        %1401 = vmatprep.subr.mxu0 0.0
        %1402 = vmatpush1.msra.mxu0 0.0
        %1403 = vmatprep.subr.mxu0 0.0
        %1404 = vmatpush1.msra.mxu0 0.0
        %1405 = vmatprep.subr.mxu0 0.0
        %1406 = vmatpush1.msra.mxu0 0.0
        %1407 = vmatprep.subr.mxu0 0.0
        %1408 = vmatpush1.msra.mxu0 0.0
        %1409 = vmatprep.subr.mxu0 0.0
        %1410 = vmatpush1.msra.mxu0 0.0
        %1411 = vmatprep.subr.mxu0 0.0
        %1412 = vmatpush1.msra.mxu0 0.0
        %1413 = vmatprep.subr.mxu0 0.0
        %1414 = vmatpush1.msra.mxu0 0.0
        %1415 = vmatprep.subr.mxu0 0.0
        %1416 = vmatpush1.msra.mxu0 0.0
        %1417 = vmatprep.subr.mxu0 0.0
        %1418 = vmatpush1.msra.mxu0 0.0
        %1419 = vmatprep.subr.mxu0 0.0
        %1420 = vmatpush1.msra.mxu0 0.0
        %1421 = vmatprep.subr.mxu0 0.0
        %1422 = vmatpush1.msra.mxu0 0.0
        %1423 = vmatprep.subr.mxu0 0.0
        %1424 = vmatpush1.msra.mxu0 0.0
        %1425 = vmatprep.subr.mxu0 0.0
        %1426 = vmatpush1.msra.mxu0 0.0
        %1427 = vmatprep.subr.mxu0 0.0
        %1428 = vmatpush1.msra.mxu0 0.0
        %1429 = vmatprep.subr.mxu0 0.0
        %1430 = vmatpush1.msra.mxu0 0.0
        %1431 = vmatprep.subr.mxu0 0.0
        %1432 = vmatpush1.msra.mxu0 0.0
        %1433 = vmatprep.subr.mxu0 0.0
        %1434 = vmatpush1.msra.mxu0 0.0
        %1435 = vmatprep.subr.mxu0 0.0
        %1436 = vmatpush1.msra.mxu0 0.0
        %1437 = vmatprep.subr.mxu0 0.0
        %1438 = vmatpush1.msra.mxu0 0.0
        %1439 = vmatprep.subr.mxu0 0.0
        %1440 = vmatpush1.msra.mxu0 0.0
        %1441 = vmatprep.subr.mxu0 0.0
        %1442 = vmatpush1.msra.mxu0 0.0
        %1443 = vmatprep.subr.mxu0 0.0
        %1444 = vmatpush1.msra.mxu0 0.0
        %1445 = vmatprep.subr.mxu0 0.0
        %1446 = vmatpush1.msra.mxu0 0.0
        %1447 = vmatprep.subr.mxu0 0.0
        %1448 = vmatpush1.msra.mxu0 0.0
        %1449 = vmatprep.subr.mxu0 0.0
        %1450 = vmatpush1.msra.mxu0 0.0
        %1451 = vmatprep.subr.mxu0 0.0
        %1452 = vmatpush1.msra.mxu0 0.0
        %1453 = vmatprep.mubr.f32.mxu0 0.0
        %v1454 = vand.u32 %v612, 4294901760
        %1455 = vmatmul.mubr.f32.gmra.mrb[0].mxu0 %v1454
        %v1456 = vpop.f32.mrb[0].mxu0
        %v1457 = vadd.f32 %v1383, %v1456
        %v1458 = vpop.f32.mrb[0].mxu0
        %1459 = vdwg.mxu0
        %1460 = vmatprep.subr.mxu0 0.0
        %v1461 = vand.u32 %v619, 4294901760
        %1462 = vmatpush1.msra.mxu0 %v1461
        %1463 = vmatprep.subr.mxu0 0.0
        %1464 = vmatpush1.msra.mxu0 0.0
        %1465 = vmatprep.subr.mxu0 0.0
        %1466 = vmatpush1.msra.mxu0 0.0
        %1467 = vmatprep.subr.mxu0 0.0
        %1468 = vmatpush1.msra.mxu0 0.0
        %1469 = vmatprep.subr.mxu0 0.0
        %1470 = vmatpush1.msra.mxu0 0.0
        %1471 = vmatprep.subr.mxu0 0.0
        %1472 = vmatpush1.msra.mxu0 0.0
        %1473 = vmatprep.subr.mxu0 0.0
        %1474 = vmatpush1.msra.mxu0 0.0
        %1475 = vmatprep.subr.mxu0 0.0
        %1476 = vmatpush1.msra.mxu0 0.0
        %1477 = vmatprep.subr.mxu0 0.0
        %1478 = vmatpush1.msra.mxu0 0.0
        %1479 = vmatprep.subr.mxu0 0.0
        %1480 = vmatpush1.msra.mxu0 0.0
        %1481 = vmatprep.subr.mxu0 0.0
        %1482 = vmatpush1.msra.mxu0 0.0
        %1483 = vmatprep.subr.mxu0 0.0
        %1484 = vmatpush1.msra.mxu0 0.0
        %1485 = vmatprep.subr.mxu0 0.0
        %1486 = vmatpush1.msra.mxu0 0.0
        %1487 = vmatprep.subr.mxu0 0.0
        %1488 = vmatpush1.msra.mxu0 0.0
        %1489 = vmatprep.subr.mxu0 0.0
        %1490 = vmatpush1.msra.mxu0 0.0
        %1491 = vmatprep.subr.mxu0 0.0
        %1492 = vmatpush1.msra.mxu0 0.0
        %1493 = vmatprep.subr.mxu0 0.0
        %1494 = vmatpush1.msra.mxu0 0.0
        %1495 = vmatprep.subr.mxu0 0.0
        %1496 = vmatpush1.msra.mxu0 0.0
        %1497 = vmatprep.subr.mxu0 0.0
        %1498 = vmatpush1.msra.mxu0 0.0
        %1499 = vmatprep.subr.mxu0 0.0
        %1500 = vmatpush1.msra.mxu0 0.0
        %1501 = vmatprep.subr.mxu0 0.0
        %1502 = vmatpush1.msra.mxu0 0.0
        %1503 = vmatprep.subr.mxu0 0.0
        %1504 = vmatpush1.msra.mxu0 0.0
        %1505 = vmatprep.subr.mxu0 0.0
        %1506 = vmatpush1.msra.mxu0 0.0
        %1507 = vmatprep.subr.mxu0 0.0
        %1508 = vmatpush1.msra.mxu0 0.0
        %1509 = vmatprep.subr.mxu0 0.0
        %1510 = vmatpush1.msra.mxu0 0.0
        %1511 = vmatprep.subr.mxu0 0.0
        %1512 = vmatpush1.msra.mxu0 0.0
        %1513 = vmatprep.subr.mxu0 0.0
        %1514 = vmatpush1.msra.mxu0 0.0
        %1515 = vmatprep.subr.mxu0 0.0
        %1516 = vmatpush1.msra.mxu0 0.0
        %1517 = vmatprep.subr.mxu0 0.0
        %1518 = vmatpush1.msra.mxu0 0.0
        %1519 = vmatprep.subr.mxu0 0.0
        %1520 = vmatpush1.msra.mxu0 0.0
        %1521 = vmatprep.subr.mxu0 0.0
        %1522 = vmatpush1.msra.mxu0 0.0
        %1523 = vmatprep.subr.mxu0 0.0
        %1524 = vmatpush1.msra.mxu0 0.0
        %1525 = vmatprep.mubr.f32.mxu0 0.0
        %v1526 = vand.u32 %v612, 4294901760
        %1527 = vmatmul.mubr.f32.gmra.mrb[0].mxu0 %v1526
        %v1528 = vpop.f32.mrb[0].mxu0
        %v1529 = vadd.f32 %v1457, %v1528
        %v1530 = vpop.f32.mrb[0].mxu0
        %1531 = vdwg.mxu0
        %v1535 = vcombine.low %v1082, %v1084
        %1537 = vst [vmem:[%s582] sm:$0xff] %v1535
        %1538 = vst [vmem:[%s582 + $0x8] sm:$0xf] %v1529
        %v1539 = vcombine.high %v1082, %v1084
        %v1540 = vcombine.high %v1529, %v1529
        %1543 = vst [vmem:[%s588] sm:$0xff] %v1539
        %1544 = vst [vmem:[%s588 + $0x8] sm:$0xf] %v1540
        %s1545 = scalar_lea.vmem %s565, 12 [#allocation2]
        %v1546 = vld [vmem:[%s1545] sm:$0xff]
        %v1547 = vld [vmem:[%s1545 + $0x8] sm:$0xf]
        %v1550 = vcombine.high %v1546, %v1546
        %v1551 = vsel %vm614, %v1546, 0
        %v1553 = vsel %vm614, %v1550, 0
        %v1555 = vsel %vm614, %v1547, 0
        %v1557 = vand.u32 %v1553, 4294901760
        %1558 = vmatprep.subr.mxu0 %v1557
        %v1559 = vand.u32 %v1551, 4294901760
        %1560 = vmatpush1.msra.mxu0 %v1559
        %1561 = vmatprep.subr.mxu0 0.0
        %1562 = vmatpush1.msra.mxu0 0.0
        %1563 = vmatprep.subr.mxu0 0.0
        %1564 = vmatpush1.msra.mxu0 0.0
        %1565 = vmatprep.subr.mxu0 0.0
        %1566 = vmatpush1.msra.mxu0 0.0
        %1567 = vmatprep.subr.mxu0 0.0
        %1568 = vmatpush1.msra.mxu0 0.0
        %1569 = vmatprep.subr.mxu0 0.0
        %1570 = vmatpush1.msra.mxu0 0.0
        %1571 = vmatprep.subr.mxu0 0.0
        %1572 = vmatpush1.msra.mxu0 0.0
        %1573 = vmatprep.subr.mxu0 0.0
        %1574 = vmatpush1.msra.mxu0 0.0
        %1575 = vmatprep.subr.mxu0 0.0
        %1576 = vmatpush1.msra.mxu0 0.0
        %1577 = vmatprep.subr.mxu0 0.0
        %1578 = vmatpush1.msra.mxu0 0.0
        %1579 = vmatprep.subr.mxu0 0.0
        %1580 = vmatpush1.msra.mxu0 0.0
        %1581 = vmatprep.subr.mxu0 0.0
        %1582 = vmatpush1.msra.mxu0 0.0
        %1583 = vmatprep.subr.mxu0 0.0
        %1584 = vmatpush1.msra.mxu0 0.0
        %1585 = vmatprep.subr.mxu0 0.0
        %1586 = vmatpush1.msra.mxu0 0.0
        %1587 = vmatprep.subr.mxu0 0.0
        %1588 = vmatpush1.msra.mxu0 0.0
        %1589 = vmatprep.subr.mxu0 0.0
        %1590 = vmatpush1.msra.mxu0 0.0
        %1591 = vmatprep.subr.mxu0 0.0
        %1592 = vmatpush1.msra.mxu0 0.0
        %1593 = vmatprep.subr.mxu0 0.0
        %1594 = vmatpush1.msra.mxu0 0.0
        %1595 = vmatprep.subr.mxu0 0.0
        %1596 = vmatpush1.msra.mxu0 0.0
        %1597 = vmatprep.subr.mxu0 0.0
        %1598 = vmatpush1.msra.mxu0 0.0
        %1599 = vmatprep.subr.mxu0 0.0
        %1600 = vmatpush1.msra.mxu0 0.0
        %1601 = vmatprep.subr.mxu0 0.0
        %1602 = vmatpush1.msra.mxu0 0.0
        %1603 = vmatprep.subr.mxu0 0.0
        %1604 = vmatpush1.msra.mxu0 0.0
        %1605 = vmatprep.subr.mxu0 0.0
        %1606 = vmatpush1.msra.mxu0 0.0
        %1607 = vmatprep.subr.mxu0 0.0
        %1608 = vmatpush1.msra.mxu0 0.0
        %1609 = vmatprep.subr.mxu0 0.0
        %1610 = vmatpush1.msra.mxu0 0.0
        %1611 = vmatprep.subr.mxu0 0.0
        %1612 = vmatpush1.msra.mxu0 0.0
        %1613 = vmatprep.subr.mxu0 0.0
        %1614 = vmatpush1.msra.mxu0 0.0
        %1615 = vmatprep.subr.mxu0 0.0
        %1616 = vmatpush1.msra.mxu0 0.0
        %1617 = vmatprep.subr.mxu0 0.0
        %1618 = vmatpush1.msra.mxu0 0.0
        %1619 = vmatprep.subr.mxu0 0.0
        %1620 = vmatpush1.msra.mxu0 0.0
        %1621 = vmatprep.subr.mxu0 0.0
        %1622 = vmatpush1.msra.mxu0 0.0
        %1623 = vmatprep.mubr.f32.mxu0 0.0
        %v1624 = vand.u32 %v612, 4294901760
        %v1625 = vsub.f32 %v612, %v1624
        %v1626 = vand.u32 %v1625, 4294901760
        %v1627 = vsub.f32 %v1625, %v1626
        %v1628 = vand.u32 %v1627, 4294901760
        %1629 = vmatmul.mubr.f32.gmra.mrb[0].mxu0 %v1628
        %v1630 = vpop.f32.mrb[0].mxu0
        %v1631 = vadd.f32 0.0, %v1630
        %v1632 = vpop.f32.mrb[0].mxu0
        %v1633 = vadd.f32 0.0, %v1632
        %1634 = vdwg.mxu0
        %v1635 = vand.u32 %v1553, 4294901760
        %v1636 = vsub.f32 %v1553, %v1635
        %v1637 = vand.u32 %v1636, 4294901760
        %v1638 = vsub.f32 %v1636, %v1637
        %v1639 = vand.u32 %v1638, 4294901760
        %1640 = vmatprep.subr.mxu0 %v1639
        %v1641 = vand.u32 %v1551, 4294901760
        %v1642 = vsub.f32 %v1551, %v1641
        %v1643 = vand.u32 %v1642, 4294901760
        %v1644 = vsub.f32 %v1642, %v1643
        %v1645 = vand.u32 %v1644, 4294901760
        %1646 = vmatpush1.msra.mxu0 %v1645
        %1647 = vmatprep.subr.mxu0 0.0
        %1648 = vmatpush1.msra.mxu0 0.0
        %1649 = vmatprep.subr.mxu0 0.0
        %1650 = vmatpush1.msra.mxu0 0.0
        %1651 = vmatprep.subr.mxu0 0.0
        %1652 = vmatpush1.msra.mxu0 0.0
        %1653 = vmatprep.subr.mxu0 0.0
        %1654 = vmatpush1.msra.mxu0 0.0
        %1655 = vmatprep.subr.mxu0 0.0
        %1656 = vmatpush1.msra.mxu0 0.0
        %1657 = vmatprep.subr.mxu0 0.0
        %1658 = vmatpush1.msra.mxu0 0.0
        %1659 = vmatprep.subr.mxu0 0.0
        %1660 = vmatpush1.msra.mxu0 0.0
        %1661 = vmatprep.subr.mxu0 0.0
        %1662 = vmatpush1.msra.mxu0 0.0
        %1663 = vmatprep.subr.mxu0 0.0
        %1664 = vmatpush1.msra.mxu0 0.0
        %1665 = vmatprep.subr.mxu0 0.0
        %1666 = vmatpush1.msra.mxu0 0.0
        %1667 = vmatprep.subr.mxu0 0.0
        %1668 = vmatpush1.msra.mxu0 0.0
        %1669 = vmatprep.subr.mxu0 0.0
        %1670 = vmatpush1.msra.mxu0 0.0
        %1671 = vmatprep.subr.mxu0 0.0
        %1672 = vmatpush1.msra.mxu0 0.0
        %1673 = vmatprep.subr.mxu0 0.0
        %1674 = vmatpush1.msra.mxu0 0.0
        %1675 = vmatprep.subr.mxu0 0.0
        %1676 = vmatpush1.msra.mxu0 0.0
        %1677 = vmatprep.subr.mxu0 0.0
        %1678 = vmatpush1.msra.mxu0 0.0
        %1679 = vmatprep.subr.mxu0 0.0
        %1680 = vmatpush1.msra.mxu0 0.0
        %1681 = vmatprep.subr.mxu0 0.0
        %1682 = vmatpush1.msra.mxu0 0.0
        %1683 = vmatprep.subr.mxu0 0.0
        %1684 = vmatpush1.msra.mxu0 0.0
        %1685 = vmatprep.subr.mxu0 0.0
        %1686 = vmatpush1.msra.mxu0 0.0
        %1687 = vmatprep.subr.mxu0 0.0
        %1688 = vmatpush1.msra.mxu0 0.0
        %1689 = vmatprep.subr.mxu0 0.0
        %1690 = vmatpush1.msra.mxu0 0.0
        %1691 = vmatprep.subr.mxu0 0.0
        %1692 = vmatpush1.msra.mxu0 0.0
        %1693 = vmatprep.subr.mxu0 0.0
        %1694 = vmatpush1.msra.mxu0 0.0
        %1695 = vmatprep.subr.mxu0 0.0
        %1696 = vmatpush1.msra.mxu0 0.0
        %1697 = vmatprep.subr.mxu0 0.0
        %1698 = vmatpush1.msra.mxu0 0.0
        %1699 = vmatprep.subr.mxu0 0.0
        %1700 = vmatpush1.msra.mxu0 0.0
        %1701 = vmatprep.subr.mxu0 0.0
        %1702 = vmatpush1.msra.mxu0 0.0
        %1703 = vmatprep.subr.mxu0 0.0
        %1704 = vmatpush1.msra.mxu0 0.0
        %1705 = vmatprep.subr.mxu0 0.0
        %1706 = vmatpush1.msra.mxu0 0.0
        %1707 = vmatprep.subr.mxu0 0.0
        %1708 = vmatpush1.msra.mxu0 0.0
        %1709 = vmatprep.mubr.f32.mxu0 0.0
        %v1710 = vand.u32 %v612, 4294901760
        %1711 = vmatmul.mubr.f32.gmra.mrb[0].mxu0 %v1710
        %v1712 = vpop.f32.mrb[0].mxu0
        %v1713 = vadd.f32 %v1631, %v1712
        %v1714 = vpop.f32.mrb[0].mxu0
        %v1715 = vadd.f32 %v1633, %v1714
        %1716 = vdwg.mxu0
        %v1717 = vand.u32 %v1553, 4294901760
        %v1718 = vsub.f32 %v1553, %v1717
        %1719 = vmatprep.subr.mxu0 %v1718
        %v1720 = vand.u32 %v1551, 4294901760
        %v1721 = vsub.f32 %v1551, %v1720
        %1722 = vmatpush1.msra.mxu0 %v1721
        %1723 = vmatprep.subr.mxu0 0.0
        %1724 = vmatpush1.msra.mxu0 0.0
        %1725 = vmatprep.subr.mxu0 0.0
        %1726 = vmatpush1.msra.mxu0 0.0
        %1727 = vmatprep.subr.mxu0 0.0
        %1728 = vmatpush1.msra.mxu0 0.0
        %1729 = vmatprep.subr.mxu0 0.0
        %1730 = vmatpush1.msra.mxu0 0.0
        %1731 = vmatprep.subr.mxu0 0.0
        %1732 = vmatpush1.msra.mxu0 0.0
        %1733 = vmatprep.subr.mxu0 0.0
        %1734 = vmatpush1.msra.mxu0 0.0
        %1735 = vmatprep.subr.mxu0 0.0
        %1736 = vmatpush1.msra.mxu0 0.0
        %1737 = vmatprep.subr.mxu0 0.0
        %1738 = vmatpush1.msra.mxu0 0.0
        %1739 = vmatprep.subr.mxu0 0.0
        %1740 = vmatpush1.msra.mxu0 0.0
        %1741 = vmatprep.subr.mxu0 0.0
        %1742 = vmatpush1.msra.mxu0 0.0
        %1743 = vmatprep.subr.mxu0 0.0
        %1744 = vmatpush1.msra.mxu0 0.0
        %1745 = vmatprep.subr.mxu0 0.0
        %1746 = vmatpush1.msra.mxu0 0.0
        %1747 = vmatprep.subr.mxu0 0.0
        %1748 = vmatpush1.msra.mxu0 0.0
        %1749 = vmatprep.subr.mxu0 0.0
        %1750 = vmatpush1.msra.mxu0 0.0
        %1751 = vmatprep.subr.mxu0 0.0
        %1752 = vmatpush1.msra.mxu0 0.0
        %1753 = vmatprep.subr.mxu0 0.0
        %1754 = vmatpush1.msra.mxu0 0.0
        %1755 = vmatprep.subr.mxu0 0.0
        %1756 = vmatpush1.msra.mxu0 0.0
        %1757 = vmatprep.subr.mxu0 0.0
        %1758 = vmatpush1.msra.mxu0 0.0
        %1759 = vmatprep.subr.mxu0 0.0
        %1760 = vmatpush1.msra.mxu0 0.0
        %1761 = vmatprep.subr.mxu0 0.0
        %1762 = vmatpush1.msra.mxu0 0.0
        %1763 = vmatprep.subr.mxu0 0.0
        %1764 = vmatpush1.msra.mxu0 0.0
        %1765 = vmatprep.subr.mxu0 0.0
        %1766 = vmatpush1.msra.mxu0 0.0
        %1767 = vmatprep.subr.mxu0 0.0
        %1768 = vmatpush1.msra.mxu0 0.0
        %1769 = vmatprep.subr.mxu0 0.0
        %1770 = vmatpush1.msra.mxu0 0.0
        %1771 = vmatprep.subr.mxu0 0.0
        %1772 = vmatpush1.msra.mxu0 0.0
        %1773 = vmatprep.subr.mxu0 0.0
        %1774 = vmatpush1.msra.mxu0 0.0
        %1775 = vmatprep.subr.mxu0 0.0
        %1776 = vmatpush1.msra.mxu0 0.0
        %1777 = vmatprep.subr.mxu0 0.0
        %1778 = vmatpush1.msra.mxu0 0.0
        %1779 = vmatprep.subr.mxu0 0.0
        %1780 = vmatpush1.msra.mxu0 0.0
        %1781 = vmatprep.subr.mxu0 0.0
        %1782 = vmatpush1.msra.mxu0 0.0
        %1783 = vmatprep.subr.mxu0 0.0
        %1784 = vmatpush1.msra.mxu0 0.0
        %1785 = vmatprep.mubr.f32.mxu0 0.0
        %v1786 = vand.u32 %v612, 4294901760
        %v1787 = vsub.f32 %v612, %v1786
        %1788 = vmatmul.mubr.f32.gmra.mrb[0].mxu0 %v1787
        %v1789 = vpop.f32.mrb[0].mxu0
        %v1790 = vadd.f32 %v1713, %v1789
        %v1791 = vpop.f32.mrb[0].mxu0
        %v1792 = vadd.f32 %v1715, %v1791
        %1793 = vdwg.mxu0
        %v1794 = vand.u32 %v1553, 4294901760
        %1795 = vmatprep.subr.mxu0 %v1794
        %v1796 = vand.u32 %v1551, 4294901760
        %1797 = vmatpush1.msra.mxu0 %v1796
        %1798 = vmatprep.subr.mxu0 0.0
        %1799 = vmatpush1.msra.mxu0 0.0
        %1800 = vmatprep.subr.mxu0 0.0
        %1801 = vmatpush1.msra.mxu0 0.0
        %1802 = vmatprep.subr.mxu0 0.0
        %1803 = vmatpush1.msra.mxu0 0.0
        %1804 = vmatprep.subr.mxu0 0.0
        %1805 = vmatpush1.msra.mxu0 0.0
        %1806 = vmatprep.subr.mxu0 0.0
        %1807 = vmatpush1.msra.mxu0 0.0
        %1808 = vmatprep.subr.mxu0 0.0
        %1809 = vmatpush1.msra.mxu0 0.0
        %1810 = vmatprep.subr.mxu0 0.0
        %1811 = vmatpush1.msra.mxu0 0.0
        %1812 = vmatprep.subr.mxu0 0.0
        %1813 = vmatpush1.msra.mxu0 0.0
        %1814 = vmatprep.subr.mxu0 0.0
        %1815 = vmatpush1.msra.mxu0 0.0
        %1816 = vmatprep.subr.mxu0 0.0
        %1817 = vmatpush1.msra.mxu0 0.0
        %1818 = vmatprep.subr.mxu0 0.0
        %1819 = vmatpush1.msra.mxu0 0.0
        %1820 = vmatprep.subr.mxu0 0.0
        %1821 = vmatpush1.msra.mxu0 0.0
        %1822 = vmatprep.subr.mxu0 0.0
        %1823 = vmatpush1.msra.mxu0 0.0
        %1824 = vmatprep.subr.mxu0 0.0
        %1825 = vmatpush1.msra.mxu0 0.0
        %1826 = vmatprep.subr.mxu0 0.0
        %1827 = vmatpush1.msra.mxu0 0.0
        %1828 = vmatprep.subr.mxu0 0.0
        %1829 = vmatpush1.msra.mxu0 0.0
        %1830 = vmatprep.subr.mxu0 0.0
        %1831 = vmatpush1.msra.mxu0 0.0
        %1832 = vmatprep.subr.mxu0 0.0
        %1833 = vmatpush1.msra.mxu0 0.0
        %1834 = vmatprep.subr.mxu0 0.0
        %1835 = vmatpush1.msra.mxu0 0.0
        %1836 = vmatprep.subr.mxu0 0.0
        %1837 = vmatpush1.msra.mxu0 0.0
        %1838 = vmatprep.subr.mxu0 0.0
        %1839 = vmatpush1.msra.mxu0 0.0
        %1840 = vmatprep.subr.mxu0 0.0
        %1841 = vmatpush1.msra.mxu0 0.0
        %1842 = vmatprep.subr.mxu0 0.0
        %1843 = vmatpush1.msra.mxu0 0.0
        %1844 = vmatprep.subr.mxu0 0.0
        %1845 = vmatpush1.msra.mxu0 0.0
        %1846 = vmatprep.subr.mxu0 0.0
        %1847 = vmatpush1.msra.mxu0 0.0
        %1848 = vmatprep.subr.mxu0 0.0
        %1849 = vmatpush1.msra.mxu0 0.0
        %1850 = vmatprep.subr.mxu0 0.0
        %1851 = vmatpush1.msra.mxu0 0.0
        %1852 = vmatprep.subr.mxu0 0.0
        %1853 = vmatpush1.msra.mxu0 0.0
        %1854 = vmatprep.subr.mxu0 0.0
        %1855 = vmatpush1.msra.mxu0 0.0
        %1856 = vmatprep.subr.mxu0 0.0
        %1857 = vmatpush1.msra.mxu0 0.0
        %1858 = vmatprep.subr.mxu0 0.0
        %1859 = vmatpush1.msra.mxu0 0.0
        %1860 = vmatprep.mubr.f32.mxu0 0.0
        %v1861 = vand.u32 %v612, 4294901760
        %v1862 = vsub.f32 %v612, %v1861
        %v1863 = vand.u32 %v1862, 4294901760
        %1864 = vmatmul.mubr.f32.gmra.mrb[0].mxu0 %v1863
        %v1865 = vpop.f32.mrb[0].mxu0
        %v1866 = vadd.f32 %v1790, %v1865
        %v1867 = vpop.f32.mrb[0].mxu0
        %v1868 = vadd.f32 %v1792, %v1867
        %1869 = vdwg.mxu0
        %v1870 = vand.u32 %v1553, 4294901760
        %v1871 = vsub.f32 %v1553, %v1870
        %v1872 = vand.u32 %v1871, 4294901760
        %1873 = vmatprep.subr.mxu0 %v1872
        %v1874 = vand.u32 %v1551, 4294901760
        %v1875 = vsub.f32 %v1551, %v1874
        %v1876 = vand.u32 %v1875, 4294901760
        %1877 = vmatpush1.msra.mxu0 %v1876
        %1878 = vmatprep.subr.mxu0 0.0
        %1879 = vmatpush1.msra.mxu0 0.0
        %1880 = vmatprep.subr.mxu0 0.0
        %1881 = vmatpush1.msra.mxu0 0.0
        %1882 = vmatprep.subr.mxu0 0.0
        %1883 = vmatpush1.msra.mxu0 0.0
        %1884 = vmatprep.subr.mxu0 0.0
        %1885 = vmatpush1.msra.mxu0 0.0
        %1886 = vmatprep.subr.mxu0 0.0
        %1887 = vmatpush1.msra.mxu0 0.0
        %1888 = vmatprep.subr.mxu0 0.0
        %1889 = vmatpush1.msra.mxu0 0.0
        %1890 = vmatprep.subr.mxu0 0.0
        %1891 = vmatpush1.msra.mxu0 0.0
        %1892 = vmatprep.subr.mxu0 0.0
        %1893 = vmatpush1.msra.mxu0 0.0
        %1894 = vmatprep.subr.mxu0 0.0
        %1895 = vmatpush1.msra.mxu0 0.0
        %1896 = vmatprep.subr.mxu0 0.0
        %1897 = vmatpush1.msra.mxu0 0.0
        %1898 = vmatprep.subr.mxu0 0.0
        %1899 = vmatpush1.msra.mxu0 0.0
        %1900 = vmatprep.subr.mxu0 0.0
        %1901 = vmatpush1.msra.mxu0 0.0
        %1902 = vmatprep.subr.mxu0 0.0
        %1903 = vmatpush1.msra.mxu0 0.0
        %1904 = vmatprep.subr.mxu0 0.0
        %1905 = vmatpush1.msra.mxu0 0.0
        %1906 = vmatprep.subr.mxu0 0.0
        %1907 = vmatpush1.msra.mxu0 0.0
        %1908 = vmatprep.subr.mxu0 0.0
        %1909 = vmatpush1.msra.mxu0 0.0
        %1910 = vmatprep.subr.mxu0 0.0
        %1911 = vmatpush1.msra.mxu0 0.0
        %1912 = vmatprep.subr.mxu0 0.0
        %1913 = vmatpush1.msra.mxu0 0.0
        %1914 = vmatprep.subr.mxu0 0.0
        %1915 = vmatpush1.msra.mxu0 0.0
        %1916 = vmatprep.subr.mxu0 0.0
        %1917 = vmatpush1.msra.mxu0 0.0
        %1918 = vmatprep.subr.mxu0 0.0
        %1919 = vmatpush1.msra.mxu0 0.0
        %1920 = vmatprep.subr.mxu0 0.0
        %1921 = vmatpush1.msra.mxu0 0.0
        %1922 = vmatprep.subr.mxu0 0.0
        %1923 = vmatpush1.msra.mxu0 0.0
        %1924 = vmatprep.subr.mxu0 0.0
        %1925 = vmatpush1.msra.mxu0 0.0
        %1926 = vmatprep.subr.mxu0 0.0
        %1927 = vmatpush1.msra.mxu0 0.0
        %1928 = vmatprep.subr.mxu0 0.0
        %1929 = vmatpush1.msra.mxu0 0.0
        %1930 = vmatprep.subr.mxu0 0.0
        %1931 = vmatpush1.msra.mxu0 0.0
        %1932 = vmatprep.subr.mxu0 0.0
        %1933 = vmatpush1.msra.mxu0 0.0
        %1934 = vmatprep.subr.mxu0 0.0
        %1935 = vmatpush1.msra.mxu0 0.0
        %1936 = vmatprep.subr.mxu0 0.0
        %1937 = vmatpush1.msra.mxu0 0.0
        %1938 = vmatprep.subr.mxu0 0.0
        %1939 = vmatpush1.msra.mxu0 0.0
        %1940 = vmatprep.mubr.f32.mxu0 0.0
        %v1941 = vand.u32 %v612, 4294901760
        %1942 = vmatmul.mubr.f32.gmra.mrb[0].mxu0 %v1941
        %v1943 = vpop.f32.mrb[0].mxu0
        %v1944 = vadd.f32 %v1866, %v1943
        %v1945 = vpop.f32.mrb[0].mxu0
        %v1946 = vadd.f32 %v1868, %v1945
        %1947 = vdwg.mxu0
        %v1948 = vand.u32 %v1553, 4294901760
        %1949 = vmatprep.subr.mxu0 %v1948
        %v1950 = vand.u32 %v1551, 4294901760
        %1951 = vmatpush1.msra.mxu0 %v1950
        %1952 = vmatprep.subr.mxu0 0.0
        %1953 = vmatpush1.msra.mxu0 0.0
        %1954 = vmatprep.subr.mxu0 0.0
        %1955 = vmatpush1.msra.mxu0 0.0
        %1956 = vmatprep.subr.mxu0 0.0
        %1957 = vmatpush1.msra.mxu0 0.0
        %1958 = vmatprep.subr.mxu0 0.0
        %1959 = vmatpush1.msra.mxu0 0.0
        %1960 = vmatprep.subr.mxu0 0.0
        %1961 = vmatpush1.msra.mxu0 0.0
        %1962 = vmatprep.subr.mxu0 0.0
        %1963 = vmatpush1.msra.mxu0 0.0
        %1964 = vmatprep.subr.mxu0 0.0
        %1965 = vmatpush1.msra.mxu0 0.0
        %1966 = vmatprep.subr.mxu0 0.0
        %1967 = vmatpush1.msra.mxu0 0.0
        %1968 = vmatprep.subr.mxu0 0.0
        %1969 = vmatpush1.msra.mxu0 0.0
        %1970 = vmatprep.subr.mxu0 0.0
        %1971 = vmatpush1.msra.mxu0 0.0
        %1972 = vmatprep.subr.mxu0 0.0
        %1973 = vmatpush1.msra.mxu0 0.0
        %1974 = vmatprep.subr.mxu0 0.0
        %1975 = vmatpush1.msra.mxu0 0.0
        %1976 = vmatprep.subr.mxu0 0.0
        %1977 = vmatpush1.msra.mxu0 0.0
        %1978 = vmatprep.subr.mxu0 0.0
        %1979 = vmatpush1.msra.mxu0 0.0
        %1980 = vmatprep.subr.mxu0 0.0
        %1981 = vmatpush1.msra.mxu0 0.0
        %1982 = vmatprep.subr.mxu0 0.0
        %1983 = vmatpush1.msra.mxu0 0.0
        %1984 = vmatprep.subr.mxu0 0.0
        %1985 = vmatpush1.msra.mxu0 0.0
        %1986 = vmatprep.subr.mxu0 0.0
        %1987 = vmatpush1.msra.mxu0 0.0
        %1988 = vmatprep.subr.mxu0 0.0
        %1989 = vmatpush1.msra.mxu0 0.0
        %1990 = vmatprep.subr.mxu0 0.0
        %1991 = vmatpush1.msra.mxu0 0.0
        %1992 = vmatprep.subr.mxu0 0.0
        %1993 = vmatpush1.msra.mxu0 0.0
        %1994 = vmatprep.subr.mxu0 0.0
        %1995 = vmatpush1.msra.mxu0 0.0
        %1996 = vmatprep.subr.mxu0 0.0
        %1997 = vmatpush1.msra.mxu0 0.0
        %1998 = vmatprep.subr.mxu0 0.0
        %1999 = vmatpush1.msra.mxu0 0.0
        %2000 = vmatprep.subr.mxu0 0.0
        %2001 = vmatpush1.msra.mxu0 0.0
        %2002 = vmatprep.subr.mxu0 0.0
        %2003 = vmatpush1.msra.mxu0 0.0
        %2004 = vmatprep.subr.mxu0 0.0
        %2005 = vmatpush1.msra.mxu0 0.0
        %2006 = vmatprep.subr.mxu0 0.0
        %2007 = vmatpush1.msra.mxu0 0.0
        %2008 = vmatprep.subr.mxu0 0.0
        %2009 = vmatpush1.msra.mxu0 0.0
        %2010 = vmatprep.subr.mxu0 0.0
        %2011 = vmatpush1.msra.mxu0 0.0
        %2012 = vmatprep.subr.mxu0 0.0
        %2013 = vmatpush1.msra.mxu0 0.0
        %2014 = vmatprep.mubr.f32.mxu0 0.0
        %v2015 = vand.u32 %v612, 4294901760
        %2016 = vmatmul.mubr.f32.gmra.mrb[0].mxu0 %v2015
        %v2017 = vpop.f32.mrb[0].mxu0
        %v2018 = vadd.f32 %v1944, %v2017
        %v2019 = vpop.f32.mrb[0].mxu0
        %v2020 = vadd.f32 %v1946, %v2019
        %2021 = vdwg.mxu0
        %2022 = vmatprep.subr.mxu0 0.0
        %v2023 = vand.u32 %v1555, 4294901760
        %2024 = vmatpush1.msra.mxu0 %v2023
        %2025 = vmatprep.subr.mxu0 0.0
        %2026 = vmatpush1.msra.mxu0 0.0
        %2027 = vmatprep.subr.mxu0 0.0
        %2028 = vmatpush1.msra.mxu0 0.0
        %2029 = vmatprep.subr.mxu0 0.0
        %2030 = vmatpush1.msra.mxu0 0.0
        %2031 = vmatprep.subr.mxu0 0.0
        %2032 = vmatpush1.msra.mxu0 0.0
        %2033 = vmatprep.subr.mxu0 0.0
        %2034 = vmatpush1.msra.mxu0 0.0
        %2035 = vmatprep.subr.mxu0 0.0
        %2036 = vmatpush1.msra.mxu0 0.0
        %2037 = vmatprep.subr.mxu0 0.0
        %2038 = vmatpush1.msra.mxu0 0.0
        %2039 = vmatprep.subr.mxu0 0.0
        %2040 = vmatpush1.msra.mxu0 0.0
        %2041 = vmatprep.subr.mxu0 0.0
        %2042 = vmatpush1.msra.mxu0 0.0
        %2043 = vmatprep.subr.mxu0 0.0
        %2044 = vmatpush1.msra.mxu0 0.0
        %2045 = vmatprep.subr.mxu0 0.0
        %2046 = vmatpush1.msra.mxu0 0.0
        %2047 = vmatprep.subr.mxu0 0.0
        %2048 = vmatpush1.msra.mxu0 0.0
        %2049 = vmatprep.subr.mxu0 0.0
        %2050 = vmatpush1.msra.mxu0 0.0
        %2051 = vmatprep.subr.mxu0 0.0
        %2052 = vmatpush1.msra.mxu0 0.0
        %2053 = vmatprep.subr.mxu0 0.0
        %2054 = vmatpush1.msra.mxu0 0.0
        %2055 = vmatprep.subr.mxu0 0.0
        %2056 = vmatpush1.msra.mxu0 0.0
        %2057 = vmatprep.subr.mxu0 0.0
        %2058 = vmatpush1.msra.mxu0 0.0
        %2059 = vmatprep.subr.mxu0 0.0
        %2060 = vmatpush1.msra.mxu0 0.0
        %2061 = vmatprep.subr.mxu0 0.0
        %2062 = vmatpush1.msra.mxu0 0.0
        %2063 = vmatprep.subr.mxu0 0.0
        %2064 = vmatpush1.msra.mxu0 0.0
        %2065 = vmatprep.subr.mxu0 0.0
        %2066 = vmatpush1.msra.mxu0 0.0
        %2067 = vmatprep.subr.mxu0 0.0
        %2068 = vmatpush1.msra.mxu0 0.0
        %2069 = vmatprep.subr.mxu0 0.0
        %2070 = vmatpush1.msra.mxu0 0.0
        %2071 = vmatprep.subr.mxu0 0.0
        %2072 = vmatpush1.msra.mxu0 0.0
        %2073 = vmatprep.subr.mxu0 0.0
        %2074 = vmatpush1.msra.mxu0 0.0
        %2075 = vmatprep.subr.mxu0 0.0
        %2076 = vmatpush1.msra.mxu0 0.0
        %2077 = vmatprep.subr.mxu0 0.0
        %2078 = vmatpush1.msra.mxu0 0.0
        %2079 = vmatprep.subr.mxu0 0.0
        %2080 = vmatpush1.msra.mxu0 0.0
        %2081 = vmatprep.subr.mxu0 0.0
        %2082 = vmatpush1.msra.mxu0 0.0
        %2083 = vmatprep.subr.mxu0 0.0
        %2084 = vmatpush1.msra.mxu0 0.0
        %2085 = vmatprep.subr.mxu0 0.0
        %2086 = vmatpush1.msra.mxu0 0.0
        %2087 = vmatprep.mubr.f32.mxu0 0.0
        %v2088 = vand.u32 %v612, 4294901760
        %v2089 = vsub.f32 %v612, %v2088
        %v2090 = vand.u32 %v2089, 4294901760
        %v2091 = vsub.f32 %v2089, %v2090
        %v2092 = vand.u32 %v2091, 4294901760
        %2093 = vmatmul.mubr.f32.gmra.mrb[0].mxu0 %v2092
        %v2094 = vpop.f32.mrb[0].mxu0
        %v2095 = vadd.f32 0.0, %v2094
        %v2096 = vpop.f32.mrb[0].mxu0
        %2097 = vdwg.mxu0
        %2098 = vmatprep.subr.mxu0 0.0
        %v2099 = vand.u32 %v1555, 4294901760
        %v2100 = vsub.f32 %v1555, %v2099
        %v2101 = vand.u32 %v2100, 4294901760
        %v2102 = vsub.f32 %v2100, %v2101
        %v2103 = vand.u32 %v2102, 4294901760
        %2104 = vmatpush1.msra.mxu0 %v2103
        %2105 = vmatprep.subr.mxu0 0.0
        %2106 = vmatpush1.msra.mxu0 0.0
        %2107 = vmatprep.subr.mxu0 0.0
        %2108 = vmatpush1.msra.mxu0 0.0
        %2109 = vmatprep.subr.mxu0 0.0
        %2110 = vmatpush1.msra.mxu0 0.0
        %2111 = vmatprep.subr.mxu0 0.0
        %2112 = vmatpush1.msra.mxu0 0.0
        %2113 = vmatprep.subr.mxu0 0.0
        %2114 = vmatpush1.msra.mxu0 0.0
        %2115 = vmatprep.subr.mxu0 0.0
        %2116 = vmatpush1.msra.mxu0 0.0
        %2117 = vmatprep.subr.mxu0 0.0
        %2118 = vmatpush1.msra.mxu0 0.0
        %2119 = vmatprep.subr.mxu0 0.0
        %2120 = vmatpush1.msra.mxu0 0.0
        %2121 = vmatprep.subr.mxu0 0.0
        %2122 = vmatpush1.msra.mxu0 0.0
        %2123 = vmatprep.subr.mxu0 0.0
        %2124 = vmatpush1.msra.mxu0 0.0
        %2125 = vmatprep.subr.mxu0 0.0
        %2126 = vmatpush1.msra.mxu0 0.0
        %2127 = vmatprep.subr.mxu0 0.0
        %2128 = vmatpush1.msra.mxu0 0.0
        %2129 = vmatprep.subr.mxu0 0.0
        %2130 = vmatpush1.msra.mxu0 0.0
        %2131 = vmatprep.subr.mxu0 0.0
        %2132 = vmatpush1.msra.mxu0 0.0
        %2133 = vmatprep.subr.mxu0 0.0
        %2134 = vmatpush1.msra.mxu0 0.0
        %2135 = vmatprep.subr.mxu0 0.0
        %2136 = vmatpush1.msra.mxu0 0.0
        %2137 = vmatprep.subr.mxu0 0.0
        %2138 = vmatpush1.msra.mxu0 0.0
        %2139 = vmatprep.subr.mxu0 0.0
        %2140 = vmatpush1.msra.mxu0 0.0
        %2141 = vmatprep.subr.mxu0 0.0
        %2142 = vmatpush1.msra.mxu0 0.0
        %2143 = vmatprep.subr.mxu0 0.0
        %2144 = vmatpush1.msra.mxu0 0.0
        %2145 = vmatprep.subr.mxu0 0.0
        %2146 = vmatpush1.msra.mxu0 0.0
        %2147 = vmatprep.subr.mxu0 0.0
        %2148 = vmatpush1.msra.mxu0 0.0
        %2149 = vmatprep.subr.mxu0 0.0
        %2150 = vmatpush1.msra.mxu0 0.0
        %2151 = vmatprep.subr.mxu0 0.0
        %2152 = vmatpush1.msra.mxu0 0.0
        %2153 = vmatprep.subr.mxu0 0.0
        %2154 = vmatpush1.msra.mxu0 0.0
        %2155 = vmatprep.subr.mxu0 0.0
        %2156 = vmatpush1.msra.mxu0 0.0
        %2157 = vmatprep.subr.mxu0 0.0
        %2158 = vmatpush1.msra.mxu0 0.0
        %2159 = vmatprep.subr.mxu0 0.0
        %2160 = vmatpush1.msra.mxu0 0.0
        %2161 = vmatprep.subr.mxu0 0.0
        %2162 = vmatpush1.msra.mxu0 0.0
        %2163 = vmatprep.subr.mxu0 0.0
        %2164 = vmatpush1.msra.mxu0 0.0
        %2165 = vmatprep.subr.mxu0 0.0
        %2166 = vmatpush1.msra.mxu0 0.0
        %2167 = vmatprep.mubr.f32.mxu0 0.0
        %v2168 = vand.u32 %v612, 4294901760
        %2169 = vmatmul.mubr.f32.gmra.mrb[0].mxu0 %v2168
        %v2170 = vpop.f32.mrb[0].mxu0
        %v2171 = vadd.f32 %v2095, %v2170
        %v2172 = vpop.f32.mrb[0].mxu0
        %2173 = vdwg.mxu0
        %2174 = vmatprep.subr.mxu0 0.0
        %v2175 = vand.u32 %v1555, 4294901760
        %v2176 = vsub.f32 %v1555, %v2175
        %2177 = vmatpush1.msra.mxu0 %v2176
        %2178 = vmatprep.subr.mxu0 0.0
        %2179 = vmatpush1.msra.mxu0 0.0
        %2180 = vmatprep.subr.mxu0 0.0
        %2181 = vmatpush1.msra.mxu0 0.0
        %2182 = vmatprep.subr.mxu0 0.0
        %2183 = vmatpush1.msra.mxu0 0.0
        %2184 = vmatprep.subr.mxu0 0.0
        %2185 = vmatpush1.msra.mxu0 0.0
        %2186 = vmatprep.subr.mxu0 0.0
        %2187 = vmatpush1.msra.mxu0 0.0
        %2188 = vmatprep.subr.mxu0 0.0
        %2189 = vmatpush1.msra.mxu0 0.0
        %2190 = vmatprep.subr.mxu0 0.0
        %2191 = vmatpush1.msra.mxu0 0.0
        %2192 = vmatprep.subr.mxu0 0.0
        %2193 = vmatpush1.msra.mxu0 0.0
        %2194 = vmatprep.subr.mxu0 0.0
        %2195 = vmatpush1.msra.mxu0 0.0
        %2196 = vmatprep.subr.mxu0 0.0
        %2197 = vmatpush1.msra.mxu0 0.0
        %2198 = vmatprep.subr.mxu0 0.0
        %2199 = vmatpush1.msra.mxu0 0.0
        %2200 = vmatprep.subr.mxu0 0.0
        %2201 = vmatpush1.msra.mxu0 0.0
        %2202 = vmatprep.subr.mxu0 0.0
        %2203 = vmatpush1.msra.mxu0 0.0
        %2204 = vmatprep.subr.mxu0 0.0
        %2205 = vmatpush1.msra.mxu0 0.0
        %2206 = vmatprep.subr.mxu0 0.0
        %2207 = vmatpush1.msra.mxu0 0.0
        %2208 = vmatprep.subr.mxu0 0.0
        %2209 = vmatpush1.msra.mxu0 0.0
        %2210 = vmatprep.subr.mxu0 0.0
        %2211 = vmatpush1.msra.mxu0 0.0
        %2212 = vmatprep.subr.mxu0 0.0
        %2213 = vmatpush1.msra.mxu0 0.0
        %2214 = vmatprep.subr.mxu0 0.0
        %2215 = vmatpush1.msra.mxu0 0.0
        %2216 = vmatprep.subr.mxu0 0.0
        %2217 = vmatpush1.msra.mxu0 0.0
        %2218 = vmatprep.subr.mxu0 0.0
        %2219 = vmatpush1.msra.mxu0 0.0
        %2220 = vmatprep.subr.mxu0 0.0
        %2221 = vmatpush1.msra.mxu0 0.0
        %2222 = vmatprep.subr.mxu0 0.0
        %2223 = vmatpush1.msra.mxu0 0.0
        %2224 = vmatprep.subr.mxu0 0.0
        %2225 = vmatpush1.msra.mxu0 0.0
        %2226 = vmatprep.subr.mxu0 0.0
        %2227 = vmatpush1.msra.mxu0 0.0
        %2228 = vmatprep.subr.mxu0 0.0
        %2229 = vmatpush1.msra.mxu0 0.0
        %2230 = vmatprep.subr.mxu0 0.0
        %2231 = vmatpush1.msra.mxu0 0.0
        %2232 = vmatprep.subr.mxu0 0.0
        %2233 = vmatpush1.msra.mxu0 0.0
        %2234 = vmatprep.subr.mxu0 0.0
        %2235 = vmatpush1.msra.mxu0 0.0
        %2236 = vmatprep.subr.mxu0 0.0
        %2237 = vmatpush1.msra.mxu0 0.0
        %2238 = vmatprep.subr.mxu0 0.0
        %2239 = vmatpush1.msra.mxu0 0.0
        %2240 = vmatprep.mubr.f32.mxu0 0.0
        %v2241 = vand.u32 %v612, 4294901760
        %v2242 = vsub.f32 %v612, %v2241
        %2243 = vmatmul.mubr.f32.gmra.mrb[0].mxu0 %v2242
        %v2244 = vpop.f32.mrb[0].mxu0
        %v2245 = vadd.f32 %v2171, %v2244
        %v2246 = vpop.f32.mrb[0].mxu0
        %2247 = vdwg.mxu0
        %2248 = vmatprep.subr.mxu0 0.0
        %v2249 = vand.u32 %v1555, 4294901760
        %2250 = vmatpush1.msra.mxu0 %v2249
        %2251 = vmatprep.subr.mxu0 0.0
        %2252 = vmatpush1.msra.mxu0 0.0
        %2253 = vmatprep.subr.mxu0 0.0
        %2254 = vmatpush1.msra.mxu0 0.0
        %2255 = vmatprep.subr.mxu0 0.0
        %2256 = vmatpush1.msra.mxu0 0.0
        %2257 = vmatprep.subr.mxu0 0.0
        %2258 = vmatpush1.msra.mxu0 0.0
        %2259 = vmatprep.subr.mxu0 0.0
        %2260 = vmatpush1.msra.mxu0 0.0
        %2261 = vmatprep.subr.mxu0 0.0
        %2262 = vmatpush1.msra.mxu0 0.0
        %2263 = vmatprep.subr.mxu0 0.0
        %2264 = vmatpush1.msra.mxu0 0.0
        %2265 = vmatprep.subr.mxu0 0.0
        %2266 = vmatpush1.msra.mxu0 0.0
        %2267 = vmatprep.subr.mxu0 0.0
        %2268 = vmatpush1.msra.mxu0 0.0
        %2269 = vmatprep.subr.mxu0 0.0
        %2270 = vmatpush1.msra.mxu0 0.0
        %2271 = vmatprep.subr.mxu0 0.0
        %2272 = vmatpush1.msra.mxu0 0.0
        %2273 = vmatprep.subr.mxu0 0.0
        %2274 = vmatpush1.msra.mxu0 0.0
        %2275 = vmatprep.subr.mxu0 0.0
        %2276 = vmatpush1.msra.mxu0 0.0
        %2277 = vmatprep.subr.mxu0 0.0
        %2278 = vmatpush1.msra.mxu0 0.0
        %2279 = vmatprep.subr.mxu0 0.0
        %2280 = vmatpush1.msra.mxu0 0.0
        %2281 = vmatprep.subr.mxu0 0.0
        %2282 = vmatpush1.msra.mxu0 0.0
        %2283 = vmatprep.subr.mxu0 0.0
        %2284 = vmatpush1.msra.mxu0 0.0
        %2285 = vmatprep.subr.mxu0 0.0
        %2286 = vmatpush1.msra.mxu0 0.0
        %2287 = vmatprep.subr.mxu0 0.0
        %2288 = vmatpush1.msra.mxu0 0.0
        %2289 = vmatprep.subr.mxu0 0.0
        %2290 = vmatpush1.msra.mxu0 0.0
        %2291 = vmatprep.subr.mxu0 0.0
        %2292 = vmatpush1.msra.mxu0 0.0
        %2293 = vmatprep.subr.mxu0 0.0
        %2294 = vmatpush1.msra.mxu0 0.0
        %2295 = vmatprep.subr.mxu0 0.0
        %2296 = vmatpush1.msra.mxu0 0.0
        %2297 = vmatprep.subr.mxu0 0.0
        %2298 = vmatpush1.msra.mxu0 0.0
        %2299 = vmatprep.subr.mxu0 0.0
        %2300 = vmatpush1.msra.mxu0 0.0
        %2301 = vmatprep.subr.mxu0 0.0
        %2302 = vmatpush1.msra.mxu0 0.0
        %2303 = vmatprep.subr.mxu0 0.0
        %2304 = vmatpush1.msra.mxu0 0.0
        %2305 = vmatprep.subr.mxu0 0.0
        %2306 = vmatpush1.msra.mxu0 0.0
        %2307 = vmatprep.subr.mxu0 0.0
        %2308 = vmatpush1.msra.mxu0 0.0
        %2309 = vmatprep.subr.mxu0 0.0
        %2310 = vmatpush1.msra.mxu0 0.0
        %2311 = vmatprep.subr.mxu0 0.0
        %2312 = vmatpush1.msra.mxu0 0.0
        %2313 = vmatprep.mubr.f32.mxu0 0.0
        %v2314 = vand.u32 %v612, 4294901760
        %v2315 = vsub.f32 %v612, %v2314
        %v2316 = vand.u32 %v2315, 4294901760
        %2317 = vmatmul.mubr.f32.gmra.mrb[0].mxu0 %v2316
        %v2318 = vpop.f32.mrb[0].mxu0
        %v2319 = vadd.f32 %v2245, %v2318
        %v2320 = vpop.f32.mrb[0].mxu0
        %2321 = vdwg.mxu0
        %2322 = vmatprep.subr.mxu0 0.0
        %v2323 = vand.u32 %v1555, 4294901760
        %v2324 = vsub.f32 %v1555, %v2323
        %v2325 = vand.u32 %v2324, 4294901760
        %2326 = vmatpush1.msra.mxu0 %v2325
        %2327 = vmatprep.subr.mxu0 0.0
        %2328 = vmatpush1.msra.mxu0 0.0
        %2329 = vmatprep.subr.mxu0 0.0
        %2330 = vmatpush1.msra.mxu0 0.0
        %2331 = vmatprep.subr.mxu0 0.0
        %2332 = vmatpush1.msra.mxu0 0.0
        %2333 = vmatprep.subr.mxu0 0.0
        %2334 = vmatpush1.msra.mxu0 0.0
        %2335 = vmatprep.subr.mxu0 0.0
        %2336 = vmatpush1.msra.mxu0 0.0
        %2337 = vmatprep.subr.mxu0 0.0
        %2338 = vmatpush1.msra.mxu0 0.0
        %2339 = vmatprep.subr.mxu0 0.0
        %2340 = vmatpush1.msra.mxu0 0.0
        %2341 = vmatprep.subr.mxu0 0.0
        %2342 = vmatpush1.msra.mxu0 0.0
        %2343 = vmatprep.subr.mxu0 0.0
        %2344 = vmatpush1.msra.mxu0 0.0
        %2345 = vmatprep.subr.mxu0 0.0
        %2346 = vmatpush1.msra.mxu0 0.0
        %2347 = vmatprep.subr.mxu0 0.0
        %2348 = vmatpush1.msra.mxu0 0.0
        %2349 = vmatprep.subr.mxu0 0.0
        %2350 = vmatpush1.msra.mxu0 0.0
        %2351 = vmatprep.subr.mxu0 0.0
        %2352 = vmatpush1.msra.mxu0 0.0
        %2353 = vmatprep.subr.mxu0 0.0
        %2354 = vmatpush1.msra.mxu0 0.0
        %2355 = vmatprep.subr.mxu0 0.0
        %2356 = vmatpush1.msra.mxu0 0.0
        %2357 = vmatprep.subr.mxu0 0.0
        %2358 = vmatpush1.msra.mxu0 0.0
        %2359 = vmatprep.subr.mxu0 0.0
        %2360 = vmatpush1.msra.mxu0 0.0
        %2361 = vmatprep.subr.mxu0 0.0
        %2362 = vmatpush1.msra.mxu0 0.0
        %2363 = vmatprep.subr.mxu0 0.0
        %2364 = vmatpush1.msra.mxu0 0.0
        %2365 = vmatprep.subr.mxu0 0.0
        %2366 = vmatpush1.msra.mxu0 0.0
        %2367 = vmatprep.subr.mxu0 0.0
        %2368 = vmatpush1.msra.mxu0 0.0
        %2369 = vmatprep.subr.mxu0 0.0
        %2370 = vmatpush1.msra.mxu0 0.0
        %2371 = vmatprep.subr.mxu0 0.0
        %2372 = vmatpush1.msra.mxu0 0.0
        %2373 = vmatprep.subr.mxu0 0.0
        %2374 = vmatpush1.msra.mxu0 0.0
        %2375 = vmatprep.subr.mxu0 0.0
        %2376 = vmatpush1.msra.mxu0 0.0
        %2377 = vmatprep.subr.mxu0 0.0
        %2378 = vmatpush1.msra.mxu0 0.0
        %2379 = vmatprep.subr.mxu0 0.0
        %2380 = vmatpush1.msra.mxu0 0.0
        %2381 = vmatprep.subr.mxu0 0.0
        %2382 = vmatpush1.msra.mxu0 0.0
        %2383 = vmatprep.subr.mxu0 0.0
        %2384 = vmatpush1.msra.mxu0 0.0
        %2385 = vmatprep.subr.mxu0 0.0
        %2386 = vmatpush1.msra.mxu0 0.0
        %2387 = vmatprep.subr.mxu0 0.0
        %2388 = vmatpush1.msra.mxu0 0.0
        %2389 = vmatprep.mubr.f32.mxu0 0.0
        %v2390 = vand.u32 %v612, 4294901760
        %2391 = vmatmul.mubr.f32.gmra.mrb[0].mxu0 %v2390
        %v2392 = vpop.f32.mrb[0].mxu0
        %v2393 = vadd.f32 %v2319, %v2392
        %v2394 = vpop.f32.mrb[0].mxu0
        %2395 = vdwg.mxu0
        %2396 = vmatprep.subr.mxu0 0.0
        %v2397 = vand.u32 %v1555, 4294901760
        %2398 = vmatpush1.msra.mxu0 %v2397
        %2399 = vmatprep.subr.mxu0 0.0
        %2400 = vmatpush1.msra.mxu0 0.0
        %2401 = vmatprep.subr.mxu0 0.0
        %2402 = vmatpush1.msra.mxu0 0.0
        %2403 = vmatprep.subr.mxu0 0.0
        %2404 = vmatpush1.msra.mxu0 0.0
        %2405 = vmatprep.subr.mxu0 0.0
        %2406 = vmatpush1.msra.mxu0 0.0
        %2407 = vmatprep.subr.mxu0 0.0
        %2408 = vmatpush1.msra.mxu0 0.0
        %2409 = vmatprep.subr.mxu0 0.0
        %2410 = vmatpush1.msra.mxu0 0.0
        %2411 = vmatprep.subr.mxu0 0.0
        %2412 = vmatpush1.msra.mxu0 0.0
        %2413 = vmatprep.subr.mxu0 0.0
        %2414 = vmatpush1.msra.mxu0 0.0
        %2415 = vmatprep.subr.mxu0 0.0
        %2416 = vmatpush1.msra.mxu0 0.0
        %2417 = vmatprep.subr.mxu0 0.0
        %2418 = vmatpush1.msra.mxu0 0.0
        %2419 = vmatprep.subr.mxu0 0.0
        %2420 = vmatpush1.msra.mxu0 0.0
        %2421 = vmatprep.subr.mxu0 0.0
        %2422 = vmatpush1.msra.mxu0 0.0
        %2423 = vmatprep.subr.mxu0 0.0
        %2424 = vmatpush1.msra.mxu0 0.0
        %2425 = vmatprep.subr.mxu0 0.0
        %2426 = vmatpush1.msra.mxu0 0.0
        %2427 = vmatprep.subr.mxu0 0.0
        %2428 = vmatpush1.msra.mxu0 0.0
        %2429 = vmatprep.subr.mxu0 0.0
        %2430 = vmatpush1.msra.mxu0 0.0
        %2431 = vmatprep.subr.mxu0 0.0
        %2432 = vmatpush1.msra.mxu0 0.0
        %2433 = vmatprep.subr.mxu0 0.0
        %2434 = vmatpush1.msra.mxu0 0.0
        %2435 = vmatprep.subr.mxu0 0.0
        %2436 = vmatpush1.msra.mxu0 0.0
        %2437 = vmatprep.subr.mxu0 0.0
        %2438 = vmatpush1.msra.mxu0 0.0
        %2439 = vmatprep.subr.mxu0 0.0
        %2440 = vmatpush1.msra.mxu0 0.0
        %2441 = vmatprep.subr.mxu0 0.0
        %2442 = vmatpush1.msra.mxu0 0.0
        %2443 = vmatprep.subr.mxu0 0.0
        %2444 = vmatpush1.msra.mxu0 0.0
        %2445 = vmatprep.subr.mxu0 0.0
        %2446 = vmatpush1.msra.mxu0 0.0
        %2447 = vmatprep.subr.mxu0 0.0
        %2448 = vmatpush1.msra.mxu0 0.0
        %2449 = vmatprep.subr.mxu0 0.0
        %2450 = vmatpush1.msra.mxu0 0.0
        %2451 = vmatprep.subr.mxu0 0.0
        %2452 = vmatpush1.msra.mxu0 0.0
        %2453 = vmatprep.subr.mxu0 0.0
        %2454 = vmatpush1.msra.mxu0 0.0
        %2455 = vmatprep.subr.mxu0 0.0
        %2456 = vmatpush1.msra.mxu0 0.0
        %2457 = vmatprep.subr.mxu0 0.0
        %2458 = vmatpush1.msra.mxu0 0.0
        %2459 = vmatprep.subr.mxu0 0.0
        %2460 = vmatpush1.msra.mxu0 0.0
        %2461 = vmatprep.mubr.f32.mxu0 0.0
        %v2462 = vand.u32 %v612, 4294901760
        %2463 = vmatmul.mubr.f32.gmra.mrb[0].mxu0 %v2462
        %v2464 = vpop.f32.mrb[0].mxu0
        %v2465 = vadd.f32 %v2393, %v2464
        %v2466 = vpop.f32.mrb[0].mxu0
        %2467 = vdwg.mxu0
        %v2471 = vcombine.low %v2018, %v2020
        %s2473 = scalar_lea.vmem %s582, 12 [#allocation3]
        %2474 = vst [vmem:[%s2473] sm:$0xff] %v2471
        %2475 = vst [vmem:[%s2473 + $0x8] sm:$0xf] %v2465
        %v2476 = vcombine.high %v2018, %v2020
        %v2477 = vcombine.high %v2465, %v2465
        %s2480 = scalar_lea.vmem %s588, 12 [#allocation4]
        %2481 = vst [vmem:[%s2480] sm:$0xff] %v2476
        %2482 = vst [vmem:[%s2480 + $0x8] sm:$0xf] %v2477
        %s2483 = sand.u32 %s70, 1
        %s2484 = sand.u32 %s70, 1
        %s2485 = smul.addr %s2484, 24
        %s2486 = scalar_lea.vmem [#allocation3], %s2485
        %s2487 = sand.u32 %s96, 1
        %s2488 = sand.u32 %s96, 1
        %s2489 = smul.addr %s2488, 24
        %s2490 = scalar_lea.vmem [#allocation4], %s2489
        // Predicated region
        $region95: #{_shared_sep_conv_pallas.1} parent=89 // pred_check
          %p2491 = pneg %p80
        $region96: #{_shared_sep_conv_pallas.1} parent=89 // pred_check_branch
          %2493 = sbr.rel (%p2491) target = $region98
        $region97: #{_shared_sep_conv_pallas.1} parent=89 // pred_region
          %s2494 = smul.u32 3, %s15
          %s2495 = ssub.s32 5, %s2494
          %p2496 = scmp.lt.s32.totalorder %s2495, 3
          %s2497 = scalar_select %p2496, %s2495, 3
          %s2498 = smul.u32 128, %s2497
          %p2499 = scmp.ne.s32.totalorder 0, %s2498
          %s2500 = smul.addr %s2494, 4
          %s2501 = scalar_lea.vmem %s2, %s2500
          %s2502 = smul.u32 %s2497, 4
          // Predicated region
          $region99: #{_shared_sep_conv_pallas.1} parent=97 // pred_check
            %p2503 = pneg %p2499
          $region100: #{_shared_sep_conv_pallas.1} parent=97 // pred_check_branch
            %2505 = sbr.rel (%p2503) target = $region102
          $region101: #{_shared_sep_conv_pallas.1} parent=97 // pred_region
            %p2506 = scmp.lt.u32.totalorder %s2502, 8
            %p2507 = pneg %p2506
            // Predicated region
            $region103: #{_shared_sep_conv_pallas.1} parent=101 // pred_check
              _
            $region104: #{_shared_sep_conv_pallas.1} parent=101 // pred_check_branch
              %2509 = sbr.rel (%p2506) target = $region106
            $region105: #{_shared_sep_conv_pallas.1} parent=101 // pred_region
              %s2526 = sand.u32 %s2502, 7
              %p2527 = scmp.eq.s32.totalorder %s2526, 0
              // Predicated region
              $region118: #{_shared_sep_conv_pallas.1} parent=105 // pred_check
                %p2528 = pneg %p2527
              $region119: #{_shared_sep_conv_pallas.1} parent=105 // pred_check_branch
                %2530 = sbr.rel (%p2528) target = $region121
              $region120: #{_shared_sep_conv_pallas.1} parent=105 // pred_region
                %s2531 = sshrl.u32 %s2502, 3
                %s2532 = sshrl.u32 %s2531, 5
                // While loop
                $region122: #{_shared_sep_conv_pallas.1} parent=120 // loop_pre_header
                  _
                $region123: #{_shared_sep_conv_pallas.1} parent=120 // loop_header
                  %s2536 = sphi 0, %s2538
                  %p2537 = scmp.ge.s32.totalorder %s2536, %s2532
                  %s2541 = sphi 0, %s2674
                  %s2542 = sphi %s2486, %s2677
                  %s2543 = sphi %s2501, %s2678
                $region124: #{_shared_sep_conv_pallas.1} parent=120 // loop_header_branch
                  %2540 = sbr.rel (%p2537) target = $region128
                $region125: #{_shared_sep_conv_pallas.1} parent=120 // loop_body
                  %v2544 = vld [vmem:[%s2542] sm:$0xff]
                  %2545 = vst [vmem:[%s2543] sm:$0xff] %v2544
                  %v2546 = vld [vmem:[%s2542 + $0x8] sm:$0xff]
                  %2547 = vst [vmem:[%s2543 + $0x8] sm:$0xff] %v2546
                  %v2548 = vld [vmem:[%s2542 + $0x10] sm:$0xff]
                  %2549 = vst [vmem:[%s2543 + $0x10] sm:$0xff] %v2548
                  %v2550 = vld [vmem:[%s2542 + $0x18] sm:$0xff]
                  %2551 = vst [vmem:[%s2543 + $0x18] sm:$0xff] %v2550
                  %v2552 = vld [vmem:[%s2542 + $0x20] sm:$0xff]
                  %2553 = vst [vmem:[%s2543 + $0x20] sm:$0xff] %v2552
                  %v2554 = vld [vmem:[%s2542 + $0x28] sm:$0xff]
                  %2555 = vst [vmem:[%s2543 + $0x28] sm:$0xff] %v2554
                  %v2556 = vld [vmem:[%s2542 + $0x30] sm:$0xff]
                  %2557 = vst [vmem:[%s2543 + $0x30] sm:$0xff] %v2556
                  %v2558 = vld [vmem:[%s2542 + $0x38] sm:$0xff]
                  %2559 = vst [vmem:[%s2543 + $0x38] sm:$0xff] %v2558
                  %v2560 = vld [vmem:[%s2542 + $0x40] sm:$0xff]
                  %2561 = vst [vmem:[%s2543 + $0x40] sm:$0xff] %v2560
                  %v2562 = vld [vmem:[%s2542 + $0x48] sm:$0xff]
                  %2563 = vst [vmem:[%s2543 + $0x48] sm:$0xff] %v2562
                  %v2564 = vld [vmem:[%s2542 + $0x50] sm:$0xff]
                  %2565 = vst [vmem:[%s2543 + $0x50] sm:$0xff] %v2564
                  %v2566 = vld [vmem:[%s2542 + $0x58] sm:$0xff]
                  %2567 = vst [vmem:[%s2543 + $0x58] sm:$0xff] %v2566
                  %v2568 = vld [vmem:[%s2542 + $0x60] sm:$0xff]
                  %2569 = vst [vmem:[%s2543 + $0x60] sm:$0xff] %v2568
                  %v2570 = vld [vmem:[%s2542 + $0x68] sm:$0xff]
                  %2571 = vst [vmem:[%s2543 + $0x68] sm:$0xff] %v2570
                  %v2572 = vld [vmem:[%s2542 + $0x70] sm:$0xff]
                  %2573 = vst [vmem:[%s2543 + $0x70] sm:$0xff] %v2572
                  %v2574 = vld [vmem:[%s2542 + $0x78] sm:$0xff]
                  %2575 = vst [vmem:[%s2543 + $0x78] sm:$0xff] %v2574
                  %v2576 = vld [vmem:[%s2542 + $0x80] sm:$0xff]
                  %2577 = vst [vmem:[%s2543 + $0x80] sm:$0xff] %v2576
                  %v2578 = vld [vmem:[%s2542 + $0x88] sm:$0xff]
                  %2579 = vst [vmem:[%s2543 + $0x88] sm:$0xff] %v2578
                  %v2580 = vld [vmem:[%s2542 + $0x90] sm:$0xff]
                  %2581 = vst [vmem:[%s2543 + $0x90] sm:$0xff] %v2580
                  %v2582 = vld [vmem:[%s2542 + $0x98] sm:$0xff]
                  %2583 = vst [vmem:[%s2543 + $0x98] sm:$0xff] %v2582
                  %v2584 = vld [vmem:[%s2542 + $0xa0] sm:$0xff]
                  %2585 = vst [vmem:[%s2543 + $0xa0] sm:$0xff] %v2584
                  %v2586 = vld [vmem:[%s2542 + $0xa8] sm:$0xff]
                  %2587 = vst [vmem:[%s2543 + $0xa8] sm:$0xff] %v2586
                  %v2588 = vld [vmem:[%s2542 + $0xb0] sm:$0xff]
                  %2589 = vst [vmem:[%s2543 + $0xb0] sm:$0xff] %v2588
                  %v2590 = vld [vmem:[%s2542 + $0xb8] sm:$0xff]
                  %2591 = vst [vmem:[%s2543 + $0xb8] sm:$0xff] %v2590
                  %v2592 = vld [vmem:[%s2542 + $0xc0] sm:$0xff]
                  %2593 = vst [vmem:[%s2543 + $0xc0] sm:$0xff] %v2592
                  %v2594 = vld [vmem:[%s2542 + $0xc8] sm:$0xff]
                  %2595 = vst [vmem:[%s2543 + $0xc8] sm:$0xff] %v2594
                  %v2596 = vld [vmem:[%s2542 + $0xd0] sm:$0xff]
                  %2597 = vst [vmem:[%s2543 + $0xd0] sm:$0xff] %v2596
                  %v2598 = vld [vmem:[%s2542 + $0xd8] sm:$0xff]
                  %2599 = vst [vmem:[%s2543 + $0xd8] sm:$0xff] %v2598
                  %v2600 = vld [vmem:[%s2542 + $0xe0] sm:$0xff]
                  %2601 = vst [vmem:[%s2543 + $0xe0] sm:$0xff] %v2600
                  %v2602 = vld [vmem:[%s2542 + $0xe8] sm:$0xff]
                  %2603 = vst [vmem:[%s2543 + $0xe8] sm:$0xff] %v2602
                  %v2604 = vld [vmem:[%s2542 + $0xf0] sm:$0xff]
                  %2605 = vst [vmem:[%s2543 + $0xf0] sm:$0xff] %v2604
                  %v2606 = vld [vmem:[%s2542 + $0xf8] sm:$0xff]
                  %2607 = vst [vmem:[%s2543 + $0xf8] sm:$0xff] %v2606
                  %v2608 = vld [vmem:[%s2542 + $0xc] sm:$0xff]
                  %2609 = vst [vmem:[%s2543 + $0x14] sm:$0xff] %v2608
                  %v2610 = vld [vmem:[%s2542 + $0x14] sm:$0xff]
                  %2611 = vst [vmem:[%s2543 + $0x1c] sm:$0xff] %v2610
                  %v2612 = vld [vmem:[%s2542 + $0x1c] sm:$0xff]
                  %2613 = vst [vmem:[%s2543 + $0x24] sm:$0xff] %v2612
                  %v2614 = vld [vmem:[%s2542 + $0x24] sm:$0xff]
                  %2615 = vst [vmem:[%s2543 + $0x2c] sm:$0xff] %v2614
                  %v2616 = vld [vmem:[%s2542 + $0x2c] sm:$0xff]
                  %2617 = vst [vmem:[%s2543 + $0x34] sm:$0xff] %v2616
                  %v2618 = vld [vmem:[%s2542 + $0x34] sm:$0xff]
                  %2619 = vst [vmem:[%s2543 + $0x3c] sm:$0xff] %v2618
                  %v2620 = vld [vmem:[%s2542 + $0x3c] sm:$0xff]
                  %2621 = vst [vmem:[%s2543 + $0x44] sm:$0xff] %v2620
                  %v2622 = vld [vmem:[%s2542 + $0x44] sm:$0xff]
                  %2623 = vst [vmem:[%s2543 + $0x4c] sm:$0xff] %v2622
                  %v2624 = vld [vmem:[%s2542 + $0x4c] sm:$0xff]
                  %2625 = vst [vmem:[%s2543 + $0x54] sm:$0xff] %v2624
                  %v2626 = vld [vmem:[%s2542 + $0x54] sm:$0xff]
                  %2627 = vst [vmem:[%s2543 + $0x5c] sm:$0xff] %v2626
                  %v2628 = vld [vmem:[%s2542 + $0x5c] sm:$0xff]
                  %2629 = vst [vmem:[%s2543 + $0x64] sm:$0xff] %v2628
                  %v2630 = vld [vmem:[%s2542 + $0x64] sm:$0xff]
                  %2631 = vst [vmem:[%s2543 + $0x6c] sm:$0xff] %v2630
                  %v2632 = vld [vmem:[%s2542 + $0x6c] sm:$0xff]
                  %2633 = vst [vmem:[%s2543 + $0x74] sm:$0xff] %v2632
                  %v2634 = vld [vmem:[%s2542 + $0x74] sm:$0xff]
                  %2635 = vst [vmem:[%s2543 + $0x7c] sm:$0xff] %v2634
                  %v2636 = vld [vmem:[%s2542 + $0x7c] sm:$0xff]
                  %2637 = vst [vmem:[%s2543 + $0x84] sm:$0xff] %v2636
                  %v2638 = vld [vmem:[%s2542 + $0x84] sm:$0xff]
                  %2639 = vst [vmem:[%s2543 + $0x8c] sm:$0xff] %v2638
                  %v2640 = vld [vmem:[%s2542 + $0x8c] sm:$0xff]
                  %2641 = vst [vmem:[%s2543 + $0x94] sm:$0xff] %v2640
                  %v2642 = vld [vmem:[%s2542 + $0x94] sm:$0xff]
                  %2643 = vst [vmem:[%s2543 + $0x9c] sm:$0xff] %v2642
                  %v2644 = vld [vmem:[%s2542 + $0x9c] sm:$0xff]
                  %2645 = vst [vmem:[%s2543 + $0xa4] sm:$0xff] %v2644
                  %v2646 = vld [vmem:[%s2542 + $0xa4] sm:$0xff]
                  %2647 = vst [vmem:[%s2543 + $0xac] sm:$0xff] %v2646
                  %v2648 = vld [vmem:[%s2542 + $0xac] sm:$0xff]
                  %2649 = vst [vmem:[%s2543 + $0xb4] sm:$0xff] %v2648
                  %v2650 = vld [vmem:[%s2542 + $0xb4] sm:$0xff]
                  %2651 = vst [vmem:[%s2543 + $0xbc] sm:$0xff] %v2650
                  %v2652 = vld [vmem:[%s2542 + $0xbc] sm:$0xff]
                  %2653 = vst [vmem:[%s2543 + $0xc4] sm:$0xff] %v2652
                  %v2654 = vld [vmem:[%s2542 + $0xc4] sm:$0xff]
                  %2655 = vst [vmem:[%s2543 + $0xcc] sm:$0xff] %v2654
                  %v2656 = vld [vmem:[%s2542 + $0xcc] sm:$0xff]
                  %2657 = vst [vmem:[%s2543 + $0xd4] sm:$0xff] %v2656
                  %v2658 = vld [vmem:[%s2542 + $0xd4] sm:$0xff]
                  %2659 = vst [vmem:[%s2543 + $0xdc] sm:$0xff] %v2658
                  %v2660 = vld [vmem:[%s2542 + $0xdc] sm:$0xff]
                  %2661 = vst [vmem:[%s2543 + $0xe4] sm:$0xff] %v2660
                  %v2662 = vld [vmem:[%s2542 + $0xe4] sm:$0xff]
                  %2663 = vst [vmem:[%s2543 + $0xec] sm:$0xff] %v2662
                  %v2664 = vld [vmem:[%s2542 + $0xec] sm:$0xff]
                  %2665 = vst [vmem:[%s2543 + $0xf4] sm:$0xff] %v2664
                  %v2666 = vld [vmem:[%s2542 + $0xf4] sm:$0xff]
                  %2667 = vst [vmem:[%s2543 + $0xfc] sm:$0xff] %v2666
                  %v2668 = vld [vmem:[%s2542 + $0xfc] sm:$0xff]
                  %2669 = vst [vmem:[%s2543 + $0x104] sm:$0xff] %v2668
                  %v2670 = vld [vmem:[%s2542 + $0x104] sm:$0xff]
                  %2671 = vst [vmem:[%s2543 + $0x10c] sm:$0xff] %v2670
                  %s2672 = sadd.s32 1, %s2541
                  %p2673 = scmp.ge.s32.totalorder %s2672, %s2532
                  %s2674 = scalar_select %p2673, 0, %s2672
                  %s2675 = smul.u32 %s2674, 256
                  %s2676 = smul.u32 %s2674, 256
                  %s2677 = scalar_lea.vmem %s2486, %s2675 [#allocation3]
                  %s2678 = scalar_lea.vmem %s2501, %s2676
                $region126: #{_shared_sep_conv_pallas.1} parent=120 // loop_footer
                  %s2538 = sadd.s32 %s2536, 1
                $region127: #{_shared_sep_conv_pallas.1} parent=120 // loop_footer_branch
                  %2535 = sbr.rel target = $region123
                $region128: #{_shared_sep_conv_pallas.1} parent=120 // loop_exit
                  _
                %s2679 = sshrl.u32 %s2531, 5
                %s2680 = sand.u32 %s2531, 31
                %s2681 = smul.u32 %s2679, 32
                %s2682 = smul.u32 128, %s2681
                %s2683 = sshra.s32 %s2682, 4
                %s2684 = scalar_lea.vmem %s2486, %s2683 [#allocation3]
                %s2685 = smul.u32 128, %s2681
                %s2686 = sshra.s32 %s2685, 4
                %s2687 = scalar_lea.vmem %s2501, %s2686
                // While loop
                $region129: #{_shared_sep_conv_pallas.1} parent=120 // loop_pre_header
                  _
                $region130: #{_shared_sep_conv_pallas.1} parent=120 // loop_header
                  %s2691 = sphi 0, %s2693
                  %p2692 = scmp.ge.s32.totalorder %s2691, %s2680
                  %s2696 = sphi 0, %s2705
                  %s2697 = sphi %s2684, %s2708
                  %s2698 = sphi %s2687, %s2709
                $region131: #{_shared_sep_conv_pallas.1} parent=120 // loop_header_branch
                  %2695 = sbr.rel (%p2692) target = $region135
                $region132: #{_shared_sep_conv_pallas.1} parent=120 // loop_body
                  %v2699 = vld [vmem:[%s2697] sm:$0xff]
                  %2700 = vst [vmem:[%s2698] sm:$0xff] %v2699
                  %v2701 = vld [vmem:[%s2697 + $0xc] sm:$0xff]
                  %2702 = vst [vmem:[%s2698 + $0x14] sm:$0xff] %v2701
                  %s2703 = sadd.s32 1, %s2696
                  %p2704 = scmp.ge.s32.totalorder %s2703, %s2680
                  %s2705 = scalar_select %p2704, 0, %s2703
                  %s2706 = smul.u32 %s2705, 8
                  %s2707 = smul.u32 %s2705, 8
                  %s2708 = scalar_lea.vmem %s2684, %s2706 [#allocation3]
                  %s2709 = scalar_lea.vmem %s2687, %s2707
                $region133: #{_shared_sep_conv_pallas.1} parent=120 // loop_footer
                  %s2693 = sadd.s32 %s2691, 1
                $region134: #{_shared_sep_conv_pallas.1} parent=120 // loop_footer_branch
                  %2690 = sbr.rel target = $region130
                $region135: #{_shared_sep_conv_pallas.1} parent=120 // loop_exit
                  _
              $region121: #{_shared_sep_conv_pallas.1} parent=105 // pred_fallthru
                _
              %p2710 = pneg %p2527
              // Predicated region
              $region136: #{_shared_sep_conv_pallas.1} parent=105 // pred_check
                _
              $region137: #{_shared_sep_conv_pallas.1} parent=105 // pred_check_branch
                %2712 = sbr.rel (%p2527) target = $region139
              $region138: #{_shared_sep_conv_pallas.1} parent=105 // pred_region
                %s2713 = sand.u32 %s2502, 7
                %s2714 = ssub.s32 %s2502, %s2713
                %s2715 = scalar_lea.vmem %s2486, %s2714 [#allocation3]
                %s2716 = ssub.s32 %s2502, %s2713
                %s2717 = scalar_lea.vmem %s2501, %s2716
                %s2718 = sshrl.u32 %s2502, 3
                %s2719 = sshrl.u32 %s2718, 5
                // While loop
                $region140: #{_shared_sep_conv_pallas.1} parent=138 // loop_pre_header
                  _
                $region141: #{_shared_sep_conv_pallas.1} parent=138 // loop_header
                  %s2723 = sphi 0, %s2725
                  %p2724 = scmp.ge.s32.totalorder %s2723, %s2719
                  %s2728 = sphi 0, %s2861
                  %s2729 = sphi %s2486, %s2864
                  %s2730 = sphi %s2501, %s2865
                $region142: #{_shared_sep_conv_pallas.1} parent=138 // loop_header_branch
                  %2727 = sbr.rel (%p2724) target = $region146
                $region143: #{_shared_sep_conv_pallas.1} parent=138 // loop_body
                  %v2731 = vld [vmem:[%s2729] sm:$0xff]
                  %2732 = vst [vmem:[%s2730] sm:$0xff] %v2731
                  %v2733 = vld [vmem:[%s2729 + $0x8] sm:$0xff]
                  %2734 = vst [vmem:[%s2730 + $0x8] sm:$0xff] %v2733
                  %v2735 = vld [vmem:[%s2729 + $0x10] sm:$0xff]
                  %2736 = vst [vmem:[%s2730 + $0x10] sm:$0xff] %v2735
                  %v2737 = vld [vmem:[%s2729 + $0x18] sm:$0xff]
                  %2738 = vst [vmem:[%s2730 + $0x18] sm:$0xff] %v2737
                  %v2739 = vld [vmem:[%s2729 + $0x20] sm:$0xff]
                  %2740 = vst [vmem:[%s2730 + $0x20] sm:$0xff] %v2739
                  %v2741 = vld [vmem:[%s2729 + $0x28] sm:$0xff]
                  %2742 = vst [vmem:[%s2730 + $0x28] sm:$0xff] %v2741
                  %v2743 = vld [vmem:[%s2729 + $0x30] sm:$0xff]
                  %2744 = vst [vmem:[%s2730 + $0x30] sm:$0xff] %v2743
                  %v2745 = vld [vmem:[%s2729 + $0x38] sm:$0xff]
                  %2746 = vst [vmem:[%s2730 + $0x38] sm:$0xff] %v2745
                  %v2747 = vld [vmem:[%s2729 + $0x40] sm:$0xff]
                  %2748 = vst [vmem:[%s2730 + $0x40] sm:$0xff] %v2747
                  %v2749 = vld [vmem:[%s2729 + $0x48] sm:$0xff]
                  %2750 = vst [vmem:[%s2730 + $0x48] sm:$0xff] %v2749
                  %v2751 = vld [vmem:[%s2729 + $0x50] sm:$0xff]
                  %2752 = vst [vmem:[%s2730 + $0x50] sm:$0xff] %v2751
                  %v2753 = vld [vmem:[%s2729 + $0x58] sm:$0xff]
                  %2754 = vst [vmem:[%s2730 + $0x58] sm:$0xff] %v2753
                  %v2755 = vld [vmem:[%s2729 + $0x60] sm:$0xff]
                  %2756 = vst [vmem:[%s2730 + $0x60] sm:$0xff] %v2755
                  %v2757 = vld [vmem:[%s2729 + $0x68] sm:$0xff]
                  %2758 = vst [vmem:[%s2730 + $0x68] sm:$0xff] %v2757
                  %v2759 = vld [vmem:[%s2729 + $0x70] sm:$0xff]
                  %2760 = vst [vmem:[%s2730 + $0x70] sm:$0xff] %v2759
                  %v2761 = vld [vmem:[%s2729 + $0x78] sm:$0xff]
                  %2762 = vst [vmem:[%s2730 + $0x78] sm:$0xff] %v2761
                  %v2763 = vld [vmem:[%s2729 + $0x80] sm:$0xff]
                  %2764 = vst [vmem:[%s2730 + $0x80] sm:$0xff] %v2763
                  %v2765 = vld [vmem:[%s2729 + $0x88] sm:$0xff]
                  %2766 = vst [vmem:[%s2730 + $0x88] sm:$0xff] %v2765
                  %v2767 = vld [vmem:[%s2729 + $0x90] sm:$0xff]
                  %2768 = vst [vmem:[%s2730 + $0x90] sm:$0xff] %v2767
                  %v2769 = vld [vmem:[%s2729 + $0x98] sm:$0xff]
                  %2770 = vst [vmem:[%s2730 + $0x98] sm:$0xff] %v2769
                  %v2771 = vld [vmem:[%s2729 + $0xa0] sm:$0xff]
                  %2772 = vst [vmem:[%s2730 + $0xa0] sm:$0xff] %v2771
                  %v2773 = vld [vmem:[%s2729 + $0xa8] sm:$0xff]
                  %2774 = vst [vmem:[%s2730 + $0xa8] sm:$0xff] %v2773
                  %v2775 = vld [vmem:[%s2729 + $0xb0] sm:$0xff]
                  %2776 = vst [vmem:[%s2730 + $0xb0] sm:$0xff] %v2775
                  %v2777 = vld [vmem:[%s2729 + $0xb8] sm:$0xff]
                  %2778 = vst [vmem:[%s2730 + $0xb8] sm:$0xff] %v2777
                  %v2779 = vld [vmem:[%s2729 + $0xc0] sm:$0xff]
                  %2780 = vst [vmem:[%s2730 + $0xc0] sm:$0xff] %v2779
                  %v2781 = vld [vmem:[%s2729 + $0xc8] sm:$0xff]
                  %2782 = vst [vmem:[%s2730 + $0xc8] sm:$0xff] %v2781
                  %v2783 = vld [vmem:[%s2729 + $0xd0] sm:$0xff]
                  %2784 = vst [vmem:[%s2730 + $0xd0] sm:$0xff] %v2783
                  %v2785 = vld [vmem:[%s2729 + $0xd8] sm:$0xff]
                  %2786 = vst [vmem:[%s2730 + $0xd8] sm:$0xff] %v2785
                  %v2787 = vld [vmem:[%s2729 + $0xe0] sm:$0xff]
                  %2788 = vst [vmem:[%s2730 + $0xe0] sm:$0xff] %v2787
                  %v2789 = vld [vmem:[%s2729 + $0xe8] sm:$0xff]
                  %2790 = vst [vmem:[%s2730 + $0xe8] sm:$0xff] %v2789
                  %v2791 = vld [vmem:[%s2729 + $0xf0] sm:$0xff]
                  %2792 = vst [vmem:[%s2730 + $0xf0] sm:$0xff] %v2791
                  %v2793 = vld [vmem:[%s2729 + $0xf8] sm:$0xff]
                  %2794 = vst [vmem:[%s2730 + $0xf8] sm:$0xff] %v2793
                  %v2795 = vld [vmem:[%s2729 + $0xc] sm:$0xff]
                  %2796 = vst [vmem:[%s2730 + $0x14] sm:$0xff] %v2795
                  %v2797 = vld [vmem:[%s2729 + $0x14] sm:$0xff]
                  %2798 = vst [vmem:[%s2730 + $0x1c] sm:$0xff] %v2797
                  %v2799 = vld [vmem:[%s2729 + $0x1c] sm:$0xff]
                  %2800 = vst [vmem:[%s2730 + $0x24] sm:$0xff] %v2799
                  %v2801 = vld [vmem:[%s2729 + $0x24] sm:$0xff]
                  %2802 = vst [vmem:[%s2730 + $0x2c] sm:$0xff] %v2801
                  %v2803 = vld [vmem:[%s2729 + $0x2c] sm:$0xff]
                  %2804 = vst [vmem:[%s2730 + $0x34] sm:$0xff] %v2803
                  %v2805 = vld [vmem:[%s2729 + $0x34] sm:$0xff]
                  %2806 = vst [vmem:[%s2730 + $0x3c] sm:$0xff] %v2805
                  %v2807 = vld [vmem:[%s2729 + $0x3c] sm:$0xff]
                  %2808 = vst [vmem:[%s2730 + $0x44] sm:$0xff] %v2807
                  %v2809 = vld [vmem:[%s2729 + $0x44] sm:$0xff]
                  %2810 = vst [vmem:[%s2730 + $0x4c] sm:$0xff] %v2809
                  %v2811 = vld [vmem:[%s2729 + $0x4c] sm:$0xff]
                  %2812 = vst [vmem:[%s2730 + $0x54] sm:$0xff] %v2811
                  %v2813 = vld [vmem:[%s2729 + $0x54] sm:$0xff]
                  %2814 = vst [vmem:[%s2730 + $0x5c] sm:$0xff] %v2813
                  %v2815 = vld [vmem:[%s2729 + $0x5c] sm:$0xff]
                  %2816 = vst [vmem:[%s2730 + $0x64] sm:$0xff] %v2815
                  %v2817 = vld [vmem:[%s2729 + $0x64] sm:$0xff]
                  %2818 = vst [vmem:[%s2730 + $0x6c] sm:$0xff] %v2817
                  %v2819 = vld [vmem:[%s2729 + $0x6c] sm:$0xff]
                  %2820 = vst [vmem:[%s2730 + $0x74] sm:$0xff] %v2819
                  %v2821 = vld [vmem:[%s2729 + $0x74] sm:$0xff]
                  %2822 = vst [vmem:[%s2730 + $0x7c] sm:$0xff] %v2821
                  %v2823 = vld [vmem:[%s2729 + $0x7c] sm:$0xff]
                  %2824 = vst [vmem:[%s2730 + $0x84] sm:$0xff] %v2823
                  %v2825 = vld [vmem:[%s2729 + $0x84] sm:$0xff]
                  %2826 = vst [vmem:[%s2730 + $0x8c] sm:$0xff] %v2825
                  %v2827 = vld [vmem:[%s2729 + $0x8c] sm:$0xff]
                  %2828 = vst [vmem:[%s2730 + $0x94] sm:$0xff] %v2827
                  %v2829 = vld [vmem:[%s2729 + $0x94] sm:$0xff]
                  %2830 = vst [vmem:[%s2730 + $0x9c] sm:$0xff] %v2829
                  %v2831 = vld [vmem:[%s2729 + $0x9c] sm:$0xff]
                  %2832 = vst [vmem:[%s2730 + $0xa4] sm:$0xff] %v2831
                  %v2833 = vld [vmem:[%s2729 + $0xa4] sm:$0xff]
                  %2834 = vst [vmem:[%s2730 + $0xac] sm:$0xff] %v2833
                  %v2835 = vld [vmem:[%s2729 + $0xac] sm:$0xff]
                  %2836 = vst [vmem:[%s2730 + $0xb4] sm:$0xff] %v2835
                  %v2837 = vld [vmem:[%s2729 + $0xb4] sm:$0xff]
                  %2838 = vst [vmem:[%s2730 + $0xbc] sm:$0xff] %v2837
                  %v2839 = vld [vmem:[%s2729 + $0xbc] sm:$0xff]
                  %2840 = vst [vmem:[%s2730 + $0xc4] sm:$0xff] %v2839
                  %v2841 = vld [vmem:[%s2729 + $0xc4] sm:$0xff]
                  %2842 = vst [vmem:[%s2730 + $0xcc] sm:$0xff] %v2841
                  %v2843 = vld [vmem:[%s2729 + $0xcc] sm:$0xff]
                  %2844 = vst [vmem:[%s2730 + $0xd4] sm:$0xff] %v2843
                  %v2845 = vld [vmem:[%s2729 + $0xd4] sm:$0xff]
                  %2846 = vst [vmem:[%s2730 + $0xdc] sm:$0xff] %v2845
                  %v2847 = vld [vmem:[%s2729 + $0xdc] sm:$0xff]
                  %2848 = vst [vmem:[%s2730 + $0xe4] sm:$0xff] %v2847
                  %v2849 = vld [vmem:[%s2729 + $0xe4] sm:$0xff]
                  %2850 = vst [vmem:[%s2730 + $0xec] sm:$0xff] %v2849
                  %v2851 = vld [vmem:[%s2729 + $0xec] sm:$0xff]
                  %2852 = vst [vmem:[%s2730 + $0xf4] sm:$0xff] %v2851
                  %v2853 = vld [vmem:[%s2729 + $0xf4] sm:$0xff]
                  %2854 = vst [vmem:[%s2730 + $0xfc] sm:$0xff] %v2853
                  %v2855 = vld [vmem:[%s2729 + $0xfc] sm:$0xff]
                  %2856 = vst [vmem:[%s2730 + $0x104] sm:$0xff] %v2855
                  %v2857 = vld [vmem:[%s2729 + $0x104] sm:$0xff]
                  %2858 = vst [vmem:[%s2730 + $0x10c] sm:$0xff] %v2857
                  %s2859 = sadd.s32 1, %s2728
                  %p2860 = scmp.ge.s32.totalorder %s2859, %s2719
                  %s2861 = scalar_select %p2860, 0, %s2859
                  %s2862 = smul.u32 %s2861, 256
                  %s2863 = smul.u32 %s2861, 256
                  %s2864 = scalar_lea.vmem %s2486, %s2862 [#allocation3]
                  %s2865 = scalar_lea.vmem %s2501, %s2863
                $region144: #{_shared_sep_conv_pallas.1} parent=138 // loop_footer
                  %s2725 = sadd.s32 %s2723, 1
                $region145: #{_shared_sep_conv_pallas.1} parent=138 // loop_footer_branch
                  %2722 = sbr.rel target = $region141
                $region146: #{_shared_sep_conv_pallas.1} parent=138 // loop_exit
                  _
                %s2866 = sshrl.u32 %s2718, 5
                %s2867 = sand.u32 %s2718, 31
                %s2868 = smul.u32 %s2866, 32
                %s2869 = smul.u32 128, %s2868
                %s2870 = sshra.s32 %s2869, 4
                %s2871 = scalar_lea.vmem %s2486, %s2870 [#allocation3]
                %s2872 = smul.u32 128, %s2868
                %s2873 = sshra.s32 %s2872, 4
                %s2874 = scalar_lea.vmem %s2501, %s2873
                // While loop
                $region147: #{_shared_sep_conv_pallas.1} parent=138 // loop_pre_header
                  _
                $region148: #{_shared_sep_conv_pallas.1} parent=138 // loop_header
                  %s2878 = sphi 0, %s2880
                  %p2879 = scmp.ge.s32.totalorder %s2878, %s2867
                  %s2883 = sphi 0, %s2892
                  %s2884 = sphi %s2871, %s2895
                  %s2885 = sphi %s2874, %s2896
                $region149: #{_shared_sep_conv_pallas.1} parent=138 // loop_header_branch
                  %2882 = sbr.rel (%p2879) target = $region153
                $region150: #{_shared_sep_conv_pallas.1} parent=138 // loop_body
                  %v2886 = vld [vmem:[%s2884] sm:$0xff]
                  %2887 = vst [vmem:[%s2885] sm:$0xff] %v2886
                  %v2888 = vld [vmem:[%s2884 + $0xc] sm:$0xff]
                  %2889 = vst [vmem:[%s2885 + $0x14] sm:$0xff] %v2888
                  %s2890 = sadd.s32 1, %s2883
                  %p2891 = scmp.ge.s32.totalorder %s2890, %s2867
                  %s2892 = scalar_select %p2891, 0, %s2890
                  %s2893 = smul.u32 %s2892, 8
                  %s2894 = smul.u32 %s2892, 8
                  %s2895 = scalar_lea.vmem %s2871, %s2893 [#allocation3]
                  %s2896 = scalar_lea.vmem %s2874, %s2894
                $region151: #{_shared_sep_conv_pallas.1} parent=138 // loop_footer
                  %s2880 = sadd.s32 %s2878, 1
                $region152: #{_shared_sep_conv_pallas.1} parent=138 // loop_footer_branch
                  %2877 = sbr.rel target = $region148
                $region153: #{_shared_sep_conv_pallas.1} parent=138 // loop_exit
                  _
                %s2897 = sshllo.u32 0, %s2713
                loop: start=0, step=1, limit=1
                $region154: #{_shared_sep_conv_pallas.1} parent=138 // loop_pre_header
                  _
                $region155: #{_shared_sep_conv_pallas.1} parent=138 // loop_header
                  %s2899 = sphi 0, %s2903
                  %p2900 = scmp.ge.s32.totalorder %s2899, 1
                  %s2904 = sphi %s2715, %s2715
                  %s2905 = sphi %s2717, %s2717
                $region156: #{_shared_sep_conv_pallas.1} parent=138 // loop_header_branch
                  %2902 = sbr.rel (%p2900) target = $region160
                $region157: #{_shared_sep_conv_pallas.1} parent=138 // loop_body
                  %v2906 = vld [vmem:[%s2904] sm:%s2897]
                  %2907 = vst [vmem:[%s2905] sm:%s2897] %v2906
                  %v2908 = vld [vmem:[%s2904 + $0xc] sm:%s2897]
                  %2909 = vst [vmem:[%s2905 + $0x14] sm:%s2897] %v2908
                $region158: #{_shared_sep_conv_pallas.1} parent=138 // loop_footer
                  %s2903 = sadd.s32 1, %s2899
                $region159: #{_shared_sep_conv_pallas.1} parent=138 // loop_footer_branch
                  %2898 = sbr.rel target = $region155
                $region160: #{_shared_sep_conv_pallas.1} parent=138 // loop_exit
                  _
              $region139: #{_shared_sep_conv_pallas.1} parent=105 // pred_fallthru
                _
            $region106: #{_shared_sep_conv_pallas.1} parent=101 // pred_fallthru
              _
            // Predicated region
            $region107: #{_shared_sep_conv_pallas.1} parent=101 // pred_check
              %p2510 = pneg %p2506
            $region108: #{_shared_sep_conv_pallas.1} parent=101 // pred_check_branch
              %2512 = sbr.rel (%p2510) target = $region110
            $region109: #{_shared_sep_conv_pallas.1} parent=101 // pred_region
              %s2513 = sshllo.u32 0, %s2502
              loop: start=0, step=1, limit=1
              $region111: #{_shared_sep_conv_pallas.1} parent=109 // loop_pre_header
                _
              $region112: #{_shared_sep_conv_pallas.1} parent=109 // loop_header
                %s2515 = sphi 0, %s2519
                %p2516 = scmp.ge.s32.totalorder %s2515, 1
                %s2520 = sphi %s2486, %s2486
                %s2521 = sphi %s2501, %s2501
              $region113: #{_shared_sep_conv_pallas.1} parent=109 // loop_header_branch
                %2518 = sbr.rel (%p2516) target = $region117
              $region114: #{_shared_sep_conv_pallas.1} parent=109 // loop_body
                %v2522 = vld [vmem:[%s2520] sm:%s2513]
                %2523 = vst [vmem:[%s2521] sm:%s2513] %v2522
                %v2524 = vld [vmem:[%s2520 + $0xc] sm:%s2513]
                %2525 = vst [vmem:[%s2521 + $0x14] sm:%s2513] %v2524
              $region115: #{_shared_sep_conv_pallas.1} parent=109 // loop_footer
                %s2519 = sadd.s32 1, %s2515
              $region116: #{_shared_sep_conv_pallas.1} parent=109 // loop_footer_branch
                %2514 = sbr.rel target = $region112
              $region117: #{_shared_sep_conv_pallas.1} parent=109 // loop_exit
                _
            $region110: #{_shared_sep_conv_pallas.1} parent=101 // pred_fallthru
              _
          $region102: #{_shared_sep_conv_pallas.1} parent=97 // pred_fallthru
            _
          %2910 = vnop
        $region98: #{_shared_sep_conv_pallas.1} parent=89 // pred_fallthru
          _
        // Predicated region
        $region161: #{_shared_sep_conv_pallas.1} parent=89 // pred_check
          %p2911 = pneg %p106
        $region162: #{_shared_sep_conv_pallas.1} parent=89 // pred_check_branch
          %2913 = sbr.rel (%p2911) target = $region164
        $region163: #{_shared_sep_conv_pallas.1} parent=89 // pred_region
          %s2914 = smul.u32 3, %s15
          %s2915 = ssub.s32 5, %s2914
          %p2916 = scmp.lt.s32.totalorder %s2915, 3
          %s2917 = scalar_select %p2916, %s2915, 3
          %s2918 = smul.u32 128, %s2917
          %p2919 = scmp.ne.s32.totalorder 0, %s2918
          %s2920 = smul.addr %s2914, 4
          %s2921 = scalar_lea.vmem %s3, %s2920
          %s2922 = smul.u32 %s2917, 4
          // Predicated region
          $region165: #{_shared_sep_conv_pallas.1} parent=163 // pred_check
            %p2923 = pneg %p2919
          $region166: #{_shared_sep_conv_pallas.1} parent=163 // pred_check_branch
            %2925 = sbr.rel (%p2923) target = $region168
          $region167: #{_shared_sep_conv_pallas.1} parent=163 // pred_region
            %p2926 = scmp.lt.u32.totalorder %s2922, 8
            %p2927 = pneg %p2926
            // Predicated region
            $region169: #{_shared_sep_conv_pallas.1} parent=167 // pred_check
              _
            $region170: #{_shared_sep_conv_pallas.1} parent=167 // pred_check_branch
              %2929 = sbr.rel (%p2926) target = $region172
            $region171: #{_shared_sep_conv_pallas.1} parent=167 // pred_region
              %s2946 = sand.u32 %s2922, 7
              %p2947 = scmp.eq.s32.totalorder %s2946, 0
              // Predicated region
              $region184: #{_shared_sep_conv_pallas.1} parent=171 // pred_check
                %p2948 = pneg %p2947
              $region185: #{_shared_sep_conv_pallas.1} parent=171 // pred_check_branch
                %2950 = sbr.rel (%p2948) target = $region187
              $region186: #{_shared_sep_conv_pallas.1} parent=171 // pred_region
                %s2951 = sshrl.u32 %s2922, 3
                %s2952 = sshrl.u32 %s2951, 5
                // While loop
                $region188: #{_shared_sep_conv_pallas.1} parent=186 // loop_pre_header
                  _
                $region189: #{_shared_sep_conv_pallas.1} parent=186 // loop_header
                  %s2956 = sphi 0, %s2958
                  %p2957 = scmp.ge.s32.totalorder %s2956, %s2952
                  %s2961 = sphi 0, %s3094
                  %s2962 = sphi %s2490, %s3097
                  %s2963 = sphi %s2921, %s3098
                $region190: #{_shared_sep_conv_pallas.1} parent=186 // loop_header_branch
                  %2960 = sbr.rel (%p2957) target = $region194
                $region191: #{_shared_sep_conv_pallas.1} parent=186 // loop_body
                  %v2964 = vld [vmem:[%s2962] sm:$0xff]
                  %2965 = vst [vmem:[%s2963] sm:$0xff] %v2964
                  %v2966 = vld [vmem:[%s2962 + $0x8] sm:$0xff]
                  %2967 = vst [vmem:[%s2963 + $0x8] sm:$0xff] %v2966
                  %v2968 = vld [vmem:[%s2962 + $0x10] sm:$0xff]
                  %2969 = vst [vmem:[%s2963 + $0x10] sm:$0xff] %v2968
                  %v2970 = vld [vmem:[%s2962 + $0x18] sm:$0xff]
                  %2971 = vst [vmem:[%s2963 + $0x18] sm:$0xff] %v2970
                  %v2972 = vld [vmem:[%s2962 + $0x20] sm:$0xff]
                  %2973 = vst [vmem:[%s2963 + $0x20] sm:$0xff] %v2972
                  %v2974 = vld [vmem:[%s2962 + $0x28] sm:$0xff]
                  %2975 = vst [vmem:[%s2963 + $0x28] sm:$0xff] %v2974
                  %v2976 = vld [vmem:[%s2962 + $0x30] sm:$0xff]
                  %2977 = vst [vmem:[%s2963 + $0x30] sm:$0xff] %v2976
                  %v2978 = vld [vmem:[%s2962 + $0x38] sm:$0xff]
                  %2979 = vst [vmem:[%s2963 + $0x38] sm:$0xff] %v2978
                  %v2980 = vld [vmem:[%s2962 + $0x40] sm:$0xff]
                  %2981 = vst [vmem:[%s2963 + $0x40] sm:$0xff] %v2980
                  %v2982 = vld [vmem:[%s2962 + $0x48] sm:$0xff]
                  %2983 = vst [vmem:[%s2963 + $0x48] sm:$0xff] %v2982
                  %v2984 = vld [vmem:[%s2962 + $0x50] sm:$0xff]
                  %2985 = vst [vmem:[%s2963 + $0x50] sm:$0xff] %v2984
                  %v2986 = vld [vmem:[%s2962 + $0x58] sm:$0xff]
                  %2987 = vst [vmem:[%s2963 + $0x58] sm:$0xff] %v2986
                  %v2988 = vld [vmem:[%s2962 + $0x60] sm:$0xff]
                  %2989 = vst [vmem:[%s2963 + $0x60] sm:$0xff] %v2988
                  %v2990 = vld [vmem:[%s2962 + $0x68] sm:$0xff]
                  %2991 = vst [vmem:[%s2963 + $0x68] sm:$0xff] %v2990
                  %v2992 = vld [vmem:[%s2962 + $0x70] sm:$0xff]
                  %2993 = vst [vmem:[%s2963 + $0x70] sm:$0xff] %v2992
                  %v2994 = vld [vmem:[%s2962 + $0x78] sm:$0xff]
                  %2995 = vst [vmem:[%s2963 + $0x78] sm:$0xff] %v2994
                  %v2996 = vld [vmem:[%s2962 + $0x80] sm:$0xff]
                  %2997 = vst [vmem:[%s2963 + $0x80] sm:$0xff] %v2996
                  %v2998 = vld [vmem:[%s2962 + $0x88] sm:$0xff]
                  %2999 = vst [vmem:[%s2963 + $0x88] sm:$0xff] %v2998
                  %v3000 = vld [vmem:[%s2962 + $0x90] sm:$0xff]
                  %3001 = vst [vmem:[%s2963 + $0x90] sm:$0xff] %v3000
                  %v3002 = vld [vmem:[%s2962 + $0x98] sm:$0xff]
                  %3003 = vst [vmem:[%s2963 + $0x98] sm:$0xff] %v3002
                  %v3004 = vld [vmem:[%s2962 + $0xa0] sm:$0xff]
                  %3005 = vst [vmem:[%s2963 + $0xa0] sm:$0xff] %v3004
                  %v3006 = vld [vmem:[%s2962 + $0xa8] sm:$0xff]
                  %3007 = vst [vmem:[%s2963 + $0xa8] sm:$0xff] %v3006
                  %v3008 = vld [vmem:[%s2962 + $0xb0] sm:$0xff]
                  %3009 = vst [vmem:[%s2963 + $0xb0] sm:$0xff] %v3008
                  %v3010 = vld [vmem:[%s2962 + $0xb8] sm:$0xff]
                  %3011 = vst [vmem:[%s2963 + $0xb8] sm:$0xff] %v3010
                  %v3012 = vld [vmem:[%s2962 + $0xc0] sm:$0xff]
                  %3013 = vst [vmem:[%s2963 + $0xc0] sm:$0xff] %v3012
                  %v3014 = vld [vmem:[%s2962 + $0xc8] sm:$0xff]
                  %3015 = vst [vmem:[%s2963 + $0xc8] sm:$0xff] %v3014
                  %v3016 = vld [vmem:[%s2962 + $0xd0] sm:$0xff]
                  %3017 = vst [vmem:[%s2963 + $0xd0] sm:$0xff] %v3016
                  %v3018 = vld [vmem:[%s2962 + $0xd8] sm:$0xff]
                  %3019 = vst [vmem:[%s2963 + $0xd8] sm:$0xff] %v3018
                  %v3020 = vld [vmem:[%s2962 + $0xe0] sm:$0xff]
                  %3021 = vst [vmem:[%s2963 + $0xe0] sm:$0xff] %v3020
                  %v3022 = vld [vmem:[%s2962 + $0xe8] sm:$0xff]
                  %3023 = vst [vmem:[%s2963 + $0xe8] sm:$0xff] %v3022
                  %v3024 = vld [vmem:[%s2962 + $0xf0] sm:$0xff]
                  %3025 = vst [vmem:[%s2963 + $0xf0] sm:$0xff] %v3024
                  %v3026 = vld [vmem:[%s2962 + $0xf8] sm:$0xff]
                  %3027 = vst [vmem:[%s2963 + $0xf8] sm:$0xff] %v3026
                  %v3028 = vld [vmem:[%s2962 + $0xc] sm:$0xff]
                  %3029 = vst [vmem:[%s2963 + $0x14] sm:$0xff] %v3028
                  %v3030 = vld [vmem:[%s2962 + $0x14] sm:$0xff]
                  %3031 = vst [vmem:[%s2963 + $0x1c] sm:$0xff] %v3030
                  %v3032 = vld [vmem:[%s2962 + $0x1c] sm:$0xff]
                  %3033 = vst [vmem:[%s2963 + $0x24] sm:$0xff] %v3032
                  %v3034 = vld [vmem:[%s2962 + $0x24] sm:$0xff]
                  %3035 = vst [vmem:[%s2963 + $0x2c] sm:$0xff] %v3034
                  %v3036 = vld [vmem:[%s2962 + $0x2c] sm:$0xff]
                  %3037 = vst [vmem:[%s2963 + $0x34] sm:$0xff] %v3036
                  %v3038 = vld [vmem:[%s2962 + $0x34] sm:$0xff]
                  %3039 = vst [vmem:[%s2963 + $0x3c] sm:$0xff] %v3038
                  %v3040 = vld [vmem:[%s2962 + $0x3c] sm:$0xff]
                  %3041 = vst [vmem:[%s2963 + $0x44] sm:$0xff] %v3040
                  %v3042 = vld [vmem:[%s2962 + $0x44] sm:$0xff]
                  %3043 = vst [vmem:[%s2963 + $0x4c] sm:$0xff] %v3042
                  %v3044 = vld [vmem:[%s2962 + $0x4c] sm:$0xff]
                  %3045 = vst [vmem:[%s2963 + $0x54] sm:$0xff] %v3044
                  %v3046 = vld [vmem:[%s2962 + $0x54] sm:$0xff]
                  %3047 = vst [vmem:[%s2963 + $0x5c] sm:$0xff] %v3046
                  %v3048 = vld [vmem:[%s2962 + $0x5c] sm:$0xff]
                  %3049 = vst [vmem:[%s2963 + $0x64] sm:$0xff] %v3048
                  %v3050 = vld [vmem:[%s2962 + $0x64] sm:$0xff]
                  %3051 = vst [vmem:[%s2963 + $0x6c] sm:$0xff] %v3050
                  %v3052 = vld [vmem:[%s2962 + $0x6c] sm:$0xff]
                  %3053 = vst [vmem:[%s2963 + $0x74] sm:$0xff] %v3052
                  %v3054 = vld [vmem:[%s2962 + $0x74] sm:$0xff]
                  %3055 = vst [vmem:[%s2963 + $0x7c] sm:$0xff] %v3054
                  %v3056 = vld [vmem:[%s2962 + $0x7c] sm:$0xff]
                  %3057 = vst [vmem:[%s2963 + $0x84] sm:$0xff] %v3056
                  %v3058 = vld [vmem:[%s2962 + $0x84] sm:$0xff]
                  %3059 = vst [vmem:[%s2963 + $0x8c] sm:$0xff] %v3058
                  %v3060 = vld [vmem:[%s2962 + $0x8c] sm:$0xff]
                  %3061 = vst [vmem:[%s2963 + $0x94] sm:$0xff] %v3060
                  %v3062 = vld [vmem:[%s2962 + $0x94] sm:$0xff]
                  %3063 = vst [vmem:[%s2963 + $0x9c] sm:$0xff] %v3062
                  %v3064 = vld [vmem:[%s2962 + $0x9c] sm:$0xff]
                  %3065 = vst [vmem:[%s2963 + $0xa4] sm:$0xff] %v3064
                  %v3066 = vld [vmem:[%s2962 + $0xa4] sm:$0xff]
                  %3067 = vst [vmem:[%s2963 + $0xac] sm:$0xff] %v3066
                  %v3068 = vld [vmem:[%s2962 + $0xac] sm:$0xff]
                  %3069 = vst [vmem:[%s2963 + $0xb4] sm:$0xff] %v3068
                  %v3070 = vld [vmem:[%s2962 + $0xb4] sm:$0xff]
                  %3071 = vst [vmem:[%s2963 + $0xbc] sm:$0xff] %v3070
                  %v3072 = vld [vmem:[%s2962 + $0xbc] sm:$0xff]
                  %3073 = vst [vmem:[%s2963 + $0xc4] sm:$0xff] %v3072
                  %v3074 = vld [vmem:[%s2962 + $0xc4] sm:$0xff]
                  %3075 = vst [vmem:[%s2963 + $0xcc] sm:$0xff] %v3074
                  %v3076 = vld [vmem:[%s2962 + $0xcc] sm:$0xff]
                  %3077 = vst [vmem:[%s2963 + $0xd4] sm:$0xff] %v3076
                  %v3078 = vld [vmem:[%s2962 + $0xd4] sm:$0xff]
                  %3079 = vst [vmem:[%s2963 + $0xdc] sm:$0xff] %v3078
                  %v3080 = vld [vmem:[%s2962 + $0xdc] sm:$0xff]
                  %3081 = vst [vmem:[%s2963 + $0xe4] sm:$0xff] %v3080
                  %v3082 = vld [vmem:[%s2962 + $0xe4] sm:$0xff]
                  %3083 = vst [vmem:[%s2963 + $0xec] sm:$0xff] %v3082
                  %v3084 = vld [vmem:[%s2962 + $0xec] sm:$0xff]
                  %3085 = vst [vmem:[%s2963 + $0xf4] sm:$0xff] %v3084
                  %v3086 = vld [vmem:[%s2962 + $0xf4] sm:$0xff]
                  %3087 = vst [vmem:[%s2963 + $0xfc] sm:$0xff] %v3086
                  %v3088 = vld [vmem:[%s2962 + $0xfc] sm:$0xff]
                  %3089 = vst [vmem:[%s2963 + $0x104] sm:$0xff] %v3088
                  %v3090 = vld [vmem:[%s2962 + $0x104] sm:$0xff]
                  %3091 = vst [vmem:[%s2963 + $0x10c] sm:$0xff] %v3090
                  %s3092 = sadd.s32 1, %s2961
                  %p3093 = scmp.ge.s32.totalorder %s3092, %s2952
                  %s3094 = scalar_select %p3093, 0, %s3092
                  %s3095 = smul.u32 %s3094, 256
                  %s3096 = smul.u32 %s3094, 256
                  %s3097 = scalar_lea.vmem %s2490, %s3095 [#allocation4]
                  %s3098 = scalar_lea.vmem %s2921, %s3096
                $region192: #{_shared_sep_conv_pallas.1} parent=186 // loop_footer
                  %s2958 = sadd.s32 %s2956, 1
                $region193: #{_shared_sep_conv_pallas.1} parent=186 // loop_footer_branch
                  %2955 = sbr.rel target = $region189
                $region194: #{_shared_sep_conv_pallas.1} parent=186 // loop_exit
                  _
                %s3099 = sshrl.u32 %s2951, 5
                %s3100 = sand.u32 %s2951, 31
                %s3101 = smul.u32 %s3099, 32
                %s3102 = smul.u32 128, %s3101
                %s3103 = sshra.s32 %s3102, 4
                %s3104 = scalar_lea.vmem %s2490, %s3103 [#allocation4]
                %s3105 = smul.u32 128, %s3101
                %s3106 = sshra.s32 %s3105, 4
                %s3107 = scalar_lea.vmem %s2921, %s3106
                // While loop
                $region195: #{_shared_sep_conv_pallas.1} parent=186 // loop_pre_header
                  _
                $region196: #{_shared_sep_conv_pallas.1} parent=186 // loop_header
                  %s3111 = sphi 0, %s3113
                  %p3112 = scmp.ge.s32.totalorder %s3111, %s3100
                  %s3116 = sphi 0, %s3125
                  %s3117 = sphi %s3104, %s3128
                  %s3118 = sphi %s3107, %s3129
                $region197: #{_shared_sep_conv_pallas.1} parent=186 // loop_header_branch
                  %3115 = sbr.rel (%p3112) target = $region201
                $region198: #{_shared_sep_conv_pallas.1} parent=186 // loop_body
                  %v3119 = vld [vmem:[%s3117] sm:$0xff]
                  %3120 = vst [vmem:[%s3118] sm:$0xff] %v3119
                  %v3121 = vld [vmem:[%s3117 + $0xc] sm:$0xff]
                  %3122 = vst [vmem:[%s3118 + $0x14] sm:$0xff] %v3121
                  %s3123 = sadd.s32 1, %s3116
                  %p3124 = scmp.ge.s32.totalorder %s3123, %s3100
                  %s3125 = scalar_select %p3124, 0, %s3123
                  %s3126 = smul.u32 %s3125, 8
                  %s3127 = smul.u32 %s3125, 8
                  %s3128 = scalar_lea.vmem %s3104, %s3126 [#allocation4]
                  %s3129 = scalar_lea.vmem %s3107, %s3127
                $region199: #{_shared_sep_conv_pallas.1} parent=186 // loop_footer
                  %s3113 = sadd.s32 %s3111, 1
                $region200: #{_shared_sep_conv_pallas.1} parent=186 // loop_footer_branch
                  %3110 = sbr.rel target = $region196
                $region201: #{_shared_sep_conv_pallas.1} parent=186 // loop_exit
                  _
              $region187: #{_shared_sep_conv_pallas.1} parent=171 // pred_fallthru
                _
              %p3130 = pneg %p2947
              // Predicated region
              $region202: #{_shared_sep_conv_pallas.1} parent=171 // pred_check
                _
              $region203: #{_shared_sep_conv_pallas.1} parent=171 // pred_check_branch
                %3132 = sbr.rel (%p2947) target = $region205
              $region204: #{_shared_sep_conv_pallas.1} parent=171 // pred_region
                %s3133 = sand.u32 %s2922, 7
                %s3134 = ssub.s32 %s2922, %s3133
                %s3135 = scalar_lea.vmem %s2490, %s3134 [#allocation4]
                %s3136 = ssub.s32 %s2922, %s3133
                %s3137 = scalar_lea.vmem %s2921, %s3136
                %s3138 = sshrl.u32 %s2922, 3
                %s3139 = sshrl.u32 %s3138, 5
                // While loop
                $region206: #{_shared_sep_conv_pallas.1} parent=204 // loop_pre_header
                  _
                $region207: #{_shared_sep_conv_pallas.1} parent=204 // loop_header
                  %s3143 = sphi 0, %s3145
                  %p3144 = scmp.ge.s32.totalorder %s3143, %s3139
                  %s3148 = sphi 0, %s3281
                  %s3149 = sphi %s2490, %s3284
                  %s3150 = sphi %s2921, %s3285
                $region208: #{_shared_sep_conv_pallas.1} parent=204 // loop_header_branch
                  %3147 = sbr.rel (%p3144) target = $region212
                $region209: #{_shared_sep_conv_pallas.1} parent=204 // loop_body
                  %v3151 = vld [vmem:[%s3149] sm:$0xff]
                  %3152 = vst [vmem:[%s3150] sm:$0xff] %v3151
                  %v3153 = vld [vmem:[%s3149 + $0x8] sm:$0xff]
                  %3154 = vst [vmem:[%s3150 + $0x8] sm:$0xff] %v3153
                  %v3155 = vld [vmem:[%s3149 + $0x10] sm:$0xff]
                  %3156 = vst [vmem:[%s3150 + $0x10] sm:$0xff] %v3155
                  %v3157 = vld [vmem:[%s3149 + $0x18] sm:$0xff]
                  %3158 = vst [vmem:[%s3150 + $0x18] sm:$0xff] %v3157
                  %v3159 = vld [vmem:[%s3149 + $0x20] sm:$0xff]
                  %3160 = vst [vmem:[%s3150 + $0x20] sm:$0xff] %v3159
                  %v3161 = vld [vmem:[%s3149 + $0x28] sm:$0xff]
                  %3162 = vst [vmem:[%s3150 + $0x28] sm:$0xff] %v3161
                  %v3163 = vld [vmem:[%s3149 + $0x30] sm:$0xff]
                  %3164 = vst [vmem:[%s3150 + $0x30] sm:$0xff] %v3163
                  %v3165 = vld [vmem:[%s3149 + $0x38] sm:$0xff]
                  %3166 = vst [vmem:[%s3150 + $0x38] sm:$0xff] %v3165
                  %v3167 = vld [vmem:[%s3149 + $0x40] sm:$0xff]
                  %3168 = vst [vmem:[%s3150 + $0x40] sm:$0xff] %v3167
                  %v3169 = vld [vmem:[%s3149 + $0x48] sm:$0xff]
                  %3170 = vst [vmem:[%s3150 + $0x48] sm:$0xff] %v3169
                  %v3171 = vld [vmem:[%s3149 + $0x50] sm:$0xff]
                  %3172 = vst [vmem:[%s3150 + $0x50] sm:$0xff] %v3171
                  %v3173 = vld [vmem:[%s3149 + $0x58] sm:$0xff]
                  %3174 = vst [vmem:[%s3150 + $0x58] sm:$0xff] %v3173
                  %v3175 = vld [vmem:[%s3149 + $0x60] sm:$0xff]
                  %3176 = vst [vmem:[%s3150 + $0x60] sm:$0xff] %v3175
                  %v3177 = vld [vmem:[%s3149 + $0x68] sm:$0xff]
                  %3178 = vst [vmem:[%s3150 + $0x68] sm:$0xff] %v3177
                  %v3179 = vld [vmem:[%s3149 + $0x70] sm:$0xff]
                  %3180 = vst [vmem:[%s3150 + $0x70] sm:$0xff] %v3179
                  %v3181 = vld [vmem:[%s3149 + $0x78] sm:$0xff]
                  %3182 = vst [vmem:[%s3150 + $0x78] sm:$0xff] %v3181
                  %v3183 = vld [vmem:[%s3149 + $0x80] sm:$0xff]
                  %3184 = vst [vmem:[%s3150 + $0x80] sm:$0xff] %v3183
                  %v3185 = vld [vmem:[%s3149 + $0x88] sm:$0xff]
                  %3186 = vst [vmem:[%s3150 + $0x88] sm:$0xff] %v3185
                  %v3187 = vld [vmem:[%s3149 + $0x90] sm:$0xff]
                  %3188 = vst [vmem:[%s3150 + $0x90] sm:$0xff] %v3187
                  %v3189 = vld [vmem:[%s3149 + $0x98] sm:$0xff]
                  %3190 = vst [vmem:[%s3150 + $0x98] sm:$0xff] %v3189
                  %v3191 = vld [vmem:[%s3149 + $0xa0] sm:$0xff]
                  %3192 = vst [vmem:[%s3150 + $0xa0] sm:$0xff] %v3191
                  %v3193 = vld [vmem:[%s3149 + $0xa8] sm:$0xff]
                  %3194 = vst [vmem:[%s3150 + $0xa8] sm:$0xff] %v3193
                  %v3195 = vld [vmem:[%s3149 + $0xb0] sm:$0xff]
                  %3196 = vst [vmem:[%s3150 + $0xb0] sm:$0xff] %v3195
                  %v3197 = vld [vmem:[%s3149 + $0xb8] sm:$0xff]
                  %3198 = vst [vmem:[%s3150 + $0xb8] sm:$0xff] %v3197
                  %v3199 = vld [vmem:[%s3149 + $0xc0] sm:$0xff]
                  %3200 = vst [vmem:[%s3150 + $0xc0] sm:$0xff] %v3199
                  %v3201 = vld [vmem:[%s3149 + $0xc8] sm:$0xff]
                  %3202 = vst [vmem:[%s3150 + $0xc8] sm:$0xff] %v3201
                  %v3203 = vld [vmem:[%s3149 + $0xd0] sm:$0xff]
                  %3204 = vst [vmem:[%s3150 + $0xd0] sm:$0xff] %v3203
                  %v3205 = vld [vmem:[%s3149 + $0xd8] sm:$0xff]
                  %3206 = vst [vmem:[%s3150 + $0xd8] sm:$0xff] %v3205
                  %v3207 = vld [vmem:[%s3149 + $0xe0] sm:$0xff]
                  %3208 = vst [vmem:[%s3150 + $0xe0] sm:$0xff] %v3207
                  %v3209 = vld [vmem:[%s3149 + $0xe8] sm:$0xff]
                  %3210 = vst [vmem:[%s3150 + $0xe8] sm:$0xff] %v3209
                  %v3211 = vld [vmem:[%s3149 + $0xf0] sm:$0xff]
                  %3212 = vst [vmem:[%s3150 + $0xf0] sm:$0xff] %v3211
                  %v3213 = vld [vmem:[%s3149 + $0xf8] sm:$0xff]
                  %3214 = vst [vmem:[%s3150 + $0xf8] sm:$0xff] %v3213
                  %v3215 = vld [vmem:[%s3149 + $0xc] sm:$0xff]
                  %3216 = vst [vmem:[%s3150 + $0x14] sm:$0xff] %v3215
                  %v3217 = vld [vmem:[%s3149 + $0x14] sm:$0xff]
                  %3218 = vst [vmem:[%s3150 + $0x1c] sm:$0xff] %v3217
                  %v3219 = vld [vmem:[%s3149 + $0x1c] sm:$0xff]
                  %3220 = vst [vmem:[%s3150 + $0x24] sm:$0xff] %v3219
                  %v3221 = vld [vmem:[%s3149 + $0x24] sm:$0xff]
                  %3222 = vst [vmem:[%s3150 + $0x2c] sm:$0xff] %v3221
                  %v3223 = vld [vmem:[%s3149 + $0x2c] sm:$0xff]
                  %3224 = vst [vmem:[%s3150 + $0x34] sm:$0xff] %v3223
                  %v3225 = vld [vmem:[%s3149 + $0x34] sm:$0xff]
                  %3226 = vst [vmem:[%s3150 + $0x3c] sm:$0xff] %v3225
                  %v3227 = vld [vmem:[%s3149 + $0x3c] sm:$0xff]
                  %3228 = vst [vmem:[%s3150 + $0x44] sm:$0xff] %v3227
                  %v3229 = vld [vmem:[%s3149 + $0x44] sm:$0xff]
                  %3230 = vst [vmem:[%s3150 + $0x4c] sm:$0xff] %v3229
                  %v3231 = vld [vmem:[%s3149 + $0x4c] sm:$0xff]
                  %3232 = vst [vmem:[%s3150 + $0x54] sm:$0xff] %v3231
                  %v3233 = vld [vmem:[%s3149 + $0x54] sm:$0xff]
                  %3234 = vst [vmem:[%s3150 + $0x5c] sm:$0xff] %v3233
                  %v3235 = vld [vmem:[%s3149 + $0x5c] sm:$0xff]
                  %3236 = vst [vmem:[%s3150 + $0x64] sm:$0xff] %v3235
                  %v3237 = vld [vmem:[%s3149 + $0x64] sm:$0xff]
                  %3238 = vst [vmem:[%s3150 + $0x6c] sm:$0xff] %v3237
                  %v3239 = vld [vmem:[%s3149 + $0x6c] sm:$0xff]
                  %3240 = vst [vmem:[%s3150 + $0x74] sm:$0xff] %v3239
                  %v3241 = vld [vmem:[%s3149 + $0x74] sm:$0xff]
                  %3242 = vst [vmem:[%s3150 + $0x7c] sm:$0xff] %v3241
                  %v3243 = vld [vmem:[%s3149 + $0x7c] sm:$0xff]
                  %3244 = vst [vmem:[%s3150 + $0x84] sm:$0xff] %v3243
                  %v3245 = vld [vmem:[%s3149 + $0x84] sm:$0xff]
                  %3246 = vst [vmem:[%s3150 + $0x8c] sm:$0xff] %v3245
                  %v3247 = vld [vmem:[%s3149 + $0x8c] sm:$0xff]
                  %3248 = vst [vmem:[%s3150 + $0x94] sm:$0xff] %v3247
                  %v3249 = vld [vmem:[%s3149 + $0x94] sm:$0xff]
                  %3250 = vst [vmem:[%s3150 + $0x9c] sm:$0xff] %v3249
                  %v3251 = vld [vmem:[%s3149 + $0x9c] sm:$0xff]
                  %3252 = vst [vmem:[%s3150 + $0xa4] sm:$0xff] %v3251
                  %v3253 = vld [vmem:[%s3149 + $0xa4] sm:$0xff]
                  %3254 = vst [vmem:[%s3150 + $0xac] sm:$0xff] %v3253
                  %v3255 = vld [vmem:[%s3149 + $0xac] sm:$0xff]
                  %3256 = vst [vmem:[%s3150 + $0xb4] sm:$0xff] %v3255
                  %v3257 = vld [vmem:[%s3149 + $0xb4] sm:$0xff]
                  %3258 = vst [vmem:[%s3150 + $0xbc] sm:$0xff] %v3257
                  %v3259 = vld [vmem:[%s3149 + $0xbc] sm:$0xff]
                  %3260 = vst [vmem:[%s3150 + $0xc4] sm:$0xff] %v3259
                  %v3261 = vld [vmem:[%s3149 + $0xc4] sm:$0xff]
                  %3262 = vst [vmem:[%s3150 + $0xcc] sm:$0xff] %v3261
                  %v3263 = vld [vmem:[%s3149 + $0xcc] sm:$0xff]
                  %3264 = vst [vmem:[%s3150 + $0xd4] sm:$0xff] %v3263
                  %v3265 = vld [vmem:[%s3149 + $0xd4] sm:$0xff]
                  %3266 = vst [vmem:[%s3150 + $0xdc] sm:$0xff] %v3265
                  %v3267 = vld [vmem:[%s3149 + $0xdc] sm:$0xff]
                  %3268 = vst [vmem:[%s3150 + $0xe4] sm:$0xff] %v3267
                  %v3269 = vld [vmem:[%s3149 + $0xe4] sm:$0xff]
                  %3270 = vst [vmem:[%s3150 + $0xec] sm:$0xff] %v3269
                  %v3271 = vld [vmem:[%s3149 + $0xec] sm:$0xff]
                  %3272 = vst [vmem:[%s3150 + $0xf4] sm:$0xff] %v3271
                  %v3273 = vld [vmem:[%s3149 + $0xf4] sm:$0xff]
                  %3274 = vst [vmem:[%s3150 + $0xfc] sm:$0xff] %v3273
                  %v3275 = vld [vmem:[%s3149 + $0xfc] sm:$0xff]
                  %3276 = vst [vmem:[%s3150 + $0x104] sm:$0xff] %v3275
                  %v3277 = vld [vmem:[%s3149 + $0x104] sm:$0xff]
                  %3278 = vst [vmem:[%s3150 + $0x10c] sm:$0xff] %v3277
                  %s3279 = sadd.s32 1, %s3148
                  %p3280 = scmp.ge.s32.totalorder %s3279, %s3139
                  %s3281 = scalar_select %p3280, 0, %s3279
                  %s3282 = smul.u32 %s3281, 256
                  %s3283 = smul.u32 %s3281, 256
                  %s3284 = scalar_lea.vmem %s2490, %s3282 [#allocation4]
                  %s3285 = scalar_lea.vmem %s2921, %s3283
                $region210: #{_shared_sep_conv_pallas.1} parent=204 // loop_footer
                  %s3145 = sadd.s32 %s3143, 1
                $region211: #{_shared_sep_conv_pallas.1} parent=204 // loop_footer_branch
                  %3142 = sbr.rel target = $region207
                $region212: #{_shared_sep_conv_pallas.1} parent=204 // loop_exit
                  _
                %s3286 = sshrl.u32 %s3138, 5
                %s3287 = sand.u32 %s3138, 31
                %s3288 = smul.u32 %s3286, 32
                %s3289 = smul.u32 128, %s3288
                %s3290 = sshra.s32 %s3289, 4
                %s3291 = scalar_lea.vmem %s2490, %s3290 [#allocation4]
                %s3292 = smul.u32 128, %s3288
                %s3293 = sshra.s32 %s3292, 4
                %s3294 = scalar_lea.vmem %s2921, %s3293
                // While loop
                $region213: #{_shared_sep_conv_pallas.1} parent=204 // loop_pre_header
                  _
                $region214: #{_shared_sep_conv_pallas.1} parent=204 // loop_header
                  %s3298 = sphi 0, %s3300
                  %p3299 = scmp.ge.s32.totalorder %s3298, %s3287
                  %s3303 = sphi 0, %s3312
                  %s3304 = sphi %s3291, %s3315
                  %s3305 = sphi %s3294, %s3316
                $region215: #{_shared_sep_conv_pallas.1} parent=204 // loop_header_branch
                  %3302 = sbr.rel (%p3299) target = $region219
                $region216: #{_shared_sep_conv_pallas.1} parent=204 // loop_body
                  %v3306 = vld [vmem:[%s3304] sm:$0xff]
                  %3307 = vst [vmem:[%s3305] sm:$0xff] %v3306
                  %v3308 = vld [vmem:[%s3304 + $0xc] sm:$0xff]
                  %3309 = vst [vmem:[%s3305 + $0x14] sm:$0xff] %v3308
                  %s3310 = sadd.s32 1, %s3303
                  %p3311 = scmp.ge.s32.totalorder %s3310, %s3287
                  %s3312 = scalar_select %p3311, 0, %s3310
                  %s3313 = smul.u32 %s3312, 8
                  %s3314 = smul.u32 %s3312, 8
                  %s3315 = scalar_lea.vmem %s3291, %s3313 [#allocation4]
                  %s3316 = scalar_lea.vmem %s3294, %s3314
                $region217: #{_shared_sep_conv_pallas.1} parent=204 // loop_footer
                  %s3300 = sadd.s32 %s3298, 1
                $region218: #{_shared_sep_conv_pallas.1} parent=204 // loop_footer_branch
                  %3297 = sbr.rel target = $region214
                $region219: #{_shared_sep_conv_pallas.1} parent=204 // loop_exit
                  _
                %s3317 = sshllo.u32 0, %s3133
                loop: start=0, step=1, limit=1
                $region220: #{_shared_sep_conv_pallas.1} parent=204 // loop_pre_header
                  _
                $region221: #{_shared_sep_conv_pallas.1} parent=204 // loop_header
                  %s3319 = sphi 0, %s3323
                  %p3320 = scmp.ge.s32.totalorder %s3319, 1
                  %s3324 = sphi %s3135, %s3135
                  %s3325 = sphi %s3137, %s3137
                $region222: #{_shared_sep_conv_pallas.1} parent=204 // loop_header_branch
                  %3322 = sbr.rel (%p3320) target = $region226
                $region223: #{_shared_sep_conv_pallas.1} parent=204 // loop_body
                  %v3326 = vld [vmem:[%s3324] sm:%s3317]
                  %3327 = vst [vmem:[%s3325] sm:%s3317] %v3326
                  %v3328 = vld [vmem:[%s3324 + $0xc] sm:%s3317]
                  %3329 = vst [vmem:[%s3325 + $0x14] sm:%s3317] %v3328
                $region224: #{_shared_sep_conv_pallas.1} parent=204 // loop_footer
                  %s3323 = sadd.s32 1, %s3319
                $region225: #{_shared_sep_conv_pallas.1} parent=204 // loop_footer_branch
                  %3318 = sbr.rel target = $region221
                $region226: #{_shared_sep_conv_pallas.1} parent=204 // loop_exit
                  _
              $region205: #{_shared_sep_conv_pallas.1} parent=171 // pred_fallthru
                _
            $region172: #{_shared_sep_conv_pallas.1} parent=167 // pred_fallthru
              _
            // Predicated region
            $region173: #{_shared_sep_conv_pallas.1} parent=167 // pred_check
              %p2930 = pneg %p2926
            $region174: #{_shared_sep_conv_pallas.1} parent=167 // pred_check_branch
              %2932 = sbr.rel (%p2930) target = $region176
            $region175: #{_shared_sep_conv_pallas.1} parent=167 // pred_region
              %s2933 = sshllo.u32 0, %s2922
              loop: start=0, step=1, limit=1
              $region177: #{_shared_sep_conv_pallas.1} parent=175 // loop_pre_header
                _
              $region178: #{_shared_sep_conv_pallas.1} parent=175 // loop_header
                %s2935 = sphi 0, %s2939
                %p2936 = scmp.ge.s32.totalorder %s2935, 1
                %s2940 = sphi %s2490, %s2490
                %s2941 = sphi %s2921, %s2921
              $region179: #{_shared_sep_conv_pallas.1} parent=175 // loop_header_branch
                %2938 = sbr.rel (%p2936) target = $region183
              $region180: #{_shared_sep_conv_pallas.1} parent=175 // loop_body
                %v2942 = vld [vmem:[%s2940] sm:%s2933]
                %2943 = vst [vmem:[%s2941] sm:%s2933] %v2942
                %v2944 = vld [vmem:[%s2940 + $0xc] sm:%s2933]
                %2945 = vst [vmem:[%s2941 + $0x14] sm:%s2933] %v2944
              $region181: #{_shared_sep_conv_pallas.1} parent=175 // loop_footer
                %s2939 = sadd.s32 1, %s2935
              $region182: #{_shared_sep_conv_pallas.1} parent=175 // loop_footer_branch
                %2934 = sbr.rel target = $region178
              $region183: #{_shared_sep_conv_pallas.1} parent=175 // loop_exit
                _
            $region176: #{_shared_sep_conv_pallas.1} parent=167 // pred_fallthru
              _
          $region168: #{_shared_sep_conv_pallas.1} parent=163 // pred_fallthru
            _
          %3330 = vnop
        $region164: #{_shared_sep_conv_pallas.1} parent=89 // pred_fallthru
          _
      $region90: #{_shared_sep_conv_pallas.1} parent=5 // pred_fallthru
        _
      %p3331 = scmp.le.s32.totalorder 2, %s10
      // Predicated region
      $region227: #{_shared_sep_conv_pallas.1} parent=5 // pred_check
        %p3332 = pneg %p3331
      $region228: #{_shared_sep_conv_pallas.1} parent=5 // pred_check_branch
        %3334 = sbr.rel (%p3332) target = $region230
      $region229: #{_shared_sep_conv_pallas.1} parent=5 // pred_region
        %s3335 = ssub.s32 %s10, 2
        // Predicated region
        $region231: #{_shared_sep_conv_pallas.1} parent=229 // pred_check
          %p3336 = pneg %p86
        $region232: #{_shared_sep_conv_pallas.1} parent=229 // pred_check_branch
          %3338 = sbr.rel (%p3336) target = $region234
        $region233: #{_shared_sep_conv_pallas.1} parent=229 // pred_region
          %s3339 = sand.u32 %s71, 1
          %s3340 = sand.u32 %s71, 1
          %s3341 = smul.addr %s3340, 24
          %s3342 = scalar_lea.vmem [#allocation3], %s3341
        $region234: #{_shared_sep_conv_pallas.1} parent=229 // pred_fallthru
          _
        // Predicated region
        $region235: #{_shared_sep_conv_pallas.1} parent=229 // pred_check
          %p3343 = pneg %p112
        $region236: #{_shared_sep_conv_pallas.1} parent=229 // pred_check_branch
          %3345 = sbr.rel (%p3343) target = $region238
        $region237: #{_shared_sep_conv_pallas.1} parent=229 // pred_region
          %s3346 = sand.u32 %s97, 1
          %s3347 = sand.u32 %s97, 1
          %s3348 = smul.addr %s3347, 24
          %s3349 = scalar_lea.vmem [#allocation4], %s3348
        $region238: #{_shared_sep_conv_pallas.1} parent=229 // pred_fallthru
          _
      $region230: #{_shared_sep_conv_pallas.1} parent=5 // pred_fallthru
        _
    $region6: #{_shared_sep_conv_pallas.1} parent=1 // loop_footer
      %s14 = sadd.s32 1, %s10
    $region7: #{_shared_sep_conv_pallas.1} parent=1 // loop_footer_branch
      %9 = sbr.rel target = $region3
    $region8: #{_shared_sep_conv_pallas.1} parent=1 // loop_exit
      _

</llo_original>
